<compile_context>
chip_gen: v6e
topology: v6e:2x2x1
jax: 0.10.0
libtpu: 0.0.40
codegen_flags: <defaults>
</compile_context>

<pallas_src>
import functools
import math

import numpy as np
import jax
import jax.numpy as jnp
from jax import lax
from jax.experimental import pallas as pl
from jax.experimental.pallas import tpu as pltpu


# ----------------------------- configuration --------------------------------
class Config:
    mel = 8
    reduction = 4
    contexts = 32
    pre_kernels = 3
    pre_blocks = 2
    groups = 4
    vectors = 8
    temp_max = 2.0
    styles = 16
    prototypes = 4
    detok_ffn = 48
    # remaining fields exist in the original config but are either unused in
    # forward() or folded into the single-head stand-ins below.
    ret_heads = 2
    ret_ffn = 32
    ret_blocks = 1
    ret_dropout = 0.0
    dec_kernels = 3
    dec_heads = 2
    dec_ffn = 32
    dec_blocks = 1
    dec_dropout = 0.0
    lm_kernels = 3
    lm_heads = 2
    lm_ffn = 32
    lm_blocks = 1
    lm_dropout = 0.0


WEIGHT_NAMES = (
    "pre_w0", "pre_b0", "blk_w", "blk_b", "blk_scale", "blk_shift",
    "q_w", "q_b", "codebook",
    "protos", "r_wq", "r_bq", "r_wk", "r_bk", "r_wv", "r_bv", "r_ws", "r_bs",
    "d_wq", "d_bq", "d_wk", "d_bk", "d_wv", "d_bv",
    "f_w1", "f_b1", "f_w2", "f_b2",
)


# ------------------------------ fused kernel ---------------------------------
def _retriever_kernel(x_ref, mcol_ref, mrow_ref, refsty_ref, *refs,
                      temp, use_refstyle):
    """Entire Retriever forward for one batch element, VMEM-resident."""
    (pre_w0, pre_b0, blk_w, blk_b, blk_s, blk_t,
     q_w, q_b, codebook,
     protos, r_wq, r_bq, r_wk, r_bk, r_wv, r_bv, r_ws, r_bs,
     d_wq, d_bq, d_wk, d_bk, d_wv, d_bv,
     f_w1, f_b1, f_w2, f_b2,
     synth_ref, patch_ref, contents_ref, style_ref, logits_ref) = refs

    T = x_ref.shape[1]
    C = pre_w0.shape[1]
    n_blocks, K = blk_w.shape[0], blk_w.shape[1]
    G = q_w.shape[0]
    pad = K // 2
    f32 = jnp.float32

    x = x_ref[0]          # [T, R*mel]  (strided conv pre-folded in glue)
    mcol = mcol_ref[0]    # [T, 1]  length mask, column layout
    mrow = mrow_ref[0]    # [1, T]  length mask, row layout (attention bias)

    # --- prenet: strided Conv1d(kernel=stride=R) + ReLU -----------------------
    h = jnp.maximum(
        jnp.dot(x, pre_w0[...], preferred_element_type=f32) + pre_b0[...], 0.0)

    # Shift matrices S_d with S_d[t, t+d] = 1 (zero outside [0, T)), so
    # (S_d @ h)[t] = h[t+d] with zero padding at the borders — replaces the
    # old glue-side pad + shifted-slice + concat unfold.
    row = lax.broadcasted_iota(jnp.int32, (T, T), 0)
    col = lax.broadcasted_iota(jnp.int32, (T, T), 1)
    shifts = {}
    for k in range(K):
        d = k - pad
        if d != 0:
            shifts[d] = (col == row + d).astype(f32)

    # pre_blocks x [Conv1d(same) -> ReLU -> AddBN]
    for i in range(n_blocks):
        acc = blk_b[i]                                     # [1, C] -> bcast T
        for k in range(K):
            d = k - pad
            hk = h if d == 0 else jnp.dot(shifts[d], h, preferred_element_type=f32)
            acc = acc + jnp.dot(hk, blk_w[i, k], preferred_element_type=f32)
        y = jnp.maximum(acc, 0.0)
        # AddBN (eval-mode BN folded): y + BN(y) = y*(1+scale) + shift
        h = y * (1.0 + blk_s[i]) + blk_t[i]

    patch = h * mcol                                       # masked features
    patch_ref[0] = patch

    # --- Quantize (fused grouped soft codebook lookup) ------------------------
    # TODO(synk): Quantize definition not provided; deterministic stand-in.
    contents = jnp.zeros((T, C), f32)
    for g in range(G):
        lgt = jnp.dot(patch, q_w[g], preferred_element_type=f32) + q_b[g]  # [T,V]
        logits_ref[0, g, :, :] = lgt
        s = lgt * (1.0 / temp)
        s = s - jnp.max(s, axis=-1, keepdims=True)
        e = jnp.exp(s)
        p = e * pl.reciprocal(jnp.sum(e, axis=-1, keepdims=True), approx=True)
        contents = contents + jnp.dot(p, codebook[g], preferred_element_type=f32)
    contents = contents * mcol
    contents_ref[0] = contents

    # --- retriever: prototype-query cross attention -> style tokens -----------
    # TODO(synk): CrossAttention definition not provided; single-head stand-in.
    scale = 1.0 / math.sqrt(C)
    q = jnp.dot(protos[...], r_wq[...], preferred_element_type=f32) + r_bq[...]
    rk = jnp.dot(patch, r_wk[...], preferred_element_type=f32) + r_bk[...]
    rv = jnp.dot(patch, r_wv[...], preferred_element_type=f32) + r_bv[...]
    s = lax.dot_general(q, rk, (((1,), (1,)), ((), ())),
                        preferred_element_type=f32) * scale           # [P, T]
    s = s + (mrow - 1.0) * 1e9                                        # mask keys
    s = s - jnp.max(s, axis=-1, keepdims=True)
    e = jnp.exp(s)
    p = e * pl.reciprocal(jnp.sum(e, axis=-1, keepdims=True), approx=True)
    ctx = jnp.dot(p, rv, preferred_element_type=f32)                  # [P, C]
    style = jnp.dot(ctx, r_ws[...], preferred_element_type=f32) + r_bs[...]
    style_ref[0] = style

    ref_sty = refsty_ref[0] if use_refstyle else style                # [P, S]

    # --- decoder: link attention (contents -> style tokens) + detok MLP -------
    # TODO(synk): LinkAttention definition not provided; single-head stand-in.
    dq = jnp.dot(contents, d_wq[...], preferred_element_type=f32) + d_bq[...]
    dk = jnp.dot(ref_sty, d_wk[...], preferred_element_type=f32) + d_bk[...]
    dv = jnp.dot(ref_sty, d_wv[...], preferred_element_type=f32) + d_bv[...]
    s2 = lax.dot_general(dq, dk, (((1,), (1,)), ((), ())),
                         preferred_element_type=f32) * scale          # [T, P]
    s2 = s2 - jnp.max(s2, axis=-1, keepdims=True)
    e2 = jnp.exp(s2)
    p2 = e2 * pl.reciprocal(jnp.sum(e2, axis=-1, keepdims=True), approx=True)
    hdec = contents + jnp.dot(p2, dv, preferred_element_type=f32)     # [T, C]

    h1 = jnp.maximum(
        jnp.dot(hdec, f_w1[...], preferred_element_type=f32) + f_b1[...], 0.0)
    syn = jnp.dot(h1, f_w2[...], preferred_element_type=f32) + f_b2[...]
    syn = jnp.where(mcol > 0.0, syn, math.log(1e-5))                  # masked_fill
    synth_ref[0] = syn


# ------------------------------- model glue ----------------------------------
def _batch_spec(shape):
    nd = len(shape)

    def imap(b):
        return (b,) + (0,) * (nd - 1)

    return pl.BlockSpec(shape, imap)


def _full_spec(shape):
    nd = len(shape)

    def imap(b):
        return (0,) * nd

    return pl.BlockSpec(shape, imap)


def retriever_forward(params, cfg, mel, mellen=None, refstyle=None):
    """mel: [B, T x R, mel] f32, mellen: [B] int, refstyle: [B, P, S] or None."""
    B, timesteps, _ = mel.shape
    R, M, C = cfg.reduction, cfg.mel, cfg.contexts
    G, V = cfg.groups, cfg.vectors
    P, S = cfg.prototypes, cfg.styles

    rest = None
    if timesteps % R > 0:
        rest = R - timesteps % R
        mel = jnp.pad(mel, ((0, 0), (0, rest), (0, 0)))
    T = mel.shape[1] // R

    # fold the strided (kernel=stride=R) conv input: [B, T*R, M] -> [B, T, R*M]
    x = mel.reshape(B, T, R * M)

    if mellen is not None:
        plen = jnp.ceil(mellen.astype(jnp.float32) / R).astype(jnp.int32)
        mask = (jnp.arange(T)[None, :] < plen[:, None]).astype(jnp.float32)
    else:
        mask = jnp.ones((B, T), jnp.float32)
    mask_col = mask[:, :, None]          # [B, T, 1]  multiply layout
    mask_row = mask[:, None, :]          # [B, 1, T]  attention-bias layout

    use_refstyle = refstyle is not None
    if refstyle is None:
        refstyle = jnp.zeros((B, P, S), jnp.float32)   # placeholder, unread

    weights = [params[n] for n in WEIGHT_NAMES]

    in_specs = ([_batch_spec((1, T, R * M)),
                 _batch_spec((1, T, 1)),
                 _batch_spec((1, 1, T)),
                 _batch_spec((1, P, S))]
                + [_full_spec(tuple(w.shape)) for w in weights])

    out_shape = (
        jax.ShapeDtypeStruct((B, T, M * R), jnp.float32),   # synth (folded)
        jax.ShapeDtypeStruct((B, T, C), jnp.float32),       # features
        jax.ShapeDtypeStruct((B, T, C), jnp.float32),       # contents
        jax.ShapeDtypeStruct((B, P, S), jnp.float32),       # style
        jax.ShapeDtypeStruct((B, G, T, V), jnp.float32),    # logits (grouped)
    )
    out_specs = (
        _batch_spec((1, T, M * R)),
        _batch_spec((1, T, C)),
        _batch_spec((1, T, C)),
        _batch_spec((1, P, S)),
        _batch_spec((1, G, T, V)),
    )

    kern = functools.partial(_retriever_kernel, temp=cfg.temp_max,
                             use_refstyle=use_refstyle)
    synth, patch, contents, style, logits_g = pl.pallas_call(
        kern,
        out_shape=out_shape,
        grid=(B,),
        in_specs=in_specs,
        out_specs=out_specs,
        compiler_params=pltpu.CompilerParams(
            dimension_semantics=("parallel",)),
    )(x, mask_col, mask_row, refstyle, *weights)

    synth = synth.reshape(B, -1, M)                  # [B, T*R, mel]
    if rest is not None:
        synth = synth[:, :-rest]
    logits = jnp.transpose(logits_g, (0, 2, 1, 3))   # [B, T, G, V]
    return synth, {"features": patch, "contents": contents,
                   "style": style, "logits": logits}


# ------------------------------ parameter init --------------------------------
def init_params(key, cfg):
    C, M, R, K = cfg.contexts, cfg.mel, cfg.reduction, cfg.pre_kernels
    G, V, S, P, F1 = cfg.groups, cfg.vectors, cfg.styles, cfg.prototypes, cfg.detok_ffn
    NB = cfg.pre_blocks

    keys = iter(jax.random.split(key, 64))

    def nrm(shape, scl=0.1):
        return jax.random.normal(next(keys), shape, jnp.float32) * scl

    p = {}
    # prenet: strided conv flattened to [R*mel, C]
    p["pre_w0"] = nrm((R * M, C))
    p["pre_b0"] = nrm((1, C))
    p["blk_w"] = nrm((NB, K, C, C))          # [block, tap, c_in, c_out]
    p["blk_b"] = nrm((NB, 1, C))
    # AddBN: eval-mode BatchNorm1d folded to per-channel scale/shift
    gamma = 1.0 + nrm((NB, 1, C))
    beta = nrm((NB, 1, C))
    mean = nrm((NB, 1, C))
    var = 1.0 + jnp.abs(nrm((NB, 1, C)))
    scl = gamma / jnp.sqrt(var + 1e-5)
    p["blk_scale"] = scl
    p["blk_shift"] = beta - mean * scl
    # quantize stand-in: grouped soft codebook
    p["q_w"] = nrm((G, C, V))
    p["q_b"] = nrm((G, 1, V))
    d = C // G
    cb = np.asarray(nrm((G, V, d)))
    code = np.zeros((G, V, C), np.float32)
    for g in range(G):
        code[g, :, g * d:(g + 1) * d] = cb[g]
    p["codebook"] = jnp.asarray(code)
    # retriever / decoder stand-ins
    p["protos"] = nrm((P, C))
    for name, shp in [("r_wq", (C, C)), ("r_wk", (C, C)), ("r_wv", (C, C)),
                      ("r_ws", (C, S)), ("d_wq", (C, C)), ("d_wk", (S, C)),
                      ("d_wv", (S, C)), ("f_w1", (C, F1)), ("f_w2", (F1, M * R))]:
        p[name] = nrm(shp)
        p[name.replace("w", "b", 1)] = nrm((1, shp[1]))
    return p


# ---------------------------------- main --------------------------------------
if __name__ == "__main__":
    cfg = Config()
    key = jax.random.PRNGKey(0)
    kp, kx = jax.random.split(key)
    params = init_params(kp, cfg)

    B, timesteps = 2, 18     # 18 % reduction != 0 -> exercises the "rest" path
    mel = jax.random.normal(kx, (B, timesteps, cfg.mel), jnp.float32)
    mellen = jnp.array([18, 12], jnp.int32)

    fwd = jax.jit(lambda p, m, ml: retriever_forward(p, cfg, m, ml))
    synth, aux = fwd(params, mel, mellen)
    jax.block_until_ready(synth)
    for val in aux.values():
        jax.block_until_ready(val)

    assert synth.shape == (B, timesteps, cfg.mel)
    assert aux["features"].shape == (B, 5, cfg.contexts)
    assert aux["contents"].shape == (B, 5, cfg.contexts)
    assert aux["style"].shape == (B, cfg.prototypes, cfg.styles)
    assert aux["logits"].shape == (B, 5, cfg.groups, cfg.vectors)
    assert bool(jnp.all(jnp.isfinite(synth)))
    print("KERNEL_OK")
</pallas_src>

<mosaic_0001>
module attributes {stable_mosaic.version = 11 : i64} {
  func.func @_retriever_kernel(%arg0: i32, %arg1: memref<1x5x32xf32, #tpu.memory_space<vmem>>, %arg2: memref<1x5x1xf32, #tpu.memory_space<vmem>>, %arg3: memref<1x1x5xf32, #tpu.memory_space<vmem>>, %arg4: memref<1x4x16xf32, #tpu.memory_space<vmem>>, %arg5: memref<32x32xf32, #tpu.memory_space<vmem>>, %arg6: memref<1x32xf32, #tpu.memory_space<vmem>>, %arg7: memref<2x3x32x32xf32, #tpu.memory_space<vmem>>, %arg8: memref<2x1x32xf32, #tpu.memory_space<vmem>>, %arg9: memref<2x1x32xf32, #tpu.memory_space<vmem>>, %arg10: memref<2x1x32xf32, #tpu.memory_space<vmem>>, %arg11: memref<4x32x8xf32, #tpu.memory_space<vmem>>, %arg12: memref<4x1x8xf32, #tpu.memory_space<vmem>>, %arg13: memref<4x8x32xf32, #tpu.memory_space<vmem>>, %arg14: memref<4x32xf32, #tpu.memory_space<vmem>>, %arg15: memref<32x32xf32, #tpu.memory_space<vmem>>, %arg16: memref<1x32xf32, #tpu.memory_space<vmem>>, %arg17: memref<32x32xf32, #tpu.memory_space<vmem>>, %arg18: memref<1x32xf32, #tpu.memory_space<vmem>>, %arg19: memref<32x32xf32, #tpu.memory_space<vmem>>, %arg20: memref<1x32xf32, #tpu.memory_space<vmem>>, %arg21: memref<32x16xf32, #tpu.memory_space<vmem>>, %arg22: memref<1x16xf32, #tpu.memory_space<vmem>>, %arg23: memref<32x32xf32, #tpu.memory_space<vmem>>, %arg24: memref<1x32xf32, #tpu.memory_space<vmem>>, %arg25: memref<16x32xf32, #tpu.memory_space<vmem>>, %arg26: memref<1x32xf32, #tpu.memory_space<vmem>>, %arg27: memref<16x32xf32, #tpu.memory_space<vmem>>, %arg28: memref<1x32xf32, #tpu.memory_space<vmem>>, %arg29: memref<32x48xf32, #tpu.memory_space<vmem>>, %arg30: memref<1x48xf32, #tpu.memory_space<vmem>>, %arg31: memref<48x32xf32, #tpu.memory_space<vmem>>, %arg32: memref<1x32xf32, #tpu.memory_space<vmem>>, %arg33: memref<1x5x32xf32, #tpu.memory_space<vmem>>, %arg34: memref<1x5x32xf32, #tpu.memory_space<vmem>>, %arg35: memref<1x5x32xf32, #tpu.memory_space<vmem>>, %arg36: memref<1x4x16xf32, #tpu.memory_space<vmem>>, %arg37: memref<1x4x5x8xf32, #tpu.memory_space<vmem>>) attributes {dimension_semantics = [#tpu.dimension_semantics<parallel>], iteration_bounds = array<i64: 2>, scalar_prefetch = 0 : i64, scratch_operands = 0 : i64, tpu.core_type = #tpu.core_type<tc>, window_params = [{transform_indices = @transform_0, window_bounds = array<i64: 1, 5, 32>}, {transform_indices = @transform_1, window_bounds = array<i64: 1, 5, 1>}, {transform_indices = @transform_2, window_bounds = array<i64: 1, 1, 5>}, {transform_indices = @transform_3, window_bounds = array<i64: 1, 4, 16>}, {pipeline_mode = #tpu.pipeline_mode<synchronous>, transform_indices = @transform_4, window_bounds = array<i64: 32, 32>}, {pipeline_mode = #tpu.pipeline_mode<synchronous>, transform_indices = @transform_5, window_bounds = array<i64: 1, 32>}, {pipeline_mode = #tpu.pipeline_mode<synchronous>, transform_indices = @transform_6, window_bounds = array<i64: 2, 3, 32, 32>}, {pipeline_mode = #tpu.pipeline_mode<synchronous>, transform_indices = @transform_7, window_bounds = array<i64: 2, 1, 32>}, {pipeline_mode = #tpu.pipeline_mode<synchronous>, transform_indices = @transform_8, window_bounds = array<i64: 2, 1, 32>}, {pipeline_mode = #tpu.pipeline_mode<synchronous>, transform_indices = @transform_9, window_bounds = array<i64: 2, 1, 32>}, {pipeline_mode = #tpu.pipeline_mode<synchronous>, transform_indices = @transform_10, window_bounds = array<i64: 4, 32, 8>}, {pipeline_mode = #tpu.pipeline_mode<synchronous>, transform_indices = @transform_11, window_bounds = array<i64: 4, 1, 8>}, {pipeline_mode = #tpu.pipeline_mode<synchronous>, transform_indices = @transform_12, window_bounds = array<i64: 4, 8, 32>}, {pipeline_mode = #tpu.pipeline_mode<synchronous>, transform_indices = @transform_13, window_bounds = array<i64: 4, 32>}, {pipeline_mode = #tpu.pipeline_mode<synchronous>, transform_indices = @transform_14, window_bounds = array<i64: 32, 32>}, {pipeline_mode = #tpu.pipeline_mode<synchronous>, transform_indices = @transform_15, window_bounds = array<i64: 1, 32>}, {pipeline_mode = #tpu.pipeline_mode<synchronous>, transform_indices = @transform_16, window_bounds = array<i64: 32, 32>}, {pipeline_mode = #tpu.pipeline_mode<synchronous>, transform_indices = @transform_17, window_bounds = array<i64: 1, 32>}, {pipeline_mode = #tpu.pipeline_mode<synchronous>, transform_indices = @transform_18, window_bounds = array<i64: 32, 32>}, {pipeline_mode = #tpu.pipeline_mode<synchronous>, transform_indices = @transform_19, window_bounds = array<i64: 1, 32>}, {pipeline_mode = #tpu.pipeline_mode<synchronous>, transform_indices = @transform_20, window_bounds = array<i64: 32, 16>}, {pipeline_mode = #tpu.pipeline_mode<synchronous>, transform_indices = @transform_21, window_bounds = array<i64: 1, 16>}, {pipeline_mode = #tpu.pipeline_mode<synchronous>, transform_indices = @transform_22, window_bounds = array<i64: 32, 32>}, {pipeline_mode = #tpu.pipeline_mode<synchronous>, transform_indices = @transform_23, window_bounds = array<i64: 1, 32>}, {pipeline_mode = #tpu.pipeline_mode<synchronous>, transform_indices = @transform_24, window_bounds = array<i64: 16, 32>}, {pipeline_mode = #tpu.pipeline_mode<synchronous>, transform_indices = @transform_25, window_bounds = array<i64: 1, 32>}, {pipeline_mode = #tpu.pipeline_mode<synchronous>, transform_indices = @transform_26, window_bounds = array<i64: 16, 32>}, {pipeline_mode = #tpu.pipeline_mode<synchronous>, transform_indices = @transform_27, window_bounds = array<i64: 1, 32>}, {pipeline_mode = #tpu.pipeline_mode<synchronous>, transform_indices = @transform_28, window_bounds = array<i64: 32, 48>}, {pipeline_mode = #tpu.pipeline_mode<synchronous>, transform_indices = @transform_29, window_bounds = array<i64: 1, 48>}, {pipeline_mode = #tpu.pipeline_mode<synchronous>, transform_indices = @transform_30, window_bounds = array<i64: 48, 32>}, {pipeline_mode = #tpu.pipeline_mode<synchronous>, transform_indices = @transform_31, window_bounds = array<i64: 1, 32>}, {transform_indices = @transform_32, window_bounds = array<i64: 1, 5, 32>}, {transform_indices = @transform_33, window_bounds = array<i64: 1, 5, 32>}, {transform_indices = @transform_34, window_bounds = array<i64: 1, 5, 32>}, {transform_indices = @transform_35, window_bounds = array<i64: 1, 4, 16>}, {transform_indices = @transform_36, window_bounds = array<i64: 1, 4, 5, 8>}]} {
    %c0 = arith.constant 0 : index
    %c0_0 = arith.constant 0 : index
    %c0_1 = arith.constant 0 : index
    %0 = vector.load %arg1[%c0, %c0_0, %c0_1] : memref<1x5x32xf32, #tpu.memory_space<vmem>>, vector<1x5x32xf32>
    %1 = vector.shape_cast %0 : vector<1x5x32xf32> to vector<5x32xf32>
    %c0_2 = arith.constant 0 : index
    %c0_3 = arith.constant 0 : index
    %c0_4 = arith.constant 0 : index
    %2 = vector.load %arg2[%c0_2, %c0_3, %c0_4] : memref<1x5x1xf32, #tpu.memory_space<vmem>>, vector<1x5x1xf32>
    %3 = vector.shape_cast %2 : vector<1x5x1xf32> to vector<5x1xf32>
    %c0_5 = arith.constant 0 : index
    %c0_6 = arith.constant 0 : index
    %c0_7 = arith.constant 0 : index
    %4 = vector.load %arg3[%c0_5, %c0_6, %c0_7] : memref<1x1x5xf32, #tpu.memory_space<vmem>>, vector<1x1x5xf32>
    %5 = vector.shape_cast %4 : vector<1x1x5xf32> to vector<1x5xf32>
    %c0_8 = arith.constant 0 : index
    %c0_9 = arith.constant 0 : index
    %6 = vector.load %arg5[%c0_8, %c0_9] : memref<32x32xf32, #tpu.memory_space<vmem>>, vector<32x32xf32>
    %cst = arith.constant dense<0.000000e+00> : vector<5x32xf32>
    %7 = tpu.matmul %1, %6, %cst {dimension_numbers = #tpu.dot_dimension_numbers<[1], [0], [0], [1], [0, 0, 1, 1], [], []>} : vector<5x32xf32>, vector<32x32xf32>, vector<5x32xf32> -> vector<5x32xf32>
    %c0_10 = arith.constant 0 : index
    %c0_11 = arith.constant 0 : index
    %8 = vector.load %arg6[%c0_10, %c0_11] : memref<1x32xf32, #tpu.memory_space<vmem>>, vector<1x32xf32>
    %9 = vector.broadcast %8 : vector<1x32xf32> to vector<5x32xf32>
    %10 = arith.addf %7, %9 : vector<5x32xf32>
    %cst_12 = arith.constant 0.000000e+00 : f32
    %11 = vector.broadcast %cst_12 : f32 to vector<5x32xf32>
    %12 = arith.maximumf %10, %11 : vector<5x32xf32>
    %13 = tpu.iota {dimensions = array<i32: 0>} : vector<5x5xi32>
    %14 = tpu.iota {dimensions = array<i32: 1>} : vector<5x5xi32>
    %c-1_i32 = arith.constant -1 : i32
    %15 = vector.broadcast %c-1_i32 : i32 to vector<5x5xi32>
    %16 = arith.addi %13, %15 : vector<5x5xi32>
    %17 = arith.cmpi eq, %14, %16 : vector<5x5xi32>
    %18 = arith.extui %17 : vector<5x5xi1> to vector<5x5xi32>
    %19 = arith.sitofp %18 : vector<5x5xi32> to vector<5x5xf32>
    %c1_i32 = arith.constant 1 : i32
    %20 = vector.broadcast %c1_i32 : i32 to vector<5x5xi32>
    %21 = arith.addi %13, %20 : vector<5x5xi32>
    %22 = arith.cmpi eq, %14, %21 : vector<5x5xi32>
    %23 = arith.extui %22 : vector<5x5xi1> to vector<5x5xi32>
    %24 = arith.sitofp %23 : vector<5x5xi32> to vector<5x5xf32>
    %c0_13 = arith.constant 0 : index
    %c0_14 = arith.constant 0 : index
    %c0_15 = arith.constant 0 : index
    %25 = vector.load %arg8[%c0_13, %c0_14, %c0_15] : memref<2x1x32xf32, #tpu.memory_space<vmem>>, vector<1x1x32xf32>
    %26 = vector.shape_cast %25 : vector<1x1x32xf32> to vector<1x32xf32>
    %cst_16 = arith.constant dense<0.000000e+00> : vector<5x32xf32>
    %27 = tpu.matmul %19, %12, %cst_16 {dimension_numbers = #tpu.dot_dimension_numbers<[1], [0], [0], [1], [0, 0, 1, 1], [], []>} : vector<5x5xf32>, vector<5x32xf32>, vector<5x32xf32> -> vector<5x32xf32>
    %c0_17 = arith.constant 0 : index
    %c0_18 = arith.constant 0 : index
    %c0_19 = arith.constant 0 : index
    %c0_20 = arith.constant 0 : index
    %28 = vector.load %arg7[%c0_17, %c0_18, %c0_19, %c0_20] : memref<2x3x32x32xf32, #tpu.memory_space<vmem>>, vector<1x1x32x32xf32>
    %29 = vector.shape_cast %28 : vector<1x1x32x32xf32> to vector<32x32xf32>
    %cst_21 = arith.constant dense<0.000000e+00> : vector<5x32xf32>
    %30 = tpu.matmul %27, %29, %cst_21 {dimension_numbers = #tpu.dot_dimension_numbers<[1], [0], [0], [1], [0, 0, 1, 1], [], []>} : vector<5x32xf32>, vector<32x32xf32>, vector<5x32xf32> -> vector<5x32xf32>
    %31 = vector.broadcast %26 : vector<1x32xf32> to vector<5x32xf32>
    %32 = arith.addf %31, %30 : vector<5x32xf32>
    %c0_22 = arith.constant 0 : index
    %c1 = arith.constant 1 : index
    %c0_23 = arith.constant 0 : index
    %c0_24 = arith.constant 0 : index
    %33 = vector.load %arg7[%c0_22, %c1, %c0_23, %c0_24] : memref<2x3x32x32xf32, #tpu.memory_space<vmem>>, vector<1x1x32x32xf32>
    %34 = vector.shape_cast %33 : vector<1x1x32x32xf32> to vector<32x32xf32>
    %cst_25 = arith.constant dense<0.000000e+00> : vector<5x32xf32>
    %35 = tpu.matmul %12, %34, %cst_25 {dimension_numbers = #tpu.dot_dimension_numbers<[1], [0], [0], [1], [0, 0, 1, 1], [], []>} : vector<5x32xf32>, vector<32x32xf32>, vector<5x32xf32> -> vector<5x32xf32>
    %36 = arith.addf %32, %35 : vector<5x32xf32>
    %cst_26 = arith.constant dense<0.000000e+00> : vector<5x32xf32>
    %37 = tpu.matmul %24, %12, %cst_26 {dimension_numbers = #tpu.dot_dimension_numbers<[1], [0], [0], [1], [0, 0, 1, 1], [], []>} : vector<5x5xf32>, vector<5x32xf32>, vector<5x32xf32> -> vector<5x32xf32>
    %c0_27 = arith.constant 0 : index
    %c2 = arith.constant 2 : index
    %c0_28 = arith.constant 0 : index
    %c0_29 = arith.constant 0 : index
    %38 = vector.load %arg7[%c0_27, %c2, %c0_28, %c0_29] : memref<2x3x32x32xf32, #tpu.memory_space<vmem>>, vector<1x1x32x32xf32>
    %39 = vector.shape_cast %38 : vector<1x1x32x32xf32> to vector<32x32xf32>
    %cst_30 = arith.constant dense<0.000000e+00> : vector<5x32xf32>
    %40 = tpu.matmul %37, %39, %cst_30 {dimension_numbers = #tpu.dot_dimension_numbers<[1], [0], [0], [1], [0, 0, 1, 1], [], []>} : vector<5x32xf32>, vector<32x32xf32>, vector<5x32xf32> -> vector<5x32xf32>
    %41 = arith.addf %36, %40 : vector<5x32xf32>
    %cst_31 = arith.constant 0.000000e+00 : f32
    %42 = vector.broadcast %cst_31 : f32 to vector<5x32xf32>
    %43 = arith.maximumf %41, %42 : vector<5x32xf32>
    %c0_32 = arith.constant 0 : index
    %c0_33 = arith.constant 0 : index
    %c0_34 = arith.constant 0 : index
    %44 = vector.load %arg9[%c0_32, %c0_33, %c0_34] : memref<2x1x32xf32, #tpu.memory_space<vmem>>, vector<1x1x32xf32>
    %45 = vector.shape_cast %44 : vector<1x1x32xf32> to vector<1x32xf32>
    %cst_35 = arith.constant 1.000000e+00 : f32
    %46 = vector.broadcast %cst_35 : f32 to vector<1x32xf32>
    %47 = arith.addf %46, %45 : vector<1x32xf32>
    %48 = vector.broadcast %47 : vector<1x32xf32> to vector<5x32xf32>
    %49 = arith.mulf %43, %48 : vector<5x32xf32>
    %c0_36 = arith.constant 0 : index
    %c0_37 = arith.constant 0 : index
    %c0_38 = arith.constant 0 : index
    %50 = vector.load %arg10[%c0_36, %c0_37, %c0_38] : memref<2x1x32xf32, #tpu.memory_space<vmem>>, vector<1x1x32xf32>
    %51 = vector.shape_cast %50 : vector<1x1x32xf32> to vector<1x32xf32>
    %52 = vector.broadcast %51 : vector<1x32xf32> to vector<5x32xf32>
    %53 = arith.addf %49, %52 : vector<5x32xf32>
    %c1_39 = arith.constant 1 : index
    %c0_40 = arith.constant 0 : index
    %c0_41 = arith.constant 0 : index
    %54 = vector.load %arg8[%c1_39, %c0_40, %c0_41] : memref<2x1x32xf32, #tpu.memory_space<vmem>>, vector<1x1x32xf32>
    %55 = vector.shape_cast %54 : vector<1x1x32xf32> to vector<1x32xf32>
    %cst_42 = arith.constant dense<0.000000e+00> : vector<5x32xf32>
    %56 = tpu.matmul %19, %53, %cst_42 {dimension_numbers = #tpu.dot_dimension_numbers<[1], [0], [0], [1], [0, 0, 1, 1], [], []>} : vector<5x5xf32>, vector<5x32xf32>, vector<5x32xf32> -> vector<5x32xf32>
    %c1_43 = arith.constant 1 : index
    %c0_44 = arith.constant 0 : index
    %c0_45 = arith.constant 0 : index
    %c0_46 = arith.constant 0 : index
    %57 = vector.load %arg7[%c1_43, %c0_44, %c0_45, %c0_46] : memref<2x3x32x32xf32, #tpu.memory_space<vmem>>, vector<1x1x32x32xf32>
    %58 = vector.shape_cast %57 : vector<1x1x32x32xf32> to vector<32x32xf32>
    %cst_47 = arith.constant dense<0.000000e+00> : vector<5x32xf32>
    %59 = tpu.matmul %56, %58, %cst_47 {dimension_numbers = #tpu.dot_dimension_numbers<[1], [0], [0], [1], [0, 0, 1, 1], [], []>} : vector<5x32xf32>, vector<32x32xf32>, vector<5x32xf32> -> vector<5x32xf32>
    %60 = vector.broadcast %55 : vector<1x32xf32> to vector<5x32xf32>
    %61 = arith.addf %60, %59 : vector<5x32xf32>
    %c1_48 = arith.constant 1 : index
    %c1_49 = arith.constant 1 : index
    %c0_50 = arith.constant 0 : index
    %c0_51 = arith.constant 0 : index
    %62 = vector.load %arg7[%c1_48, %c1_49, %c0_50, %c0_51] : memref<2x3x32x32xf32, #tpu.memory_space<vmem>>, vector<1x1x32x32xf32>
    %63 = vector.shape_cast %62 : vector<1x1x32x32xf32> to vector<32x32xf32>
    %cst_52 = arith.constant dense<0.000000e+00> : vector<5x32xf32>
    %64 = tpu.matmul %53, %63, %cst_52 {dimension_numbers = #tpu.dot_dimension_numbers<[1], [0], [0], [1], [0, 0, 1, 1], [], []>} : vector<5x32xf32>, vector<32x32xf32>, vector<5x32xf32> -> vector<5x32xf32>
    %65 = arith.addf %61, %64 : vector<5x32xf32>
    %cst_53 = arith.constant dense<0.000000e+00> : vector<5x32xf32>
    %66 = tpu.matmul %24, %53, %cst_53 {dimension_numbers = #tpu.dot_dimension_numbers<[1], [0], [0], [1], [0, 0, 1, 1], [], []>} : vector<5x5xf32>, vector<5x32xf32>, vector<5x32xf32> -> vector<5x32xf32>
    %c1_54 = arith.constant 1 : index
    %c2_55 = arith.constant 2 : index
    %c0_56 = arith.constant 0 : index
    %c0_57 = arith.constant 0 : index
    %67 = vector.load %arg7[%c1_54, %c2_55, %c0_56, %c0_57] : memref<2x3x32x32xf32, #tpu.memory_space<vmem>>, vector<1x1x32x32xf32>
    %68 = vector.shape_cast %67 : vector<1x1x32x32xf32> to vector<32x32xf32>
    %cst_58 = arith.constant dense<0.000000e+00> : vector<5x32xf32>
    %69 = tpu.matmul %66, %68, %cst_58 {dimension_numbers = #tpu.dot_dimension_numbers<[1], [0], [0], [1], [0, 0, 1, 1], [], []>} : vector<5x32xf32>, vector<32x32xf32>, vector<5x32xf32> -> vector<5x32xf32>
    %70 = arith.addf %65, %69 : vector<5x32xf32>
    %cst_59 = arith.constant 0.000000e+00 : f32
    %71 = vector.broadcast %cst_59 : f32 to vector<5x32xf32>
    %72 = arith.maximumf %70, %71 : vector<5x32xf32>
    %c1_60 = arith.constant 1 : index
    %c0_61 = arith.constant 0 : index
    %c0_62 = arith.constant 0 : index
    %73 = vector.load %arg9[%c1_60, %c0_61, %c0_62] : memref<2x1x32xf32, #tpu.memory_space<vmem>>, vector<1x1x32xf32>
    %74 = vector.shape_cast %73 : vector<1x1x32xf32> to vector<1x32xf32>
    %cst_63 = arith.constant 1.000000e+00 : f32
    %75 = vector.broadcast %cst_63 : f32 to vector<1x32xf32>
    %76 = arith.addf %75, %74 : vector<1x32xf32>
    %77 = vector.broadcast %76 : vector<1x32xf32> to vector<5x32xf32>
    %78 = arith.mulf %72, %77 : vector<5x32xf32>
    %c1_64 = arith.constant 1 : index
    %c0_65 = arith.constant 0 : index
    %c0_66 = arith.constant 0 : index
    %79 = vector.load %arg10[%c1_64, %c0_65, %c0_66] : memref<2x1x32xf32, #tpu.memory_space<vmem>>, vector<1x1x32xf32>
    %80 = vector.shape_cast %79 : vector<1x1x32xf32> to vector<1x32xf32>
    %81 = vector.broadcast %80 : vector<1x32xf32> to vector<5x32xf32>
    %82 = arith.addf %78, %81 : vector<5x32xf32>
    %83 = vector.broadcast %3 : vector<5x1xf32> to vector<5x32xf32>
    %84 = arith.mulf %82, %83 : vector<5x32xf32>
    %c0_67 = arith.constant 0 : index
    %c0_68 = arith.constant 0 : index
    %c0_69 = arith.constant 0 : index
    %85 = vector.load %arg34[%c0_67, %c0_68, %c0_69] : memref<1x5x32xf32, #tpu.memory_space<vmem>>, vector<1x5x32xf32>
    %86 = vector.shape_cast %85 : vector<1x5x32xf32> to vector<5x32xf32>
    %87 = vector.shape_cast %84 : vector<5x32xf32> to vector<1x5x32xf32>
    tpu.vector_store %arg34[%c0_67, %c0_68, %c0_69], %87 {strides = array<i32>} : memref<1x5x32xf32, #tpu.memory_space<vmem>>, vector<1x5x32xf32>,
    %cst_70 = arith.constant 0.000000e+00 : f32
    %88 = vector.broadcast %cst_70 : f32 to vector<5x32xf32>
    %c0_71 = arith.constant 0 : index
    %c0_72 = arith.constant 0 : index
    %c0_73 = arith.constant 0 : index
    %89 = vector.load %arg11[%c0_71, %c0_72, %c0_73] : memref<4x32x8xf32, #tpu.memory_space<vmem>>, vector<1x32x8xf32>
    %90 = vector.shape_cast %89 : vector<1x32x8xf32> to vector<32x8xf32>
    %cst_74 = arith.constant dense<0.000000e+00> : vector<5x8xf32>
    %91 = tpu.matmul %84, %90, %cst_74 {dimension_numbers = #tpu.dot_dimension_numbers<[1], [0], [0], [1], [0, 0, 1, 1], [], []>} : vector<5x32xf32>, vector<32x8xf32>, vector<5x8xf32> -> vector<5x8xf32>
    %c0_75 = arith.constant 0 : index
    %c0_76 = arith.constant 0 : index
    %c0_77 = arith.constant 0 : index
    %92 = vector.load %arg12[%c0_75, %c0_76, %c0_77] : memref<4x1x8xf32, #tpu.memory_space<vmem>>, vector<1x1x8xf32>
    %93 = vector.shape_cast %92 : vector<1x1x8xf32> to vector<1x8xf32>
    %94 = vector.broadcast %93 : vector<1x8xf32> to vector<5x8xf32>
    %95 = arith.addf %91, %94 : vector<5x8xf32>
    %c0_78 = arith.constant 0 : index
    %c0_79 = arith.constant 0 : index
    %c0_80 = arith.constant 0 : index
    %c0_81 = arith.constant 0 : index
    %96 = vector.load %arg37[%c0_78, %c0_79, %c0_80, %c0_81] : memref<1x4x5x8xf32, #tpu.memory_space<vmem>>, vector<1x1x5x8xf32>
    %97 = vector.shape_cast %96 : vector<1x1x5x8xf32> to vector<5x8xf32>
    %98 = vector.shape_cast %95 : vector<5x8xf32> to vector<1x1x5x8xf32>
    tpu.vector_store %arg37[%c0_78, %c0_79, %c0_80, %c0_81], %98 {strides = array<i32>} : memref<1x4x5x8xf32, #tpu.memory_space<vmem>>, vector<1x1x5x8xf32>,
    %cst_82 = arith.constant 5.000000e-01 : f32
    %99 = vector.broadcast %cst_82 : f32 to vector<5x8xf32>
    %100 = arith.mulf %95, %99 : vector<5x8xf32>
    %cst_83 = arith.constant dense<0xFF800000> : vector<5xf32>
    %101 = vector.multi_reduction <maximumf>, %100, %cst_83 [1] : vector<5x8xf32> to vector<5xf32>
    %102 = vector.shape_cast %101 : vector<5xf32> to vector<5x1xf32>
    %103 = vector.broadcast %102 : vector<5x1xf32> to vector<5x8xf32>
    %104 = arith.subf %100, %103 : vector<5x8xf32>
    %105 = math.exp %104 : vector<5x8xf32>
    %cst_84 = arith.constant dense<0.000000e+00> : vector<5xf32>
    %106 = vector.multi_reduction <add>, %105, %cst_84 [1] : vector<5x8xf32> to vector<5xf32>
    %107 = vector.shape_cast %106 : vector<5xf32> to vector<5x1xf32>
    %108 = tpu.reciprocal %107 {approx = true} : vector<5x1xf32> -> vector<5x1xf32>
    %109 = vector.broadcast %108 : vector<5x1xf32> to vector<5x8xf32>
    %110 = arith.mulf %105, %109 : vector<5x8xf32>
    %c0_85 = arith.constant 0 : index
    %c0_86 = arith.constant 0 : index
    %c0_87 = arith.constant 0 : index
    %111 = vector.load %arg13[%c0_85, %c0_86, %c0_87] : memref<4x8x32xf32, #tpu.memory_space<vmem>>, vector<1x8x32xf32>
    %112 = vector.shape_cast %111 : vector<1x8x32xf32> to vector<8x32xf32>
    %cst_88 = arith.constant dense<0.000000e+00> : vector<5x32xf32>
    %113 = tpu.matmul %110, %112, %cst_88 {dimension_numbers = #tpu.dot_dimension_numbers<[1], [0], [0], [1], [0, 0, 1, 1], [], []>} : vector<5x8xf32>, vector<8x32xf32>, vector<5x32xf32> -> vector<5x32xf32>
    %114 = arith.addf %88, %113 : vector<5x32xf32>
    %c1_89 = arith.constant 1 : index
    %c0_90 = arith.constant 0 : index
    %c0_91 = arith.constant 0 : index
    %115 = vector.load %arg11[%c1_89, %c0_90, %c0_91] : memref<4x32x8xf32, #tpu.memory_space<vmem>>, vector<1x32x8xf32>
    %116 = vector.shape_cast %115 : vector<1x32x8xf32> to vector<32x8xf32>
    %cst_92 = arith.constant dense<0.000000e+00> : vector<5x8xf32>
    %117 = tpu.matmul %84, %116, %cst_92 {dimension_numbers = #tpu.dot_dimension_numbers<[1], [0], [0], [1], [0, 0, 1, 1], [], []>} : vector<5x32xf32>, vector<32x8xf32>, vector<5x8xf32> -> vector<5x8xf32>
    %c1_93 = arith.constant 1 : index
    %c0_94 = arith.constant 0 : index
    %c0_95 = arith.constant 0 : index
    %118 = vector.load %arg12[%c1_93, %c0_94, %c0_95] : memref<4x1x8xf32, #tpu.memory_space<vmem>>, vector<1x1x8xf32>
    %119 = vector.shape_cast %118 : vector<1x1x8xf32> to vector<1x8xf32>
    %120 = vector.broadcast %119 : vector<1x8xf32> to vector<5x8xf32>
    %121 = arith.addf %117, %120 : vector<5x8xf32>
    %c0_96 = arith.constant 0 : index
    %c1_97 = arith.constant 1 : index
    %c0_98 = arith.constant 0 : index
    %c0_99 = arith.constant 0 : index
    %122 = vector.load %arg37[%c0_96, %c1_97, %c0_98, %c0_99] : memref<1x4x5x8xf32, #tpu.memory_space<vmem>>, vector<1x1x5x8xf32>
    %123 = vector.shape_cast %122 : vector<1x1x5x8xf32> to vector<5x8xf32>
    %124 = vector.shape_cast %121 : vector<5x8xf32> to vector<1x1x5x8xf32>
    tpu.vector_store %arg37[%c0_96, %c1_97, %c0_98, %c0_99], %124 {strides = array<i32>} : memref<1x4x5x8xf32, #tpu.memory_space<vmem>>, vector<1x1x5x8xf32>,
    %cst_100 = arith.constant 5.000000e-01 : f32
    %125 = vector.broadcast %cst_100 : f32 to vector<5x8xf32>
    %126 = arith.mulf %121, %125 : vector<5x8xf32>
    %cst_101 = arith.constant dense<0xFF800000> : vector<5xf32>
    %127 = vector.multi_reduction <maximumf>, %126, %cst_101 [1] : vector<5x8xf32> to vector<5xf32>
    %128 = vector.shape_cast %127 : vector<5xf32> to vector<5x1xf32>
    %129 = vector.broadcast %128 : vector<5x1xf32> to vector<5x8xf32>
    %130 = arith.subf %126, %129 : vector<5x8xf32>
    %131 = math.exp %130 : vector<5x8xf32>
    %cst_102 = arith.constant dense<0.000000e+00> : vector<5xf32>
    %132 = vector.multi_reduction <add>, %131, %cst_102 [1] : vector<5x8xf32> to vector<5xf32>
    %133 = vector.shape_cast %132 : vector<5xf32> to vector<5x1xf32>
    %134 = tpu.reciprocal %133 {approx = true} : vector<5x1xf32> -> vector<5x1xf32>
    %135 = vector.broadcast %134 : vector<5x1xf32> to vector<5x8xf32>
    %136 = arith.mulf %131, %135 : vector<5x8xf32>
    %c1_103 = arith.constant 1 : index
    %c0_104 = arith.constant 0 : index
    %c0_105 = arith.constant 0 : index
    %137 = vector.load %arg13[%c1_103, %c0_104, %c0_105] : memref<4x8x32xf32, #tpu.memory_space<vmem>>, vector<1x8x32xf32>
    %138 = vector.shape_cast %137 : vector<1x8x32xf32> to vector<8x32xf32>
    %cst_106 = arith.constant dense<0.000000e+00> : vector<5x32xf32>
    %139 = tpu.matmul %136, %138, %cst_106 {dimension_numbers = #tpu.dot_dimension_numbers<[1], [0], [0], [1], [0, 0, 1, 1], [], []>} : vector<5x8xf32>, vector<8x32xf32>, vector<5x32xf32> -> vector<5x32xf32>
    %140 = arith.addf %114, %139 : vector<5x32xf32>
    %c2_107 = arith.constant 2 : index
    %c0_108 = arith.constant 0 : index
    %c0_109 = arith.constant 0 : index
    %141 = vector.load %arg11[%c2_107, %c0_108, %c0_109] : memref<4x32x8xf32, #tpu.memory_space<vmem>>, vector<1x32x8xf32>
    %142 = vector.shape_cast %141 : vector<1x32x8xf32> to vector<32x8xf32>
    %cst_110 = arith.constant dense<0.000000e+00> : vector<5x8xf32>
    %143 = tpu.matmul %84, %142, %cst_110 {dimension_numbers = #tpu.dot_dimension_numbers<[1], [0], [0], [1], [0, 0, 1, 1], [], []>} : vector<5x32xf32>, vector<32x8xf32>, vector<5x8xf32> -> vector<5x8xf32>
    %c2_111 = arith.constant 2 : index
    %c0_112 = arith.constant 0 : index
    %c0_113 = arith.constant 0 : index
    %144 = vector.load %arg12[%c2_111, %c0_112, %c0_113] : memref<4x1x8xf32, #tpu.memory_space<vmem>>, vector<1x1x8xf32>
    %145 = vector.shape_cast %144 : vector<1x1x8xf32> to vector<1x8xf32>
    %146 = vector.broadcast %145 : vector<1x8xf32> to vector<5x8xf32>
    %147 = arith.addf %143, %146 : vector<5x8xf32>
    %c0_114 = arith.constant 0 : index
    %c2_115 = arith.constant 2 : index
    %c0_116 = arith.constant 0 : index
    %c0_117 = arith.constant 0 : index
    %148 = vector.load %arg37[%c0_114, %c2_115, %c0_116, %c0_117] : memref<1x4x5x8xf32, #tpu.memory_space<vmem>>, vector<1x1x5x8xf32>
    %149 = vector.shape_cast %148 : vector<1x1x5x8xf32> to vector<5x8xf32>
    %150 = vector.shape_cast %147 : vector<5x8xf32> to vector<1x1x5x8xf32>
    tpu.vector_store %arg37[%c0_114, %c2_115, %c0_116, %c0_117], %150 {strides = array<i32>} : memref<1x4x5x8xf32, #tpu.memory_space<vmem>>, vector<1x1x5x8xf32>,
    %cst_118 = arith.constant 5.000000e-01 : f32
    %151 = vector.broadcast %cst_118 : f32 to vector<5x8xf32>
    %152 = arith.mulf %147, %151 : vector<5x8xf32>
    %cst_119 = arith.constant dense<0xFF800000> : vector<5xf32>
    %153 = vector.multi_reduction <maximumf>, %152, %cst_119 [1] : vector<5x8xf32> to vector<5xf32>
    %154 = vector.shape_cast %153 : vector<5xf32> to vector<5x1xf32>
    %155 = vector.broadcast %154 : vector<5x1xf32> to vector<5x8xf32>
    %156 = arith.subf %152, %155 : vector<5x8xf32>
    %157 = math.exp %156 : vector<5x8xf32>
    %cst_120 = arith.constant dense<0.000000e+00> : vector<5xf32>
    %158 = vector.multi_reduction <add>, %157, %cst_120 [1] : vector<5x8xf32> to vector<5xf32>
    %159 = vector.shape_cast %158 : vector<5xf32> to vector<5x1xf32>
    %160 = tpu.reciprocal %159 {approx = true} : vector<5x1xf32> -> vector<5x1xf32>
    %161 = vector.broadcast %160 : vector<5x1xf32> to vector<5x8xf32>
    %162 = arith.mulf %157, %161 : vector<5x8xf32>
    %c2_121 = arith.constant 2 : index
    %c0_122 = arith.constant 0 : index
    %c0_123 = arith.constant 0 : index
    %163 = vector.load %arg13[%c2_121, %c0_122, %c0_123] : memref<4x8x32xf32, #tpu.memory_space<vmem>>, vector<1x8x32xf32>
    %164 = vector.shape_cast %163 : vector<1x8x32xf32> to vector<8x32xf32>
    %cst_124 = arith.constant dense<0.000000e+00> : vector<5x32xf32>
    %165 = tpu.matmul %162, %164, %cst_124 {dimension_numbers = #tpu.dot_dimension_numbers<[1], [0], [0], [1], [0, 0, 1, 1], [], []>} : vector<5x8xf32>, vector<8x32xf32>, vector<5x32xf32> -> vector<5x32xf32>
    %166 = arith.addf %140, %165 : vector<5x32xf32>
    %c3 = arith.constant 3 : index
    %c0_125 = arith.constant 0 : index
    %c0_126 = arith.constant 0 : index
    %167 = vector.load %arg11[%c3, %c0_125, %c0_126] : memref<4x32x8xf32, #tpu.memory_space<vmem>>, vector<1x32x8xf32>
    %168 = vector.shape_cast %167 : vector<1x32x8xf32> to vector<32x8xf32>
    %cst_127 = arith.constant dense<0.000000e+00> : vector<5x8xf32>
    %169 = tpu.matmul %84, %168, %cst_127 {dimension_numbers = #tpu.dot_dimension_numbers<[1], [0], [0], [1], [0, 0, 1, 1], [], []>} : vector<5x32xf32>, vector<32x8xf32>, vector<5x8xf32> -> vector<5x8xf32>
    %c3_128 = arith.constant 3 : index
    %c0_129 = arith.constant 0 : index
    %c0_130 = arith.constant 0 : index
    %170 = vector.load %arg12[%c3_128, %c0_129, %c0_130] : memref<4x1x8xf32, #tpu.memory_space<vmem>>, vector<1x1x8xf32>
    %171 = vector.shape_cast %170 : vector<1x1x8xf32> to vector<1x8xf32>
    %172 = vector.broadcast %171 : vector<1x8xf32> to vector<5x8xf32>
    %173 = arith.addf %169, %172 : vector<5x8xf32>
    %c0_131 = arith.constant 0 : index
    %c3_132 = arith.constant 3 : index
    %c0_133 = arith.constant 0 : index
    %c0_134 = arith.constant 0 : index
    %174 = vector.load %arg37[%c0_131, %c3_132, %c0_133, %c0_134] : memref<1x4x5x8xf32, #tpu.memory_space<vmem>>, vector<1x1x5x8xf32>
    %175 = vector.shape_cast %174 : vector<1x1x5x8xf32> to vector<5x8xf32>
    %176 = vector.shape_cast %173 : vector<5x8xf32> to vector<1x1x5x8xf32>
    tpu.vector_store %arg37[%c0_131, %c3_132, %c0_133, %c0_134], %176 {strides = array<i32>} : memref<1x4x5x8xf32, #tpu.memory_space<vmem>>, vector<1x1x5x8xf32>,
    %cst_135 = arith.constant 5.000000e-01 : f32
    %177 = vector.broadcast %cst_135 : f32 to vector<5x8xf32>
    %178 = arith.mulf %173, %177 : vector<5x8xf32>
    %cst_136 = arith.constant dense<0xFF800000> : vector<5xf32>
    %179 = vector.multi_reduction <maximumf>, %178, %cst_136 [1] : vector<5x8xf32> to vector<5xf32>
    %180 = vector.shape_cast %179 : vector<5xf32> to vector<5x1xf32>
    %181 = vector.broadcast %180 : vector<5x1xf32> to vector<5x8xf32>
    %182 = arith.subf %178, %181 : vector<5x8xf32>
    %183 = math.exp %182 : vector<5x8xf32>
    %cst_137 = arith.constant dense<0.000000e+00> : vector<5xf32>
    %184 = vector.multi_reduction <add>, %183, %cst_137 [1] : vector<5x8xf32> to vector<5xf32>
    %185 = vector.shape_cast %184 : vector<5xf32> to vector<5x1xf32>
    %186 = tpu.reciprocal %185 {approx = true} : vector<5x1xf32> -> vector<5x1xf32>
    %187 = vector.broadcast %186 : vector<5x1xf32> to vector<5x8xf32>
    %188 = arith.mulf %183, %187 : vector<5x8xf32>
    %c3_138 = arith.constant 3 : index
    %c0_139 = arith.constant 0 : index
    %c0_140 = arith.constant 0 : index
    %189 = vector.load %arg13[%c3_138, %c0_139, %c0_140] : memref<4x8x32xf32, #tpu.memory_space<vmem>>, vector<1x8x32xf32>
    %190 = vector.shape_cast %189 : vector<1x8x32xf32> to vector<8x32xf32>
    %cst_141 = arith.constant dense<0.000000e+00> : vector<5x32xf32>
    %191 = tpu.matmul %188, %190, %cst_141 {dimension_numbers = #tpu.dot_dimension_numbers<[1], [0], [0], [1], [0, 0, 1, 1], [], []>} : vector<5x8xf32>, vector<8x32xf32>, vector<5x32xf32> -> vector<5x32xf32>
    %192 = arith.addf %166, %191 : vector<5x32xf32>
    %193 = vector.broadcast %3 : vector<5x1xf32> to vector<5x32xf32>
    %194 = arith.mulf %192, %193 : vector<5x32xf32>
    %c0_142 = arith.constant 0 : index
    %c0_143 = arith.constant 0 : index
    %c0_144 = arith.constant 0 : index
    %195 = vector.load %arg35[%c0_142, %c0_143, %c0_144] : memref<1x5x32xf32, #tpu.memory_space<vmem>>, vector<1x5x32xf32>
    %196 = vector.shape_cast %195 : vector<1x5x32xf32> to vector<5x32xf32>
    %197 = vector.shape_cast %194 : vector<5x32xf32> to vector<1x5x32xf32>
    tpu.vector_store %arg35[%c0_142, %c0_143, %c0_144], %197 {strides = array<i32>} : memref<1x5x32xf32, #tpu.memory_space<vmem>>, vector<1x5x32xf32>,
    %c0_145 = arith.constant 0 : index
    %c0_146 = arith.constant 0 : index
    %198 = vector.load %arg14[%c0_145, %c0_146] : memref<4x32xf32, #tpu.memory_space<vmem>>, vector<4x32xf32>
    %c0_147 = arith.constant 0 : index
    %c0_148 = arith.constant 0 : index
    %199 = vector.load %arg15[%c0_147, %c0_148] : memref<32x32xf32, #tpu.memory_space<vmem>>, vector<32x32xf32>
    %cst_149 = arith.constant dense<0.000000e+00> : vector<4x32xf32>
    %200 = tpu.matmul %198, %199, %cst_149 {dimension_numbers = #tpu.dot_dimension_numbers<[1], [0], [0], [1], [0, 0, 1, 1], [], []>} : vector<4x32xf32>, vector<32x32xf32>, vector<4x32xf32> -> vector<4x32xf32>
    %c0_150 = arith.constant 0 : index
    %c0_151 = arith.constant 0 : index
    %201 = vector.load %arg16[%c0_150, %c0_151] : memref<1x32xf32, #tpu.memory_space<vmem>>, vector<1x32xf32>
    %202 = vector.broadcast %201 : vector<1x32xf32> to vector<4x32xf32>
    %203 = arith.addf %200, %202 : vector<4x32xf32>
    %c0_152 = arith.constant 0 : index
    %c0_153 = arith.constant 0 : index
    %204 = vector.load %arg17[%c0_152, %c0_153] : memref<32x32xf32, #tpu.memory_space<vmem>>, vector<32x32xf32>
    %cst_154 = arith.constant dense<0.000000e+00> : vector<5x32xf32>
    %205 = tpu.matmul %84, %204, %cst_154 {dimension_numbers = #tpu.dot_dimension_numbers<[1], [0], [0], [1], [0, 0, 1, 1], [], []>} : vector<5x32xf32>, vector<32x32xf32>, vector<5x32xf32> -> vector<5x32xf32>
    %c0_155 = arith.constant 0 : index
    %c0_156 = arith.constant 0 : index
    %206 = vector.load %arg18[%c0_155, %c0_156] : memref<1x32xf32, #tpu.memory_space<vmem>>, vector<1x32xf32>
    %207 = vector.broadcast %206 : vector<1x32xf32> to vector<5x32xf32>
    %208 = arith.addf %205, %207 : vector<5x32xf32>
    %c0_157 = arith.constant 0 : index
    %c0_158 = arith.constant 0 : index
    %209 = vector.load %arg19[%c0_157, %c0_158] : memref<32x32xf32, #tpu.memory_space<vmem>>, vector<32x32xf32>
    %cst_159 = arith.constant dense<0.000000e+00> : vector<5x32xf32>
    %210 = tpu.matmul %84, %209, %cst_159 {dimension_numbers = #tpu.dot_dimension_numbers<[1], [0], [0], [1], [0, 0, 1, 1], [], []>} : vector<5x32xf32>, vector<32x32xf32>, vector<5x32xf32> -> vector<5x32xf32>
    %c0_160 = arith.constant 0 : index
    %c0_161 = arith.constant 0 : index
    %211 = vector.load %arg20[%c0_160, %c0_161] : memref<1x32xf32, #tpu.memory_space<vmem>>, vector<1x32xf32>
    %212 = vector.broadcast %211 : vector<1x32xf32> to vector<5x32xf32>
    %213 = arith.addf %210, %212 : vector<5x32xf32>
    %cst_162 = arith.constant dense<0.000000e+00> : vector<4x5xf32>
    %214 = tpu.matmul %203, %208, %cst_162 {dimension_numbers = #tpu.dot_dimension_numbers<[1], [1], [0], [0], [0, 0, 1, 0], [], []>} : vector<4x32xf32>, vector<5x32xf32>, vector<4x5xf32> -> vector<4x5xf32>
    %cst_163 = arith.constant 0.176776692 : f32
    %215 = vector.broadcast %cst_163 : f32 to vector<4x5xf32>
    %216 = arith.mulf %214, %215 : vector<4x5xf32>
    %cst_164 = arith.constant 1.000000e+00 : f32
    %217 = vector.broadcast %cst_164 : f32 to vector<1x5xf32>
    %218 = arith.subf %5, %217 : vector<1x5xf32>
    %cst_165 = arith.constant 1.000000e+09 : f32
    %219 = vector.broadcast %cst_165 : f32 to vector<1x5xf32>
    %220 = arith.mulf %218, %219 : vector<1x5xf32>
    %221 = vector.broadcast %220 : vector<1x5xf32> to vector<4x5xf32>
    %222 = arith.addf %216, %221 : vector<4x5xf32>
    %cst_166 = arith.constant dense<0xFF800000> : vector<4xf32>
    %223 = vector.multi_reduction <maximumf>, %222, %cst_166 [1] : vector<4x5xf32> to vector<4xf32>
    %224 = vector.shape_cast %223 : vector<4xf32> to vector<4x1xf32>
    %225 = vector.broadcast %224 : vector<4x1xf32> to vector<4x5xf32>
    %226 = arith.subf %222, %225 : vector<4x5xf32>
    %227 = math.exp %226 : vector<4x5xf32>
    %cst_167 = arith.constant dense<0.000000e+00> : vector<4xf32>
    %228 = vector.multi_reduction <add>, %227, %cst_167 [1] : vector<4x5xf32> to vector<4xf32>
    %229 = vector.shape_cast %228 : vector<4xf32> to vector<4x1xf32>
    %230 = tpu.reciprocal %229 {approx = true} : vector<4x1xf32> -> vector<4x1xf32>
    %231 = vector.broadcast %230 : vector<4x1xf32> to vector<4x5xf32>
    %232 = arith.mulf %227, %231 : vector<4x5xf32>
    %cst_168 = arith.constant dense<0.000000e+00> : vector<4x32xf32>
    %233 = tpu.matmul %232, %213, %cst_168 {dimension_numbers = #tpu.dot_dimension_numbers<[1], [0], [0], [1], [0, 0, 1, 1], [], []>} : vector<4x5xf32>, vector<5x32xf32>, vector<4x32xf32> -> vector<4x32xf32>
    %c0_169 = arith.constant 0 : index
    %c0_170 = arith.constant 0 : index
    %234 = vector.load %arg21[%c0_169, %c0_170] : memref<32x16xf32, #tpu.memory_space<vmem>>, vector<32x16xf32>
    %cst_171 = arith.constant dense<0.000000e+00> : vector<4x16xf32>
    %235 = tpu.matmul %233, %234, %cst_171 {dimension_numbers = #tpu.dot_dimension_numbers<[1], [0], [0], [1], [0, 0, 1, 1], [], []>} : vector<4x32xf32>, vector<32x16xf32>, vector<4x16xf32> -> vector<4x16xf32>
    %c0_172 = arith.constant 0 : index
    %c0_173 = arith.constant 0 : index
    %236 = vector.load %arg22[%c0_172, %c0_173] : memref<1x16xf32, #tpu.memory_space<vmem>>, vector<1x16xf32>
    %237 = vector.broadcast %236 : vector<1x16xf32> to vector<4x16xf32>
    %238 = arith.addf %235, %237 : vector<4x16xf32>
    %c0_174 = arith.constant 0 : index
    %c0_175 = arith.constant 0 : index
    %c0_176 = arith.constant 0 : index
    %239 = vector.load %arg36[%c0_174, %c0_175, %c0_176] : memref<1x4x16xf32, #tpu.memory_space<vmem>>, vector<1x4x16xf32>
    %240 = vector.shape_cast %239 : vector<1x4x16xf32> to vector<4x16xf32>
    %241 = vector.shape_cast %238 : vector<4x16xf32> to vector<1x4x16xf32>
    tpu.vector_store %arg36[%c0_174, %c0_175, %c0_176], %241 {strides = array<i32>} : memref<1x4x16xf32, #tpu.memory_space<vmem>>, vector<1x4x16xf32>,
    %c0_177 = arith.constant 0 : index
    %c0_178 = arith.constant 0 : index
    %242 = vector.load %arg23[%c0_177, %c0_178] : memref<32x32xf32, #tpu.memory_space<vmem>>, vector<32x32xf32>
    %cst_179 = arith.constant dense<0.000000e+00> : vector<5x32xf32>
    %243 = tpu.matmul %194, %242, %cst_179 {dimension_numbers = #tpu.dot_dimension_numbers<[1], [0], [0], [1], [0, 0, 1, 1], [], []>} : vector<5x32xf32>, vector<32x32xf32>, vector<5x32xf32> -> vector<5x32xf32>
    %c0_180 = arith.constant 0 : index
    %c0_181 = arith.constant 0 : index
    %244 = vector.load %arg24[%c0_180, %c0_181] : memref<1x32xf32, #tpu.memory_space<vmem>>, vector<1x32xf32>
    %245 = vector.broadcast %244 : vector<1x32xf32> to vector<5x32xf32>
    %246 = arith.addf %243, %245 : vector<5x32xf32>
    %c0_182 = arith.constant 0 : index
    %c0_183 = arith.constant 0 : index
    %247 = vector.load %arg25[%c0_182, %c0_183] : memref<16x32xf32, #tpu.memory_space<vmem>>, vector<16x32xf32>
    %cst_184 = arith.constant dense<0.000000e+00> : vector<4x32xf32>
    %248 = tpu.matmul %238, %247, %cst_184 {dimension_numbers = #tpu.dot_dimension_numbers<[1], [0], [0], [1], [0, 0, 1, 1], [], []>} : vector<4x16xf32>, vector<16x32xf32>, vector<4x32xf32> -> vector<4x32xf32>
    %c0_185 = arith.constant 0 : index
    %c0_186 = arith.constant 0 : index
    %249 = vector.load %arg26[%c0_185, %c0_186] : memref<1x32xf32, #tpu.memory_space<vmem>>, vector<1x32xf32>
    %250 = vector.broadcast %249 : vector<1x32xf32> to vector<4x32xf32>
    %251 = arith.addf %248, %250 : vector<4x32xf32>
    %c0_187 = arith.constant 0 : index
    %c0_188 = arith.constant 0 : index
    %252 = vector.load %arg27[%c0_187, %c0_188] : memref<16x32xf32, #tpu.memory_space<vmem>>, vector<16x32xf32>
    %cst_189 = arith.constant dense<0.000000e+00> : vector<4x32xf32>
    %253 = tpu.matmul %238, %252, %cst_189 {dimension_numbers = #tpu.dot_dimension_numbers<[1], [0], [0], [1], [0, 0, 1, 1], [], []>} : vector<4x16xf32>, vector<16x32xf32>, vector<4x32xf32> -> vector<4x32xf32>
    %c0_190 = arith.constant 0 : index
    %c0_191 = arith.constant 0 : index
    %254 = vector.load %arg28[%c0_190, %c0_191] : memref<1x32xf32, #tpu.memory_space<vmem>>, vector<1x32xf32>
    %255 = vector.broadcast %254 : vector<1x32xf32> to vector<4x32xf32>
    %256 = arith.addf %253, %255 : vector<4x32xf32>
    %cst_192 = arith.constant dense<0.000000e+00> : vector<5x4xf32>
    %257 = tpu.matmul %246, %251, %cst_192 {dimension_numbers = #tpu.dot_dimension_numbers<[1], [1], [0], [0], [0, 0, 1, 0], [], []>} : vector<5x32xf32>, vector<4x32xf32>, vector<5x4xf32> -> vector<5x4xf32>
    %cst_193 = arith.constant 0.176776692 : f32
    %258 = vector.broadcast %cst_193 : f32 to vector<5x4xf32>
    %259 = arith.mulf %257, %258 : vector<5x4xf32>
    %cst_194 = arith.constant dense<0xFF800000> : vector<5xf32>
    %260 = vector.multi_reduction <maximumf>, %259, %cst_194 [1] : vector<5x4xf32> to vector<5xf32>
    %261 = vector.shape_cast %260 : vector<5xf32> to vector<5x1xf32>
    %262 = vector.broadcast %261 : vector<5x1xf32> to vector<5x4xf32>
    %263 = arith.subf %259, %262 : vector<5x4xf32>
    %264 = math.exp %263 : vector<5x4xf32>
    %cst_195 = arith.constant dense<0.000000e+00> : vector<5xf32>
    %265 = vector.multi_reduction <add>, %264, %cst_195 [1] : vector<5x4xf32> to vector<5xf32>
    %266 = vector.shape_cast %265 : vector<5xf32> to vector<5x1xf32>
    %267 = tpu.reciprocal %266 {approx = true} : vector<5x1xf32> -> vector<5x1xf32>
    %268 = vector.broadcast %267 : vector<5x1xf32> to vector<5x4xf32>
    %269 = arith.mulf %264, %268 : vector<5x4xf32>
    %cst_196 = arith.constant dense<0.000000e+00> : vector<5x32xf32>
    %270 = tpu.matmul %269, %256, %cst_196 {dimension_numbers = #tpu.dot_dimension_numbers<[1], [0], [0], [1], [0, 0, 1, 1], [], []>} : vector<5x4xf32>, vector<4x32xf32>, vector<5x32xf32> -> vector<5x32xf32>
    %271 = arith.addf %194, %270 : vector<5x32xf32>
    %c0_197 = arith.constant 0 : index
    %c0_198 = arith.constant 0 : index
    %272 = vector.load %arg29[%c0_197, %c0_198] : memref<32x48xf32, #tpu.memory_space<vmem>>, vector<32x48xf32>
    %cst_199 = arith.constant dense<0.000000e+00> : vector<5x48xf32>
    %273 = tpu.matmul %271, %272, %cst_199 {dimension_numbers = #tpu.dot_dimension_numbers<[1], [0], [0], [1], [0, 0, 1, 1], [], []>} : vector<5x32xf32>, vector<32x48xf32>, vector<5x48xf32> -> vector<5x48xf32>
    %c0_200 = arith.constant 0 : index
    %c0_201 = arith.constant 0 : index
    %274 = vector.load %arg30[%c0_200, %c0_201] : memref<1x48xf32, #tpu.memory_space<vmem>>, vector<1x48xf32>
    %275 = vector.broadcast %274 : vector<1x48xf32> to vector<5x48xf32>
    %276 = arith.addf %273, %275 : vector<5x48xf32>
    %cst_202 = arith.constant 0.000000e+00 : f32
    %277 = vector.broadcast %cst_202 : f32 to vector<5x48xf32>
    %278 = arith.maximumf %276, %277 : vector<5x48xf32>
    %c0_203 = arith.constant 0 : index
    %c0_204 = arith.constant 0 : index
    %279 = vector.load %arg31[%c0_203, %c0_204] : memref<48x32xf32, #tpu.memory_space<vmem>>, vector<48x32xf32>
    %cst_205 = arith.constant dense<0.000000e+00> : vector<5x32xf32>
    %280 = tpu.matmul %278, %279, %cst_205 {dimension_numbers = #tpu.dot_dimension_numbers<[1], [0], [0], [1], [0, 0, 1, 1], [], []>} : vector<5x48xf32>, vector<48x32xf32>, vector<5x32xf32> -> vector<5x32xf32>
    %c0_206 = arith.constant 0 : index
    %c0_207 = arith.constant 0 : index
    %281 = vector.load %arg32[%c0_206, %c0_207] : memref<1x32xf32, #tpu.memory_space<vmem>>, vector<1x32xf32>
    %282 = vector.broadcast %281 : vector<1x32xf32> to vector<5x32xf32>
    %283 = arith.addf %280, %282 : vector<5x32xf32>
    %cst_208 = arith.constant 0.000000e+00 : f32
    %284 = vector.broadcast %cst_208 : f32 to vector<5x1xf32>
    %285 = arith.cmpf ogt, %3, %284 : vector<5x1xf32>
    %cst_209 = arith.constant -11.5129251 : f32
    %286 = vector.shape_cast %285 : vector<5x1xi1> to vector<5x1xi1>
    %287 = vector.broadcast %286 : vector<5x1xi1> to vector<5x32xi1>
    %288 = vector.broadcast %cst_209 : f32 to vector<5x32xf32>
    %289 = arith.select %287, %283, %288 : vector<5x32xi1>, vector<5x32xf32>
    %c0_210 = arith.constant 0 : index
    %c0_211 = arith.constant 0 : index
    %c0_212 = arith.constant 0 : index
    %290 = vector.load %arg33[%c0_210, %c0_211, %c0_212] : memref<1x5x32xf32, #tpu.memory_space<vmem>>, vector<1x5x32xf32>
    %291 = vector.shape_cast %290 : vector<1x5x32xf32> to vector<5x32xf32>
    %292 = vector.shape_cast %289 : vector<5x32xf32> to vector<1x5x32xf32>
    tpu.vector_store %arg33[%c0_210, %c0_211, %c0_212], %292 {strides = array<i32>} : memref<1x5x32xf32, #tpu.memory_space<vmem>>, vector<1x5x32xf32>,
    return
  }
  func.func @transform_0(%arg0: i32) -> (i32, i32, i32) {
    %c0_i32 = arith.constant 0 : i32
    %c0_i32_0 = arith.constant 0 : i32
    %c0_i32_1 = arith.constant 0 : i32
    return %arg0, %c0_i32, %c0_i32_0 : i32, i32, i32
  }
  func.func @transform_1(%arg0: i32) -> (i32, i32, i32) {
    %c0_i32 = arith.constant 0 : i32
    %c0_i32_0 = arith.constant 0 : i32
    %c0_i32_1 = arith.constant 0 : i32
    return %arg0, %c0_i32, %c0_i32_0 : i32, i32, i32
  }
  func.func @transform_2(%arg0: i32) -> (i32, i32, i32) {
    %c0_i32 = arith.constant 0 : i32
    %c0_i32_0 = arith.constant 0 : i32
    %c0_i32_1 = arith.constant 0 : i32
    return %arg0, %c0_i32, %c0_i32_0 : i32, i32, i32
  }
  func.func @transform_3(%arg0: i32) -> (i32, i32, i32) {
    %c0_i32 = arith.constant 0 : i32
    %c0_i32_0 = arith.constant 0 : i32
    %c0_i32_1 = arith.constant 0 : i32
    return %arg0, %c0_i32, %c0_i32_0 : i32, i32, i32
  }
  func.func @transform_4(%arg0: i32) -> (i32, i32) {
    %c0_i32 = arith.constant 0 : i32
    %c0_i32_0 = arith.constant 0 : i32
    %c0_i32_1 = arith.constant 0 : i32
    return %c0_i32, %c0_i32_0 : i32, i32
  }
  func.func @transform_5(%arg0: i32) -> (i32, i32) {
    %c0_i32 = arith.constant 0 : i32
    %c0_i32_0 = arith.constant 0 : i32
    %c0_i32_1 = arith.constant 0 : i32
    return %c0_i32, %c0_i32_0 : i32, i32
  }
  func.func @transform_6(%arg0: i32) -> (i32, i32, i32, i32) {
    %c0_i32 = arith.constant 0 : i32
    %c0_i32_0 = arith.constant 0 : i32
    %c0_i32_1 = arith.constant 0 : i32
    %c0_i32_2 = arith.constant 0 : i32
    %c0_i32_3 = arith.constant 0 : i32
    return %c0_i32, %c0_i32_0, %c0_i32_1, %c0_i32_2 : i32, i32, i32, i32
  }
  func.func @transform_7(%arg0: i32) -> (i32, i32, i32) {
    %c0_i32 = arith.constant 0 : i32
    %c0_i32_0 = arith.constant 0 : i32
    %c0_i32_1 = arith.constant 0 : i32
    %c0_i32_2 = arith.constant 0 : i32
    return %c0_i32, %c0_i32_0, %c0_i32_1 : i32, i32, i32
  }
  func.func @transform_8(%arg0: i32) -> (i32, i32, i32) {
    %c0_i32 = arith.constant 0 : i32
    %c0_i32_0 = arith.constant 0 : i32
    %c0_i32_1 = arith.constant 0 : i32
    %c0_i32_2 = arith.constant 0 : i32
    return %c0_i32, %c0_i32_0, %c0_i32_1 : i32, i32, i32
  }
  func.func @transform_9(%arg0: i32) -> (i32, i32, i32) {
    %c0_i32 = arith.constant 0 : i32
    %c0_i32_0 = arith.constant 0 : i32
    %c0_i32_1 = arith.constant 0 : i32
    %c0_i32_2 = arith.constant 0 : i32
    return %c0_i32, %c0_i32_0, %c0_i32_1 : i32, i32, i32
  }
  func.func @transform_10(%arg0: i32) -> (i32, i32, i32) {
    %c0_i32 = arith.constant 0 : i32
    %c0_i32_0 = arith.constant 0 : i32
    %c0_i32_1 = arith.constant 0 : i32
    %c0_i32_2 = arith.constant 0 : i32
    return %c0_i32, %c0_i32_0, %c0_i32_1 : i32, i32, i32
  }
  func.func @transform_11(%arg0: i32) -> (i32, i32, i32) {
    %c0_i32 = arith.constant 0 : i32
    %c0_i32_0 = arith.constant 0 : i32
    %c0_i32_1 = arith.constant 0 : i32
    %c0_i32_2 = arith.constant 0 : i32
    return %c0_i32, %c0_i32_0, %c0_i32_1 : i32, i32, i32
  }
  func.func @transform_12(%arg0: i32) -> (i32, i32, i32) {
    %c0_i32 = arith.constant 0 : i32
    %c0_i32_0 = arith.constant 0 : i32
    %c0_i32_1 = arith.constant 0 : i32
    %c0_i32_2 = arith.constant 0 : i32
    return %c0_i32, %c0_i32_0, %c0_i32_1 : i32, i32, i32
  }
  func.func @transform_13(%arg0: i32) -> (i32, i32) {
    %c0_i32 = arith.constant 0 : i32
    %c0_i32_0 = arith.constant 0 : i32
    %c0_i32_1 = arith.constant 0 : i32
    return %c0_i32, %c0_i32_0 : i32, i32
  }
  func.func @transform_14(%arg0: i32) -> (i32, i32) {
    %c0_i32 = arith.constant 0 : i32
    %c0_i32_0 = arith.constant 0 : i32
    %c0_i32_1 = arith.constant 0 : i32
    return %c0_i32, %c0_i32_0 : i32, i32
  }
  func.func @transform_15(%arg0: i32) -> (i32, i32) {
    %c0_i32 = arith.constant 0 : i32
    %c0_i32_0 = arith.constant 0 : i32
    %c0_i32_1 = arith.constant 0 : i32
    return %c0_i32, %c0_i32_0 : i32, i32
  }
  func.func @transform_16(%arg0: i32) -> (i32, i32) {
    %c0_i32 = arith.constant 0 : i32
    %c0_i32_0 = arith.constant 0 : i32
    %c0_i32_1 = arith.constant 0 : i32
    return %c0_i32, %c0_i32_0 : i32, i32
  }
  func.func @transform_17(%arg0: i32) -> (i32, i32) {
    %c0_i32 = arith.constant 0 : i32
    %c0_i32_0 = arith.constant 0 : i32
    %c0_i32_1 = arith.constant 0 : i32
    return %c0_i32, %c0_i32_0 : i32, i32
  }
  func.func @transform_18(%arg0: i32) -> (i32, i32) {
    %c0_i32 = arith.constant 0 : i32
    %c0_i32_0 = arith.constant 0 : i32
    %c0_i32_1 = arith.constant 0 : i32
    return %c0_i32, %c0_i32_0 : i32, i32
  }
  func.func @transform_19(%arg0: i32) -> (i32, i32) {
    %c0_i32 = arith.constant 0 : i32
    %c0_i32_0 = arith.constant 0 : i32
    %c0_i32_1 = arith.constant 0 : i32
    return %c0_i32, %c0_i32_0 : i32, i32
  }
  func.func @transform_20(%arg0: i32) -> (i32, i32) {
    %c0_i32 = arith.constant 0 : i32
    %c0_i32_0 = arith.constant 0 : i32
    %c0_i32_1 = arith.constant 0 : i32
    return %c0_i32, %c0_i32_0 : i32, i32
  }
  func.func @transform_21(%arg0: i32) -> (i32, i32) {
    %c0_i32 = arith.constant 0 : i32
    %c0_i32_0 = arith.constant 0 : i32
    %c0_i32_1 = arith.constant 0 : i32
    return %c0_i32, %c0_i32_0 : i32, i32
  }
  func.func @transform_22(%arg0: i32) -> (i32, i32) {
    %c0_i32 = arith.constant 0 : i32
    %c0_i32_0 = arith.constant 0 : i32
    %c0_i32_1 = arith.constant 0 : i32
    return %c0_i32, %c0_i32_0 : i32, i32
  }
  func.func @transform_23(%arg0: i32) -> (i32, i32) {
    %c0_i32 = arith.constant 0 : i32
    %c0_i32_0 = arith.constant 0 : i32
    %c0_i32_1 = arith.constant 0 : i32
    return %c0_i32, %c0_i32_0 : i32, i32
  }
  func.func @transform_24(%arg0: i32) -> (i32, i32) {
    %c0_i32 = arith.constant 0 : i32
    %c0_i32_0 = arith.constant 0 : i32
    %c0_i32_1 = arith.constant 0 : i32
    return %c0_i32, %c0_i32_0 : i32, i32
  }
  func.func @transform_25(%arg0: i32) -> (i32, i32) {
    %c0_i32 = arith.constant 0 : i32
    %c0_i32_0 = arith.constant 0 : i32
    %c0_i32_1 = arith.constant 0 : i32
    return %c0_i32, %c0_i32_0 : i32, i32
  }
  func.func @transform_26(%arg0: i32) -> (i32, i32) {
    %c0_i32 = arith.constant 0 : i32
    %c0_i32_0 = arith.constant 0 : i32
    %c0_i32_1 = arith.constant 0 : i32
    return %c0_i32, %c0_i32_0 : i32, i32
  }
  func.func @transform_27(%arg0: i32) -> (i32, i32) {
    %c0_i32 = arith.constant 0 : i32
    %c0_i32_0 = arith.constant 0 : i32
    %c0_i32_1 = arith.constant 0 : i32
    return %c0_i32, %c0_i32_0 : i32, i32
  }
  func.func @transform_28(%arg0: i32) -> (i32, i32) {
    %c0_i32 = arith.constant 0 : i32
    %c0_i32_0 = arith.constant 0 : i32
    %c0_i32_1 = arith.constant 0 : i32
    return %c0_i32, %c0_i32_0 : i32, i32
  }
  func.func @transform_29(%arg0: i32) -> (i32, i32) {
    %c0_i32 = arith.constant 0 : i32
    %c0_i32_0 = arith.constant 0 : i32
    %c0_i32_1 = arith.constant 0 : i32
    return %c0_i32, %c0_i32_0 : i32, i32
  }
  func.func @transform_30(%arg0: i32) -> (i32, i32) {
    %c0_i32 = arith.constant 0 : i32
    %c0_i32_0 = arith.constant 0 : i32
    %c0_i32_1 = arith.constant 0 : i32
    return %c0_i32, %c0_i32_0 : i32, i32
  }
  func.func @transform_31(%arg0: i32) -> (i32, i32) {
    %c0_i32 = arith.constant 0 : i32
    %c0_i32_0 = arith.constant 0 : i32
    %c0_i32_1 = arith.constant 0 : i32
    return %c0_i32, %c0_i32_0 : i32, i32
  }
  func.func @transform_32(%arg0: i32) -> (i32, i32, i32) {
    %c0_i32 = arith.constant 0 : i32
    %c0_i32_0 = arith.constant 0 : i32
    %c0_i32_1 = arith.constant 0 : i32
    return %arg0, %c0_i32, %c0_i32_0 : i32, i32, i32
  }
  func.func @transform_33(%arg0: i32) -> (i32, i32, i32) {
    %c0_i32 = arith.constant 0 : i32
    %c0_i32_0 = arith.constant 0 : i32
    %c0_i32_1 = arith.constant 0 : i32
    return %arg0, %c0_i32, %c0_i32_0 : i32, i32, i32
  }
  func.func @transform_34(%arg0: i32) -> (i32, i32, i32) {
    %c0_i32 = arith.constant 0 : i32
    %c0_i32_0 = arith.constant 0 : i32
    %c0_i32_1 = arith.constant 0 : i32
    return %arg0, %c0_i32, %c0_i32_0 : i32, i32, i32
  }
  func.func @transform_35(%arg0: i32) -> (i32, i32, i32) {
    %c0_i32 = arith.constant 0 : i32
    %c0_i32_0 = arith.constant 0 : i32
    %c0_i32_1 = arith.constant 0 : i32
    return %arg0, %c0_i32, %c0_i32_0 : i32, i32, i32
  }
  func.func @transform_36(%arg0: i32) -> (i32, i32, i32, i32) {
    %c0_i32 = arith.constant 0 : i32
    %c0_i32_0 = arith.constant 0 : i32
    %c0_i32_1 = arith.constant 0 : i32
    %c0_i32_2 = arith.constant 0 : i32
    return %arg0, %c0_i32, %c0_i32_0, %c0_i32_1 : i32, i32, i32, i32
  }
}

</mosaic_0001>

<llo_original>
// kernel: _lambda_.1
$region0: #{_lambda_.1}
  #allocation0 [shape = 'u32[]', space=smem, size = 0x4, offset = 0x4, fixed_abs, tag = 'smem constant byte address 0x4 - core index']
  #allocation1 [shape = 'u32[144,128]{1,0:T(1,128)}', space=vmem, size = 0x12000, scoped, tag = 'internal scratch']
  %s0 = inlined_call_operand.smem [shape: u32[37], index: -1, kind: input, shape index: {}]
  %s1 = sld [smem:[%s0]]
  %s2 = scalar_lea.smem %s0, 1
  %s3 = sld [smem:[%s2]]
  %s4 = scalar_lea.smem %s0, 2
  %s5 = sld [smem:[%s4]]
  %s6 = scalar_lea.smem %s0, 3
  %s7 = sld [smem:[%s6]]
  %s8 = scalar_lea.smem %s0, 4
  %s9 = sld [smem:[%s8]]
  %s10 = scalar_lea.smem %s0, 5
  %s11 = sld [smem:[%s10]]
  %s12 = scalar_lea.smem %s0, 6
  %s13 = sld [smem:[%s12]]
  %s14 = scalar_lea.smem %s0, 7
  %s15 = sld [smem:[%s14]]
  %s16 = scalar_lea.smem %s0, 8
  %s17 = sld [smem:[%s16]]
  %s18 = scalar_lea.smem %s0, 9
  %s19 = sld [smem:[%s18]]
  %s20 = scalar_lea.smem %s0, 10
  %s21 = sld [smem:[%s20]]
  %s22 = scalar_lea.smem %s0, 11
  %s23 = sld [smem:[%s22]]
  %s24 = scalar_lea.smem %s0, 12
  %s25 = sld [smem:[%s24]]
  %s26 = scalar_lea.smem %s0, 13
  %s27 = sld [smem:[%s26]]
  %s28 = scalar_lea.smem %s0, 14
  %s29 = sld [smem:[%s28]]
  %s30 = scalar_lea.smem %s0, 15
  %s31 = sld [smem:[%s30]]
  %s32 = scalar_lea.smem %s0, 16
  %s33 = sld [smem:[%s32]]
  %s34 = scalar_lea.smem %s0, 17
  %s35 = sld [smem:[%s34]]
  %s36 = scalar_lea.smem %s0, 18
  %s37 = sld [smem:[%s36]]
  %s38 = scalar_lea.smem %s0, 19
  %s39 = sld [smem:[%s38]]
  %s40 = scalar_lea.smem %s0, 20
  %s41 = sld [smem:[%s40]]
  %s42 = scalar_lea.smem %s0, 21
  %s43 = sld [smem:[%s42]]
  %s44 = scalar_lea.smem %s0, 22
  %s45 = sld [smem:[%s44]]
  %s46 = scalar_lea.smem %s0, 23
  %s47 = sld [smem:[%s46]]
  %s48 = scalar_lea.smem %s0, 24
  %s49 = sld [smem:[%s48]]
  %s50 = scalar_lea.smem %s0, 25
  %s51 = sld [smem:[%s50]]
  %s52 = scalar_lea.smem %s0, 26
  %s53 = sld [smem:[%s52]]
  %s54 = scalar_lea.smem %s0, 27
  %s55 = sld [smem:[%s54]]
  %s56 = scalar_lea.smem %s0, 28
  %s57 = sld [smem:[%s56]]
  %s58 = scalar_lea.smem %s0, 29
  %s59 = sld [smem:[%s58]]
  %s60 = scalar_lea.smem %s0, 30
  %s61 = sld [smem:[%s60]]
  %s62 = scalar_lea.smem %s0, 31
  %s63 = sld [smem:[%s62]]
  %s64 = scalar_lea.smem %s0, 32
  %s65 = sld [smem:[%s64]]
  %s66 = scalar_lea.smem %s0, 33
  %s67 = sld [smem:[%s66]]
  %s68 = scalar_lea.smem %s0, 34
  %s69 = sld [smem:[%s68]]
  %s70 = scalar_lea.smem %s0, 35
  %s71 = sld [smem:[%s70]]
  %s72 = scalar_lea.smem %s0, 36
  %s73 = sld [smem:[%s72]]
  %74 = xla_tuple %s65, %s67, %s69, %s71, %s73
  %s75 = sld [smem:[#allocation0]]
  $region213: #{_lambda_.1} parent=0
    _
  %s77 = ssub.s32 1, %s75
  %s78 = scalar_select 0, %s77, %s75
  $region1: #{_lambda_.1} parent=0
    #allocation2 [shape = 'u8[512]{0}', space=vmem, size = 0x400, scoped, tag = 'input window, operand 23, single buffered']
    #allocation3 [shape = 's32[2]{0}', space=sflag, size = 0x8, scoped, tag = 'scoped memory for _lambda_.1']
    #allocation4 [shape = 's32[2]{0}', space=sflag, size = 0x8, scoped, tag = 'scoped memory for _lambda_.1']
    #allocation5 [shape = 'u8[512]{0}', space=vmem, size = 0x400, scoped, tag = 'input window, operand 25, single buffered']
    #allocation6 [shape = 's32[1]{0}', space=sflag, size = 0x4, scoped, tag = 'scoped memory for _lambda_.1']
    #allocation7 [shape = 'u8[512]{0}', space=vmem, size = 0x400, scoped, tag = 'input window, operand 27, single buffered']
    #allocation8 [shape = 'u8[512]{0}', space=vmem, size = 0x400, scoped, tag = 'input window, operand 29, single buffered']
    #allocation9 [shape = 's32[1]{0}', space=sflag, size = 0x4, scoped, tag = 'scoped memory for _lambda_.1']
    #allocation10 [shape = 'u8[512]{0}', space=vmem, size = 0x400, scoped, tag = 'input window, operand 31, single buffered']
    #allocation11 [shape = 'u8[4096]{0}', space=vmem, size = 0x1000, scoped, tag = 'output window, operand 3']
    %79 = vsyncpa [#allocation3], 0
    %80 = vsyncpa [#allocation6], 0
    %81 = vsyncpa [#allocation9], 0
    %82 = vsyncpa [#allocation4], 0
    %s83 = scalar_lea.sflag [#allocation4], 1
    %84 = vsyncpa %s83, 0
    loop: start=0, step=1, limit=4
    $region2: #{_lambda_.1} parent=1 // loop_pre_header
      _
    $region3: #{_lambda_.1} parent=1 // loop_header
      %s86 = sphi 0, %s90
      %p87 = scmp.ge.s32.totalorder %s86, 4
      %s96 = sphi 0, %s98
      %s99 = sphi 0, %s96
      %s100 = sphi 0, %s99
      %s116 = sphi 0, %s100
      %s122 = sphi 0, %s124
      %s125 = sphi 0, %s122
      %s126 = sphi 0, %s125
      %s142 = sphi 0, %s126
      %s148 = sphi 0, %s150
      %s151 = sphi 0, %s148
      %s152 = sphi 0, %s151
      %s168 = sphi 0, %s152
      %s174 = sphi 0, %s176
      %s177 = sphi 0, %s174
      %s178 = sphi 0, %s177
      %s194 = sphi 0, %s178
      %s198 = sphi 0, %s198
      %s200 = sphi 0, %s198
      %s201 = sphi 0, %s200
      %s215 = sphi 0, %s201
      %s219 = sphi 0, %s219
      %s221 = sphi 0, %s219
      %s222 = sphi 0, %s221
      %s236 = sphi 0, %s222
      %s240 = sphi 0, %s240
      %s242 = sphi 0, %s240
      %s243 = sphi 0, %s242
      %s257 = sphi 0, %s243
      %s261 = sphi 0, %s261
      %s263 = sphi 0, %s261
      %s264 = sphi 0, %s263
      %s278 = sphi 0, %s264
      %s282 = sphi 0, %s282
      %s284 = sphi 0, %s282
      %s285 = sphi 0, %s284
      %s299 = sphi 0, %s285
      %s303 = sphi 0, %s303
      %s305 = sphi 0, %s303
      %s306 = sphi 0, %s305
      %s320 = sphi 0, %s306
      %s324 = sphi 0, %s324
      %s326 = sphi 0, %s324
      %s327 = sphi 0, %s326
      %s341 = sphi 0, %s327
      %s345 = sphi 0, %s345
      %s347 = sphi 0, %s345
      %s348 = sphi 0, %s347
      %s362 = sphi 0, %s348
      %s366 = sphi 0, %s366
      %s368 = sphi 0, %s366
      %s369 = sphi 0, %s368
      %s383 = sphi 0, %s369
      %s387 = sphi 0, %s387
      %s389 = sphi 0, %s387
      %s390 = sphi 0, %s389
      %s404 = sphi 0, %s390
      %s408 = sphi 0, %s408
      %s410 = sphi 0, %s408
      %s411 = sphi 0, %s410
      %s425 = sphi 0, %s411
      %s429 = sphi 0, %s429
      %s431 = sphi 0, %s429
      %s432 = sphi 0, %s431
      %s446 = sphi 0, %s432
      %s450 = sphi 0, %s450
      %s452 = sphi 0, %s450
      %s453 = sphi 0, %s452
      %s467 = sphi 0, %s453
      %s471 = sphi 0, %s471
      %s473 = sphi 0, %s471
      %s474 = sphi 0, %s473
      %s488 = sphi 0, %s474
      %s492 = sphi 0, %s492
      %s494 = sphi 0, %s492
      %s495 = sphi 0, %s494
      %s509 = sphi 0, %s495
      %s513 = sphi 0, %s513
      %s515 = sphi 0, %s513
      %s516 = sphi 0, %s515
      %s530 = sphi 0, %s516
      %s534 = sphi 0, %s534
      %s536 = sphi 0, %s534
      %s537 = sphi 0, %s536
      %s551 = sphi 0, %s537
      %s555 = sphi 0, %s555
      %s557 = sphi 0, %s555
      %s558 = sphi 0, %s557
      %s572 = sphi 0, %s558
      %s576 = sphi 0, %s576
      %s578 = sphi 0, %s576
      %s579 = sphi 0, %s578
      %s593 = sphi 0, %s579
      %s597 = sphi 0, %s597
      %s599 = sphi 0, %s597
      %s600 = sphi 0, %s599
      %s614 = sphi 0, %s600
      %s618 = sphi 0, %s618
      %s620 = sphi 0, %s618
      %s621 = sphi 0, %s620
      %s635 = sphi 0, %s621
      %s639 = sphi 0, %s639
      %s641 = sphi 0, %s639
      %s642 = sphi 0, %s641
      %s656 = sphi 0, %s642
      %s660 = sphi 0, %s660
      %s662 = sphi 0, %s660
      %s663 = sphi 0, %s662
      %s677 = sphi 0, %s663
      %s681 = sphi 0, %s681
      %s683 = sphi 0, %s681
      %s684 = sphi 0, %s683
      %s698 = sphi 0, %s684
      %s702 = sphi 0, %s702
      %s704 = sphi 0, %s702
      %s705 = sphi 0, %s704
      %s719 = sphi 0, %s705
      %s723 = sphi 0, %s723
      %s725 = sphi 0, %s723
      %s726 = sphi 0, %s725
      %s740 = sphi 0, %s726
      %s744 = sphi 0, %s744
      %s746 = sphi 0, %s744
      %s747 = sphi 0, %s746
      %s761 = sphi 0, %s747
      %s765 = sphi 0, %s765
      %s767 = sphi 0, %s765
      %s768 = sphi 0, %s767
      %s782 = sphi 0, %s768
      %s788 = sphi 0, %s790
      %s791 = sphi 0, %s788
      %s792 = sphi 0, %s791
      %s808 = sphi 0, %s792
      %s814 = sphi 0, %s816
      %s817 = sphi 0, %s814
      %s818 = sphi 0, %s817
      %s834 = sphi 0, %s818
      %s840 = sphi 0, %s842
      %s843 = sphi 0, %s840
      %s844 = sphi 0, %s843
      %s860 = sphi 0, %s844
      %s866 = sphi 0, %s868
      %s869 = sphi 0, %s866
      %s870 = sphi 0, %s869
      %s886 = sphi 0, %s870
      %s892 = sphi 0, %s894
      %s895 = sphi 0, %s892
      %s896 = sphi 0, %s895
      %s912 = sphi 0, %s896
    $region4: #{_lambda_.1} parent=1 // loop_header_branch
      %89 = sbr.rel (%p87) target = $region8
    $region5: #{_lambda_.1} parent=1 // loop_body
      %s91 = ssub.s32 %s86, 1
      %s92 = ssub.s32 %s86, 2
      %s93 = sadd.s32 %s86, 1
      %s94 = ssub.s32 %s86, %s93
      %p95 = scmp.eq.s32.totalorder %s94, 0
      %s97 = sadd.s32 %s96, 1
      %s98 = scalar_select %p95, %s96, %s97
      %p101 = pneg %p95
      %p102 = scmp.eq.s32.totalorder %s86, 1
      %p103 = por %p101, %p102
      %p104 = scmp.ne.s32.totalorder %s96, %s99
      %p105 = scmp.eq.s32.totalorder %s86, 0
      %p106 = por %p104, %p105
      %p107 = scmp.ne.s32.totalorder %s96, %s99
      %p108 = scmp.eq.s32.totalorder %s91, 1
      %p109 = por %p107, %p108
      %p110 = scmp.ne.s32.totalorder %s99, %s100
      %p111 = scmp.eq.s32.totalorder %s91, 0
      %p112 = por %p110, %p111
      %p113 = scmp.ne.s32.totalorder %s99, %s100
      %p114 = scmp.eq.s32.totalorder %s92, 1
      %p115 = por %p113, %p114
      %p117 = scmp.ne.s32.totalorder %s100, %s116
      %p118 = scmp.eq.s32.totalorder %s92, 0
      %p119 = por %p117, %p118
      %s120 = ssub.s32 %s86, %s93
      %p121 = scmp.eq.s32.totalorder %s120, 0
      %s123 = sadd.s32 %s122, 1
      %s124 = scalar_select %p121, %s122, %s123
      %p127 = pneg %p121
      %p128 = scmp.eq.s32.totalorder %s86, 1
      %p129 = por %p127, %p128
      %p130 = scmp.ne.s32.totalorder %s122, %s125
      %p131 = scmp.eq.s32.totalorder %s86, 0
      %p132 = por %p130, %p131
      %p133 = scmp.ne.s32.totalorder %s122, %s125
      %p134 = scmp.eq.s32.totalorder %s91, 1
      %p135 = por %p133, %p134
      %p136 = scmp.ne.s32.totalorder %s125, %s126
      %p137 = scmp.eq.s32.totalorder %s91, 0
      %p138 = por %p136, %p137
      %p139 = scmp.ne.s32.totalorder %s125, %s126
      %p140 = scmp.eq.s32.totalorder %s92, 1
      %p141 = por %p139, %p140
      %p143 = scmp.ne.s32.totalorder %s126, %s142
      %p144 = scmp.eq.s32.totalorder %s92, 0
      %p145 = por %p143, %p144
      %s146 = ssub.s32 %s86, %s93
      %p147 = scmp.eq.s32.totalorder %s146, 0
      %s149 = sadd.s32 %s148, 1
      %s150 = scalar_select %p147, %s148, %s149
      %p153 = pneg %p147
      %p154 = scmp.eq.s32.totalorder %s86, 1
      %p155 = por %p153, %p154
      %p156 = scmp.ne.s32.totalorder %s148, %s151
      %p157 = scmp.eq.s32.totalorder %s86, 0
      %p158 = por %p156, %p157
      %p159 = scmp.ne.s32.totalorder %s148, %s151
      %p160 = scmp.eq.s32.totalorder %s91, 1
      %p161 = por %p159, %p160
      %p162 = scmp.ne.s32.totalorder %s151, %s152
      %p163 = scmp.eq.s32.totalorder %s91, 0
      %p164 = por %p162, %p163
      %p165 = scmp.ne.s32.totalorder %s151, %s152
      %p166 = scmp.eq.s32.totalorder %s92, 1
      %p167 = por %p165, %p166
      %p169 = scmp.ne.s32.totalorder %s152, %s168
      %p170 = scmp.eq.s32.totalorder %s92, 0
      %p171 = por %p169, %p170
      %s172 = ssub.s32 %s86, %s93
      %p173 = scmp.eq.s32.totalorder %s172, 0
      %s175 = sadd.s32 %s174, 1
      %s176 = scalar_select %p173, %s174, %s175
      %p179 = pneg %p173
      %p180 = scmp.eq.s32.totalorder %s86, 1
      %p181 = por %p179, %p180
      %p182 = scmp.ne.s32.totalorder %s174, %s177
      %p183 = scmp.eq.s32.totalorder %s86, 0
      %p184 = por %p182, %p183
      %p185 = scmp.ne.s32.totalorder %s174, %s177
      %p186 = scmp.eq.s32.totalorder %s91, 1
      %p187 = por %p185, %p186
      %p188 = scmp.ne.s32.totalorder %s177, %s178
      %p189 = scmp.eq.s32.totalorder %s91, 0
      %p190 = por %p188, %p189
      %p191 = scmp.ne.s32.totalorder %s177, %s178
      %p192 = scmp.eq.s32.totalorder %s92, 1
      %p193 = por %p191, %p192
      %p195 = scmp.ne.s32.totalorder %s178, %s194
      %p196 = scmp.eq.s32.totalorder %s92, 0
      %p197 = por %p195, %p196
      %s199 = sadd.s32 %s198, 1
      %p202 = scmp.eq.s32.totalorder %s86, 1
      %p203 = scmp.ne.s32.totalorder %s198, %s200
      %p204 = scmp.eq.s32.totalorder %s86, 0
      %p205 = por %p203, %p204
      %p206 = scmp.ne.s32.totalorder %s198, %s200
      %p207 = scmp.eq.s32.totalorder %s91, 1
      %p208 = por %p206, %p207
      %p209 = scmp.ne.s32.totalorder %s200, %s201
      %p210 = scmp.eq.s32.totalorder %s91, 0
      %p211 = por %p209, %p210
      %p212 = scmp.ne.s32.totalorder %s200, %s201
      %p213 = scmp.eq.s32.totalorder %s92, 1
      %p214 = por %p212, %p213
      %p216 = scmp.ne.s32.totalorder %s201, %s215
      %p217 = scmp.eq.s32.totalorder %s92, 0
      %p218 = por %p216, %p217
      %s220 = sadd.s32 %s219, 1
      %p223 = scmp.eq.s32.totalorder %s86, 1
      %p224 = scmp.ne.s32.totalorder %s219, %s221
      %p225 = scmp.eq.s32.totalorder %s86, 0
      %p226 = por %p224, %p225
      %p227 = scmp.ne.s32.totalorder %s219, %s221
      %p228 = scmp.eq.s32.totalorder %s91, 1
      %p229 = por %p227, %p228
      %p230 = scmp.ne.s32.totalorder %s221, %s222
      %p231 = scmp.eq.s32.totalorder %s91, 0
      %p232 = por %p230, %p231
      %p233 = scmp.ne.s32.totalorder %s221, %s222
      %p234 = scmp.eq.s32.totalorder %s92, 1
      %p235 = por %p233, %p234
      %p237 = scmp.ne.s32.totalorder %s222, %s236
      %p238 = scmp.eq.s32.totalorder %s92, 0
      %p239 = por %p237, %p238
      %s241 = sadd.s32 %s240, 1
      %p244 = scmp.eq.s32.totalorder %s86, 1
      %p245 = scmp.ne.s32.totalorder %s240, %s242
      %p246 = scmp.eq.s32.totalorder %s86, 0
      %p247 = por %p245, %p246
      %p248 = scmp.ne.s32.totalorder %s240, %s242
      %p249 = scmp.eq.s32.totalorder %s91, 1
      %p250 = por %p248, %p249
      %p251 = scmp.ne.s32.totalorder %s242, %s243
      %p252 = scmp.eq.s32.totalorder %s91, 0
      %p253 = por %p251, %p252
      %p254 = scmp.ne.s32.totalorder %s242, %s243
      %p255 = scmp.eq.s32.totalorder %s92, 1
      %p256 = por %p254, %p255
      %p258 = scmp.ne.s32.totalorder %s243, %s257
      %p259 = scmp.eq.s32.totalorder %s92, 0
      %p260 = por %p258, %p259
      %s262 = sadd.s32 %s261, 1
      %p265 = scmp.eq.s32.totalorder %s86, 1
      %p266 = scmp.ne.s32.totalorder %s261, %s263
      %p267 = scmp.eq.s32.totalorder %s86, 0
      %p268 = por %p266, %p267
      %p269 = scmp.ne.s32.totalorder %s261, %s263
      %p270 = scmp.eq.s32.totalorder %s91, 1
      %p271 = por %p269, %p270
      %p272 = scmp.ne.s32.totalorder %s263, %s264
      %p273 = scmp.eq.s32.totalorder %s91, 0
      %p274 = por %p272, %p273
      %p275 = scmp.ne.s32.totalorder %s263, %s264
      %p276 = scmp.eq.s32.totalorder %s92, 1
      %p277 = por %p275, %p276
      %p279 = scmp.ne.s32.totalorder %s264, %s278
      %p280 = scmp.eq.s32.totalorder %s92, 0
      %p281 = por %p279, %p280
      %s283 = sadd.s32 %s282, 1
      %p286 = scmp.eq.s32.totalorder %s86, 1
      %p287 = scmp.ne.s32.totalorder %s282, %s284
      %p288 = scmp.eq.s32.totalorder %s86, 0
      %p289 = por %p287, %p288
      %p290 = scmp.ne.s32.totalorder %s282, %s284
      %p291 = scmp.eq.s32.totalorder %s91, 1
      %p292 = por %p290, %p291
      %p293 = scmp.ne.s32.totalorder %s284, %s285
      %p294 = scmp.eq.s32.totalorder %s91, 0
      %p295 = por %p293, %p294
      %p296 = scmp.ne.s32.totalorder %s284, %s285
      %p297 = scmp.eq.s32.totalorder %s92, 1
      %p298 = por %p296, %p297
      %p300 = scmp.ne.s32.totalorder %s285, %s299
      %p301 = scmp.eq.s32.totalorder %s92, 0
      %p302 = por %p300, %p301
      %s304 = sadd.s32 %s303, 1
      %p307 = scmp.eq.s32.totalorder %s86, 1
      %p308 = scmp.ne.s32.totalorder %s303, %s305
      %p309 = scmp.eq.s32.totalorder %s86, 0
      %p310 = por %p308, %p309
      %p311 = scmp.ne.s32.totalorder %s303, %s305
      %p312 = scmp.eq.s32.totalorder %s91, 1
      %p313 = por %p311, %p312
      %p314 = scmp.ne.s32.totalorder %s305, %s306
      %p315 = scmp.eq.s32.totalorder %s91, 0
      %p316 = por %p314, %p315
      %p317 = scmp.ne.s32.totalorder %s305, %s306
      %p318 = scmp.eq.s32.totalorder %s92, 1
      %p319 = por %p317, %p318
      %p321 = scmp.ne.s32.totalorder %s306, %s320
      %p322 = scmp.eq.s32.totalorder %s92, 0
      %p323 = por %p321, %p322
      %s325 = sadd.s32 %s324, 1
      %p328 = scmp.eq.s32.totalorder %s86, 1
      %p329 = scmp.ne.s32.totalorder %s324, %s326
      %p330 = scmp.eq.s32.totalorder %s86, 0
      %p331 = por %p329, %p330
      %p332 = scmp.ne.s32.totalorder %s324, %s326
      %p333 = scmp.eq.s32.totalorder %s91, 1
      %p334 = por %p332, %p333
      %p335 = scmp.ne.s32.totalorder %s326, %s327
      %p336 = scmp.eq.s32.totalorder %s91, 0
      %p337 = por %p335, %p336
      %p338 = scmp.ne.s32.totalorder %s326, %s327
      %p339 = scmp.eq.s32.totalorder %s92, 1
      %p340 = por %p338, %p339
      %p342 = scmp.ne.s32.totalorder %s327, %s341
      %p343 = scmp.eq.s32.totalorder %s92, 0
      %p344 = por %p342, %p343
      %s346 = sadd.s32 %s345, 1
      %p349 = scmp.eq.s32.totalorder %s86, 1
      %p350 = scmp.ne.s32.totalorder %s345, %s347
      %p351 = scmp.eq.s32.totalorder %s86, 0
      %p352 = por %p350, %p351
      %p353 = scmp.ne.s32.totalorder %s345, %s347
      %p354 = scmp.eq.s32.totalorder %s91, 1
      %p355 = por %p353, %p354
      %p356 = scmp.ne.s32.totalorder %s347, %s348
      %p357 = scmp.eq.s32.totalorder %s91, 0
      %p358 = por %p356, %p357
      %p359 = scmp.ne.s32.totalorder %s347, %s348
      %p360 = scmp.eq.s32.totalorder %s92, 1
      %p361 = por %p359, %p360
      %p363 = scmp.ne.s32.totalorder %s348, %s362
      %p364 = scmp.eq.s32.totalorder %s92, 0
      %p365 = por %p363, %p364
      %s367 = sadd.s32 %s366, 1
      %p370 = scmp.eq.s32.totalorder %s86, 1
      %p371 = scmp.ne.s32.totalorder %s366, %s368
      %p372 = scmp.eq.s32.totalorder %s86, 0
      %p373 = por %p371, %p372
      %p374 = scmp.ne.s32.totalorder %s366, %s368
      %p375 = scmp.eq.s32.totalorder %s91, 1
      %p376 = por %p374, %p375
      %p377 = scmp.ne.s32.totalorder %s368, %s369
      %p378 = scmp.eq.s32.totalorder %s91, 0
      %p379 = por %p377, %p378
      %p380 = scmp.ne.s32.totalorder %s368, %s369
      %p381 = scmp.eq.s32.totalorder %s92, 1
      %p382 = por %p380, %p381
      %p384 = scmp.ne.s32.totalorder %s369, %s383
      %p385 = scmp.eq.s32.totalorder %s92, 0
      %p386 = por %p384, %p385
      %s388 = sadd.s32 %s387, 1
      %p391 = scmp.eq.s32.totalorder %s86, 1
      %p392 = scmp.ne.s32.totalorder %s387, %s389
      %p393 = scmp.eq.s32.totalorder %s86, 0
      %p394 = por %p392, %p393
      %p395 = scmp.ne.s32.totalorder %s387, %s389
      %p396 = scmp.eq.s32.totalorder %s91, 1
      %p397 = por %p395, %p396
      %p398 = scmp.ne.s32.totalorder %s389, %s390
      %p399 = scmp.eq.s32.totalorder %s91, 0
      %p400 = por %p398, %p399
      %p401 = scmp.ne.s32.totalorder %s389, %s390
      %p402 = scmp.eq.s32.totalorder %s92, 1
      %p403 = por %p401, %p402
      %p405 = scmp.ne.s32.totalorder %s390, %s404
      %p406 = scmp.eq.s32.totalorder %s92, 0
      %p407 = por %p405, %p406
      %s409 = sadd.s32 %s408, 1
      %p412 = scmp.eq.s32.totalorder %s86, 1
      %p413 = scmp.ne.s32.totalorder %s408, %s410
      %p414 = scmp.eq.s32.totalorder %s86, 0
      %p415 = por %p413, %p414
      %p416 = scmp.ne.s32.totalorder %s408, %s410
      %p417 = scmp.eq.s32.totalorder %s91, 1
      %p418 = por %p416, %p417
      %p419 = scmp.ne.s32.totalorder %s410, %s411
      %p420 = scmp.eq.s32.totalorder %s91, 0
      %p421 = por %p419, %p420
      %p422 = scmp.ne.s32.totalorder %s410, %s411
      %p423 = scmp.eq.s32.totalorder %s92, 1
      %p424 = por %p422, %p423
      %p426 = scmp.ne.s32.totalorder %s411, %s425
      %p427 = scmp.eq.s32.totalorder %s92, 0
      %p428 = por %p426, %p427
      %s430 = sadd.s32 %s429, 1
      %p433 = scmp.eq.s32.totalorder %s86, 1
      %p434 = scmp.ne.s32.totalorder %s429, %s431
      %p435 = scmp.eq.s32.totalorder %s86, 0
      %p436 = por %p434, %p435
      %p437 = scmp.ne.s32.totalorder %s429, %s431
      %p438 = scmp.eq.s32.totalorder %s91, 1
      %p439 = por %p437, %p438
      %p440 = scmp.ne.s32.totalorder %s431, %s432
      %p441 = scmp.eq.s32.totalorder %s91, 0
      %p442 = por %p440, %p441
      %p443 = scmp.ne.s32.totalorder %s431, %s432
      %p444 = scmp.eq.s32.totalorder %s92, 1
      %p445 = por %p443, %p444
      %p447 = scmp.ne.s32.totalorder %s432, %s446
      %p448 = scmp.eq.s32.totalorder %s92, 0
      %p449 = por %p447, %p448
      %s451 = sadd.s32 %s450, 1
      %p454 = scmp.eq.s32.totalorder %s86, 1
      %p455 = scmp.ne.s32.totalorder %s450, %s452
      %p456 = scmp.eq.s32.totalorder %s86, 0
      %p457 = por %p455, %p456
      %p458 = scmp.ne.s32.totalorder %s450, %s452
      %p459 = scmp.eq.s32.totalorder %s91, 1
      %p460 = por %p458, %p459
      %p461 = scmp.ne.s32.totalorder %s452, %s453
      %p462 = scmp.eq.s32.totalorder %s91, 0
      %p463 = por %p461, %p462
      %p464 = scmp.ne.s32.totalorder %s452, %s453
      %p465 = scmp.eq.s32.totalorder %s92, 1
      %p466 = por %p464, %p465
      %p468 = scmp.ne.s32.totalorder %s453, %s467
      %p469 = scmp.eq.s32.totalorder %s92, 0
      %p470 = por %p468, %p469
      %s472 = sadd.s32 %s471, 1
      %p475 = scmp.eq.s32.totalorder %s86, 1
      %p476 = scmp.ne.s32.totalorder %s471, %s473
      %p477 = scmp.eq.s32.totalorder %s86, 0
      %p478 = por %p476, %p477
      %p479 = scmp.ne.s32.totalorder %s471, %s473
      %p480 = scmp.eq.s32.totalorder %s91, 1
      %p481 = por %p479, %p480
      %p482 = scmp.ne.s32.totalorder %s473, %s474
      %p483 = scmp.eq.s32.totalorder %s91, 0
      %p484 = por %p482, %p483
      %p485 = scmp.ne.s32.totalorder %s473, %s474
      %p486 = scmp.eq.s32.totalorder %s92, 1
      %p487 = por %p485, %p486
      %p489 = scmp.ne.s32.totalorder %s474, %s488
      %p490 = scmp.eq.s32.totalorder %s92, 0
      %p491 = por %p489, %p490
      %s493 = sadd.s32 %s492, 1
      %p496 = scmp.eq.s32.totalorder %s86, 1
      %p497 = scmp.ne.s32.totalorder %s492, %s494
      %p498 = scmp.eq.s32.totalorder %s86, 0
      %p499 = por %p497, %p498
      %p500 = scmp.ne.s32.totalorder %s492, %s494
      %p501 = scmp.eq.s32.totalorder %s91, 1
      %p502 = por %p500, %p501
      %p503 = scmp.ne.s32.totalorder %s494, %s495
      %p504 = scmp.eq.s32.totalorder %s91, 0
      %p505 = por %p503, %p504
      %p506 = scmp.ne.s32.totalorder %s494, %s495
      %p507 = scmp.eq.s32.totalorder %s92, 1
      %p508 = por %p506, %p507
      %p510 = scmp.ne.s32.totalorder %s495, %s509
      %p511 = scmp.eq.s32.totalorder %s92, 0
      %p512 = por %p510, %p511
      %s514 = sadd.s32 %s513, 1
      %p517 = scmp.eq.s32.totalorder %s86, 1
      %p518 = scmp.ne.s32.totalorder %s513, %s515
      %p519 = scmp.eq.s32.totalorder %s86, 0
      %p520 = por %p518, %p519
      %p521 = scmp.ne.s32.totalorder %s513, %s515
      %p522 = scmp.eq.s32.totalorder %s91, 1
      %p523 = por %p521, %p522
      %p524 = scmp.ne.s32.totalorder %s515, %s516
      %p525 = scmp.eq.s32.totalorder %s91, 0
      %p526 = por %p524, %p525
      %p527 = scmp.ne.s32.totalorder %s515, %s516
      %p528 = scmp.eq.s32.totalorder %s92, 1
      %p529 = por %p527, %p528
      %p531 = scmp.ne.s32.totalorder %s516, %s530
      %p532 = scmp.eq.s32.totalorder %s92, 0
      %p533 = por %p531, %p532
      %s535 = sadd.s32 %s534, 1
      %p538 = scmp.eq.s32.totalorder %s86, 1
      %p539 = scmp.ne.s32.totalorder %s534, %s536
      %p540 = scmp.eq.s32.totalorder %s86, 0
      %p541 = por %p539, %p540
      %p542 = scmp.ne.s32.totalorder %s534, %s536
      %p543 = scmp.eq.s32.totalorder %s91, 1
      %p544 = por %p542, %p543
      %p545 = scmp.ne.s32.totalorder %s536, %s537
      %p546 = scmp.eq.s32.totalorder %s91, 0
      %p547 = por %p545, %p546
      %p548 = scmp.ne.s32.totalorder %s536, %s537
      %p549 = scmp.eq.s32.totalorder %s92, 1
      %p550 = por %p548, %p549
      %p552 = scmp.ne.s32.totalorder %s537, %s551
      %p553 = scmp.eq.s32.totalorder %s92, 0
      %p554 = por %p552, %p553
      %s556 = sadd.s32 %s555, 1
      %p559 = scmp.eq.s32.totalorder %s86, 1
      %p560 = scmp.ne.s32.totalorder %s555, %s557
      %p561 = scmp.eq.s32.totalorder %s86, 0
      %p562 = por %p560, %p561
      %p563 = scmp.ne.s32.totalorder %s555, %s557
      %p564 = scmp.eq.s32.totalorder %s91, 1
      %p565 = por %p563, %p564
      %p566 = scmp.ne.s32.totalorder %s557, %s558
      %p567 = scmp.eq.s32.totalorder %s91, 0
      %p568 = por %p566, %p567
      %p569 = scmp.ne.s32.totalorder %s557, %s558
      %p570 = scmp.eq.s32.totalorder %s92, 1
      %p571 = por %p569, %p570
      %p573 = scmp.ne.s32.totalorder %s558, %s572
      %p574 = scmp.eq.s32.totalorder %s92, 0
      %p575 = por %p573, %p574
      %s577 = sadd.s32 %s576, 1
      %p580 = scmp.eq.s32.totalorder %s86, 1
      %p581 = scmp.ne.s32.totalorder %s576, %s578
      %p582 = scmp.eq.s32.totalorder %s86, 0
      %p583 = por %p581, %p582
      %p584 = scmp.ne.s32.totalorder %s576, %s578
      %p585 = scmp.eq.s32.totalorder %s91, 1
      %p586 = por %p584, %p585
      %p587 = scmp.ne.s32.totalorder %s578, %s579
      %p588 = scmp.eq.s32.totalorder %s91, 0
      %p589 = por %p587, %p588
      %p590 = scmp.ne.s32.totalorder %s578, %s579
      %p591 = scmp.eq.s32.totalorder %s92, 1
      %p592 = por %p590, %p591
      %p594 = scmp.ne.s32.totalorder %s579, %s593
      %p595 = scmp.eq.s32.totalorder %s92, 0
      %p596 = por %p594, %p595
      %s598 = sadd.s32 %s597, 1
      %p601 = scmp.eq.s32.totalorder %s86, 1
      %p602 = scmp.ne.s32.totalorder %s597, %s599
      %p603 = scmp.eq.s32.totalorder %s86, 0
      %p604 = por %p602, %p603
      %p605 = scmp.ne.s32.totalorder %s597, %s599
      %p606 = scmp.eq.s32.totalorder %s91, 1
      %p607 = por %p605, %p606
      %p608 = scmp.ne.s32.totalorder %s599, %s600
      %p609 = scmp.eq.s32.totalorder %s91, 0
      %p610 = por %p608, %p609
      %p611 = scmp.ne.s32.totalorder %s599, %s600
      %p612 = scmp.eq.s32.totalorder %s92, 1
      %p613 = por %p611, %p612
      %p615 = scmp.ne.s32.totalorder %s600, %s614
      %p616 = scmp.eq.s32.totalorder %s92, 0
      %p617 = por %p615, %p616
      %s619 = sadd.s32 %s618, 1
      %p622 = scmp.eq.s32.totalorder %s86, 1
      %p623 = scmp.ne.s32.totalorder %s618, %s620
      %p624 = scmp.eq.s32.totalorder %s86, 0
      %p625 = por %p623, %p624
      %p626 = scmp.ne.s32.totalorder %s618, %s620
      %p627 = scmp.eq.s32.totalorder %s91, 1
      %p628 = por %p626, %p627
      %p629 = scmp.ne.s32.totalorder %s620, %s621
      %p630 = scmp.eq.s32.totalorder %s91, 0
      %p631 = por %p629, %p630
      %p632 = scmp.ne.s32.totalorder %s620, %s621
      %p633 = scmp.eq.s32.totalorder %s92, 1
      %p634 = por %p632, %p633
      %p636 = scmp.ne.s32.totalorder %s621, %s635
      %p637 = scmp.eq.s32.totalorder %s92, 0
      %p638 = por %p636, %p637
      %s640 = sadd.s32 %s639, 1
      %p643 = scmp.eq.s32.totalorder %s86, 1
      %p644 = scmp.ne.s32.totalorder %s639, %s641
      %p645 = scmp.eq.s32.totalorder %s86, 0
      %p646 = por %p644, %p645
      %p647 = scmp.ne.s32.totalorder %s639, %s641
      %p648 = scmp.eq.s32.totalorder %s91, 1
      %p649 = por %p647, %p648
      %p650 = scmp.ne.s32.totalorder %s641, %s642
      %p651 = scmp.eq.s32.totalorder %s91, 0
      %p652 = por %p650, %p651
      %p653 = scmp.ne.s32.totalorder %s641, %s642
      %p654 = scmp.eq.s32.totalorder %s92, 1
      %p655 = por %p653, %p654
      %p657 = scmp.ne.s32.totalorder %s642, %s656
      %p658 = scmp.eq.s32.totalorder %s92, 0
      %p659 = por %p657, %p658
      %s661 = sadd.s32 %s660, 1
      %p664 = scmp.eq.s32.totalorder %s86, 1
      %p665 = scmp.ne.s32.totalorder %s660, %s662
      %p666 = scmp.eq.s32.totalorder %s86, 0
      %p667 = por %p665, %p666
      %p668 = scmp.ne.s32.totalorder %s660, %s662
      %p669 = scmp.eq.s32.totalorder %s91, 1
      %p670 = por %p668, %p669
      %p671 = scmp.ne.s32.totalorder %s662, %s663
      %p672 = scmp.eq.s32.totalorder %s91, 0
      %p673 = por %p671, %p672
      %p674 = scmp.ne.s32.totalorder %s662, %s663
      %p675 = scmp.eq.s32.totalorder %s92, 1
      %p676 = por %p674, %p675
      %p678 = scmp.ne.s32.totalorder %s663, %s677
      %p679 = scmp.eq.s32.totalorder %s92, 0
      %p680 = por %p678, %p679
      %s682 = sadd.s32 %s681, 1
      %p685 = scmp.eq.s32.totalorder %s86, 1
      %p686 = scmp.ne.s32.totalorder %s681, %s683
      %p687 = scmp.eq.s32.totalorder %s86, 0
      %p688 = por %p686, %p687
      %p689 = scmp.ne.s32.totalorder %s681, %s683
      %p690 = scmp.eq.s32.totalorder %s91, 1
      %p691 = por %p689, %p690
      %p692 = scmp.ne.s32.totalorder %s683, %s684
      %p693 = scmp.eq.s32.totalorder %s91, 0
      %p694 = por %p692, %p693
      %p695 = scmp.ne.s32.totalorder %s683, %s684
      %p696 = scmp.eq.s32.totalorder %s92, 1
      %p697 = por %p695, %p696
      %p699 = scmp.ne.s32.totalorder %s684, %s698
      %p700 = scmp.eq.s32.totalorder %s92, 0
      %p701 = por %p699, %p700
      %s703 = sadd.s32 %s702, 1
      %p706 = scmp.eq.s32.totalorder %s86, 1
      %p707 = scmp.ne.s32.totalorder %s702, %s704
      %p708 = scmp.eq.s32.totalorder %s86, 0
      %p709 = por %p707, %p708
      %p710 = scmp.ne.s32.totalorder %s702, %s704
      %p711 = scmp.eq.s32.totalorder %s91, 1
      %p712 = por %p710, %p711
      %p713 = scmp.ne.s32.totalorder %s704, %s705
      %p714 = scmp.eq.s32.totalorder %s91, 0
      %p715 = por %p713, %p714
      %p716 = scmp.ne.s32.totalorder %s704, %s705
      %p717 = scmp.eq.s32.totalorder %s92, 1
      %p718 = por %p716, %p717
      %p720 = scmp.ne.s32.totalorder %s705, %s719
      %p721 = scmp.eq.s32.totalorder %s92, 0
      %p722 = por %p720, %p721
      %s724 = sadd.s32 %s723, 1
      %p727 = scmp.eq.s32.totalorder %s86, 1
      %p728 = scmp.ne.s32.totalorder %s723, %s725
      %p729 = scmp.eq.s32.totalorder %s86, 0
      %p730 = por %p728, %p729
      %p731 = scmp.ne.s32.totalorder %s723, %s725
      %p732 = scmp.eq.s32.totalorder %s91, 1
      %p733 = por %p731, %p732
      %p734 = scmp.ne.s32.totalorder %s725, %s726
      %p735 = scmp.eq.s32.totalorder %s91, 0
      %p736 = por %p734, %p735
      %p737 = scmp.ne.s32.totalorder %s725, %s726
      %p738 = scmp.eq.s32.totalorder %s92, 1
      %p739 = por %p737, %p738
      %p741 = scmp.ne.s32.totalorder %s726, %s740
      %p742 = scmp.eq.s32.totalorder %s92, 0
      %p743 = por %p741, %p742
      %s745 = sadd.s32 %s744, 1
      %p748 = scmp.eq.s32.totalorder %s86, 1
      %p749 = scmp.ne.s32.totalorder %s744, %s746
      %p750 = scmp.eq.s32.totalorder %s86, 0
      %p751 = por %p749, %p750
      %p752 = scmp.ne.s32.totalorder %s744, %s746
      %p753 = scmp.eq.s32.totalorder %s91, 1
      %p754 = por %p752, %p753
      %p755 = scmp.ne.s32.totalorder %s746, %s747
      %p756 = scmp.eq.s32.totalorder %s91, 0
      %p757 = por %p755, %p756
      %p758 = scmp.ne.s32.totalorder %s746, %s747
      %p759 = scmp.eq.s32.totalorder %s92, 1
      %p760 = por %p758, %p759
      %p762 = scmp.ne.s32.totalorder %s747, %s761
      %p763 = scmp.eq.s32.totalorder %s92, 0
      %p764 = por %p762, %p763
      %s766 = sadd.s32 %s765, 1
      %p769 = scmp.eq.s32.totalorder %s86, 1
      %p770 = scmp.ne.s32.totalorder %s765, %s767
      %p771 = scmp.eq.s32.totalorder %s86, 0
      %p772 = por %p770, %p771
      %p773 = scmp.ne.s32.totalorder %s765, %s767
      %p774 = scmp.eq.s32.totalorder %s91, 1
      %p775 = por %p773, %p774
      %p776 = scmp.ne.s32.totalorder %s767, %s768
      %p777 = scmp.eq.s32.totalorder %s91, 0
      %p778 = por %p776, %p777
      %p779 = scmp.ne.s32.totalorder %s767, %s768
      %p780 = scmp.eq.s32.totalorder %s92, 1
      %p781 = por %p779, %p780
      %p783 = scmp.ne.s32.totalorder %s768, %s782
      %p784 = scmp.eq.s32.totalorder %s92, 0
      %p785 = por %p783, %p784
      %s786 = ssub.s32 %s86, %s93
      %p787 = scmp.eq.s32.totalorder %s786, 0
      %s789 = sadd.s32 %s788, 1
      %s790 = scalar_select %p787, %s788, %s789
      %p793 = pneg %p787
      %p794 = scmp.eq.s32.totalorder %s86, 1
      %p795 = por %p793, %p794
      %p796 = scmp.ne.s32.totalorder %s788, %s791
      %p797 = scmp.eq.s32.totalorder %s86, 0
      %p798 = por %p796, %p797
      %p799 = scmp.ne.s32.totalorder %s788, %s791
      %p800 = scmp.eq.s32.totalorder %s91, 1
      %p801 = por %p799, %p800
      %p802 = scmp.ne.s32.totalorder %s791, %s792
      %p803 = scmp.eq.s32.totalorder %s91, 0
      %p804 = por %p802, %p803
      %p805 = scmp.ne.s32.totalorder %s791, %s792
      %p806 = scmp.eq.s32.totalorder %s92, 1
      %p807 = por %p805, %p806
      %p809 = scmp.ne.s32.totalorder %s792, %s808
      %p810 = scmp.eq.s32.totalorder %s92, 0
      %p811 = por %p809, %p810
      %s812 = ssub.s32 %s86, %s93
      %p813 = scmp.eq.s32.totalorder %s812, 0
      %s815 = sadd.s32 %s814, 1
      %s816 = scalar_select %p813, %s814, %s815
      %p819 = pneg %p813
      %p820 = scmp.eq.s32.totalorder %s86, 1
      %p821 = por %p819, %p820
      %p822 = scmp.ne.s32.totalorder %s814, %s817
      %p823 = scmp.eq.s32.totalorder %s86, 0
      %p824 = por %p822, %p823
      %p825 = scmp.ne.s32.totalorder %s814, %s817
      %p826 = scmp.eq.s32.totalorder %s91, 1
      %p827 = por %p825, %p826
      %p828 = scmp.ne.s32.totalorder %s817, %s818
      %p829 = scmp.eq.s32.totalorder %s91, 0
      %p830 = por %p828, %p829
      %p831 = scmp.ne.s32.totalorder %s817, %s818
      %p832 = scmp.eq.s32.totalorder %s92, 1
      %p833 = por %p831, %p832
      %p835 = scmp.ne.s32.totalorder %s818, %s834
      %p836 = scmp.eq.s32.totalorder %s92, 0
      %p837 = por %p835, %p836
      %s838 = ssub.s32 %s86, %s93
      %p839 = scmp.eq.s32.totalorder %s838, 0
      %s841 = sadd.s32 %s840, 1
      %s842 = scalar_select %p839, %s840, %s841
      %p845 = pneg %p839
      %p846 = scmp.eq.s32.totalorder %s86, 1
      %p847 = por %p845, %p846
      %p848 = scmp.ne.s32.totalorder %s840, %s843
      %p849 = scmp.eq.s32.totalorder %s86, 0
      %p850 = por %p848, %p849
      %p851 = scmp.ne.s32.totalorder %s840, %s843
      %p852 = scmp.eq.s32.totalorder %s91, 1
      %p853 = por %p851, %p852
      %p854 = scmp.ne.s32.totalorder %s843, %s844
      %p855 = scmp.eq.s32.totalorder %s91, 0
      %p856 = por %p854, %p855
      %p857 = scmp.ne.s32.totalorder %s843, %s844
      %p858 = scmp.eq.s32.totalorder %s92, 1
      %p859 = por %p857, %p858
      %p861 = scmp.ne.s32.totalorder %s844, %s860
      %p862 = scmp.eq.s32.totalorder %s92, 0
      %p863 = por %p861, %p862
      %s864 = ssub.s32 %s86, %s93
      %p865 = scmp.eq.s32.totalorder %s864, 0
      %s867 = sadd.s32 %s866, 1
      %s868 = scalar_select %p865, %s866, %s867
      %p871 = pneg %p865
      %p872 = scmp.eq.s32.totalorder %s86, 1
      %p873 = por %p871, %p872
      %p874 = scmp.ne.s32.totalorder %s866, %s869
      %p875 = scmp.eq.s32.totalorder %s86, 0
      %p876 = por %p874, %p875
      %p877 = scmp.ne.s32.totalorder %s866, %s869
      %p878 = scmp.eq.s32.totalorder %s91, 1
      %p879 = por %p877, %p878
      %p880 = scmp.ne.s32.totalorder %s869, %s870
      %p881 = scmp.eq.s32.totalorder %s91, 0
      %p882 = por %p880, %p881
      %p883 = scmp.ne.s32.totalorder %s869, %s870
      %p884 = scmp.eq.s32.totalorder %s92, 1
      %p885 = por %p883, %p884
      %p887 = scmp.ne.s32.totalorder %s870, %s886
      %p888 = scmp.eq.s32.totalorder %s92, 0
      %p889 = por %p887, %p888
      %s890 = ssub.s32 %s86, %s93
      %p891 = scmp.eq.s32.totalorder %s890, 0
      %s893 = sadd.s32 %s892, 1
      %s894 = scalar_select %p891, %s892, %s893
      %p897 = pneg %p891
      %p898 = scmp.eq.s32.totalorder %s86, 1
      %p899 = por %p897, %p898
      %p900 = scmp.ne.s32.totalorder %s892, %s895
      %p901 = scmp.eq.s32.totalorder %s86, 0
      %p902 = por %p900, %p901
      %p903 = scmp.ne.s32.totalorder %s892, %s895
      %p904 = scmp.eq.s32.totalorder %s91, 1
      %p905 = por %p903, %p904
      %p906 = scmp.ne.s32.totalorder %s895, %s896
      %p907 = scmp.eq.s32.totalorder %s91, 0
      %p908 = por %p906, %p907
      %p909 = scmp.ne.s32.totalorder %s895, %s896
      %p910 = scmp.eq.s32.totalorder %s92, 1
      %p911 = por %p909, %p910
      %p913 = scmp.ne.s32.totalorder %s896, %s912
      %p914 = scmp.eq.s32.totalorder %s92, 0
      %p915 = por %p913, %p914
      %p916 = scmp.le.s32.totalorder 1, %s86
      %p917 = scmp.lt.s32.totalorder %s86, 3
      %p918 = pnand %p916, %p917
      %p919 = pneg %p918
      // Predicated region
      $region9: #{_lambda_.1} parent=5 // pred_check
        _
      $region10: #{_lambda_.1} parent=5 // pred_check_branch
        %921 = sbr.rel (%p918) target = $region12
      $region11: #{_lambda_.1} parent=5 // pred_region
        %s922 = ssub.s32 %s86, 1
        // Predicated region
        $region13: #{_lambda_.1} parent=11 // pred_check
          %p923 = pneg %p211
        $region14: #{_lambda_.1} parent=11 // pred_check_branch
          %925 = sbr.rel (%p923) target = $region16
        $region15: #{_lambda_.1} parent=11 // pred_region
          _
        $region16: #{_lambda_.1} parent=11 // pred_fallthru
          _
        // Predicated region
        $region17: #{_lambda_.1} parent=11 // pred_check
          %p926 = pneg %p232
        $region18: #{_lambda_.1} parent=11 // pred_check_branch
          %928 = sbr.rel (%p926) target = $region20
        $region19: #{_lambda_.1} parent=11 // pred_region
          _
        $region20: #{_lambda_.1} parent=11 // pred_fallthru
          _
        // Predicated region
        $region21: #{_lambda_.1} parent=11 // pred_check
          %p929 = pneg %p253
        $region22: #{_lambda_.1} parent=11 // pred_check_branch
          %931 = sbr.rel (%p929) target = $region24
        $region23: #{_lambda_.1} parent=11 // pred_region
          _
        $region24: #{_lambda_.1} parent=11 // pred_fallthru
          _
        // Predicated region
        $region25: #{_lambda_.1} parent=11 // pred_check
          %p932 = pneg %p274
        $region26: #{_lambda_.1} parent=11 // pred_check_branch
          %934 = sbr.rel (%p932) target = $region28
        $region27: #{_lambda_.1} parent=11 // pred_region
          _
        $region28: #{_lambda_.1} parent=11 // pred_fallthru
          _
        // Predicated region
        $region29: #{_lambda_.1} parent=11 // pred_check
          %p935 = pneg %p295
        $region30: #{_lambda_.1} parent=11 // pred_check_branch
          %937 = sbr.rel (%p935) target = $region32
        $region31: #{_lambda_.1} parent=11 // pred_region
          _
        $region32: #{_lambda_.1} parent=11 // pred_fallthru
          _
        // Predicated region
        $region33: #{_lambda_.1} parent=11 // pred_check
          %p938 = pneg %p316
        $region34: #{_lambda_.1} parent=11 // pred_check_branch
          %940 = sbr.rel (%p938) target = $region36
        $region35: #{_lambda_.1} parent=11 // pred_region
          _
        $region36: #{_lambda_.1} parent=11 // pred_fallthru
          _
        // Predicated region
        $region37: #{_lambda_.1} parent=11 // pred_check
          %p941 = pneg %p337
        $region38: #{_lambda_.1} parent=11 // pred_check_branch
          %943 = sbr.rel (%p941) target = $region40
        $region39: #{_lambda_.1} parent=11 // pred_region
          _
        $region40: #{_lambda_.1} parent=11 // pred_fallthru
          _
        // Predicated region
        $region41: #{_lambda_.1} parent=11 // pred_check
          %p944 = pneg %p358
        $region42: #{_lambda_.1} parent=11 // pred_check_branch
          %946 = sbr.rel (%p944) target = $region44
        $region43: #{_lambda_.1} parent=11 // pred_region
          _
        $region44: #{_lambda_.1} parent=11 // pred_fallthru
          _
        // Predicated region
        $region45: #{_lambda_.1} parent=11 // pred_check
          %p947 = pneg %p379
        $region46: #{_lambda_.1} parent=11 // pred_check_branch
          %949 = sbr.rel (%p947) target = $region48
        $region47: #{_lambda_.1} parent=11 // pred_region
          _
        $region48: #{_lambda_.1} parent=11 // pred_fallthru
          _
        // Predicated region
        $region49: #{_lambda_.1} parent=11 // pred_check
          %p950 = pneg %p400
        $region50: #{_lambda_.1} parent=11 // pred_check_branch
          %952 = sbr.rel (%p950) target = $region52
        $region51: #{_lambda_.1} parent=11 // pred_region
          _
        $region52: #{_lambda_.1} parent=11 // pred_fallthru
          _
        // Predicated region
        $region53: #{_lambda_.1} parent=11 // pred_check
          %p953 = pneg %p421
        $region54: #{_lambda_.1} parent=11 // pred_check_branch
          %955 = sbr.rel (%p953) target = $region56
        $region55: #{_lambda_.1} parent=11 // pred_region
          _
        $region56: #{_lambda_.1} parent=11 // pred_fallthru
          _
        // Predicated region
        $region57: #{_lambda_.1} parent=11 // pred_check
          %p956 = pneg %p442
        $region58: #{_lambda_.1} parent=11 // pred_check_branch
          %958 = sbr.rel (%p956) target = $region60
        $region59: #{_lambda_.1} parent=11 // pred_region
          _
        $region60: #{_lambda_.1} parent=11 // pred_fallthru
          _
        // Predicated region
        $region61: #{_lambda_.1} parent=11 // pred_check
          %p959 = pneg %p463
        $region62: #{_lambda_.1} parent=11 // pred_check_branch
          %961 = sbr.rel (%p959) target = $region64
        $region63: #{_lambda_.1} parent=11 // pred_region
          _
        $region64: #{_lambda_.1} parent=11 // pred_fallthru
          _
        // Predicated region
        $region65: #{_lambda_.1} parent=11 // pred_check
          %p962 = pneg %p484
        $region66: #{_lambda_.1} parent=11 // pred_check_branch
          %964 = sbr.rel (%p962) target = $region68
        $region67: #{_lambda_.1} parent=11 // pred_region
          _
        $region68: #{_lambda_.1} parent=11 // pred_fallthru
          _
        // Predicated region
        $region69: #{_lambda_.1} parent=11 // pred_check
          %p965 = pneg %p505
        $region70: #{_lambda_.1} parent=11 // pred_check_branch
          %967 = sbr.rel (%p965) target = $region72
        $region71: #{_lambda_.1} parent=11 // pred_region
          _
        $region72: #{_lambda_.1} parent=11 // pred_fallthru
          _
        // Predicated region
        $region73: #{_lambda_.1} parent=11 // pred_check
          %p968 = pneg %p526
        $region74: #{_lambda_.1} parent=11 // pred_check_branch
          %970 = sbr.rel (%p968) target = $region76
        $region75: #{_lambda_.1} parent=11 // pred_region
          _
        $region76: #{_lambda_.1} parent=11 // pred_fallthru
          _
        // Predicated region
        $region77: #{_lambda_.1} parent=11 // pred_check
          %p971 = pneg %p547
        $region78: #{_lambda_.1} parent=11 // pred_check_branch
          %973 = sbr.rel (%p971) target = $region80
        $region79: #{_lambda_.1} parent=11 // pred_region
          _
        $region80: #{_lambda_.1} parent=11 // pred_fallthru
          _
        // Predicated region
        $region81: #{_lambda_.1} parent=11 // pred_check
          %p974 = pneg %p568
        $region82: #{_lambda_.1} parent=11 // pred_check_branch
          %976 = sbr.rel (%p974) target = $region84
        $region83: #{_lambda_.1} parent=11 // pred_region
          _
        $region84: #{_lambda_.1} parent=11 // pred_fallthru
          _
        // Predicated region
        $region85: #{_lambda_.1} parent=11 // pred_check
          %p977 = pneg %p589
        $region86: #{_lambda_.1} parent=11 // pred_check_branch
          %979 = sbr.rel (%p977) target = $region88
        $region87: #{_lambda_.1} parent=11 // pred_region
          _
        $region88: #{_lambda_.1} parent=11 // pred_fallthru
          _
        // Predicated region
        $region89: #{_lambda_.1} parent=11 // pred_check
          %p980 = pneg %p610
        $region90: #{_lambda_.1} parent=11 // pred_check_branch
          %982 = sbr.rel (%p980) target = $region92
        $region91: #{_lambda_.1} parent=11 // pred_region
          %s984 = ssub.s32 16, 16
          %985 = vsyncadd [#allocation3], %s984
          %s987 = sshll.u32 [#allocation2], 4
          %s988 = int_to_ptr.vmem [resolvable:$true] %s987
          %990 = dma.hbm_to_vmem [thread:$0]  %s47, 16, %s988, [#allocation3]
        $region92: #{_lambda_.1} parent=11 // pred_fallthru
          _
        // Predicated region
        $region93: #{_lambda_.1} parent=11 // pred_check
          %p991 = pneg %p631
        $region94: #{_lambda_.1} parent=11 // pred_check_branch
          %993 = sbr.rel (%p991) target = $region96
        $region95: #{_lambda_.1} parent=11 // pred_region
          _
        $region96: #{_lambda_.1} parent=11 // pred_fallthru
          _
        // Predicated region
        $region97: #{_lambda_.1} parent=11 // pred_check
          %p994 = pneg %p652
        $region98: #{_lambda_.1} parent=11 // pred_check_branch
          %996 = sbr.rel (%p994) target = $region100
        $region99: #{_lambda_.1} parent=11 // pred_region
          %s998 = ssub.s32 16, 16
          %999 = vsyncadd [#allocation6], %s998
          %s1001 = sshll.u32 [#allocation5], 4
          %s1002 = int_to_ptr.vmem [resolvable:$true] %s1001
          %1004 = dma.hbm_to_vmem [thread:$0]  %s51, 16, %s1002, [#allocation6]
        $region100: #{_lambda_.1} parent=11 // pred_fallthru
          _
        // Predicated region
        $region101: #{_lambda_.1} parent=11 // pred_check
          %p1005 = pneg %p673
        $region102: #{_lambda_.1} parent=11 // pred_check_branch
          %1007 = sbr.rel (%p1005) target = $region104
        $region103: #{_lambda_.1} parent=11 // pred_region
          _
        $region104: #{_lambda_.1} parent=11 // pred_fallthru
          _
        // Predicated region
        $region105: #{_lambda_.1} parent=11 // pred_check
          %p1008 = pneg %p694
        $region106: #{_lambda_.1} parent=11 // pred_check_branch
          %1010 = sbr.rel (%p1008) target = $region108
        $region107: #{_lambda_.1} parent=11 // pred_region
          %s1012 = ssub.s32 16, 16
          %1013 = vsyncadd [#allocation6], %s1012
          %s1015 = sshll.u32 [#allocation7], 4
          %s1016 = int_to_ptr.vmem [resolvable:$true] %s1015
          %1018 = dma.hbm_to_vmem [thread:$0]  %s55, 16, %s1016, [#allocation6]
        $region108: #{_lambda_.1} parent=11 // pred_fallthru
          _
        // Predicated region
        $region109: #{_lambda_.1} parent=11 // pred_check
          %p1019 = pneg %p715
        $region110: #{_lambda_.1} parent=11 // pred_check_branch
          %1021 = sbr.rel (%p1019) target = $region112
        $region111: #{_lambda_.1} parent=11 // pred_region
          _
        $region112: #{_lambda_.1} parent=11 // pred_fallthru
          _
        // Predicated region
        $region113: #{_lambda_.1} parent=11 // pred_check
          %p1022 = pneg %p736
        $region114: #{_lambda_.1} parent=11 // pred_check_branch
          %1024 = sbr.rel (%p1022) target = $region116
        $region115: #{_lambda_.1} parent=11 // pred_region
          %s1026 = ssub.s32 16, 16
          %1027 = vsyncadd [#allocation9], %s1026
          %s1029 = sshll.u32 [#allocation8], 4
          %s1030 = int_to_ptr.vmem [resolvable:$true] %s1029
          %1032 = dma.hbm_to_vmem [thread:$0]  %s59, 16, %s1030, [#allocation9]
        $region116: #{_lambda_.1} parent=11 // pred_fallthru
          _
        // Predicated region
        $region117: #{_lambda_.1} parent=11 // pred_check
          %p1033 = pneg %p757
        $region118: #{_lambda_.1} parent=11 // pred_check_branch
          %1035 = sbr.rel (%p1033) target = $region120
        $region119: #{_lambda_.1} parent=11 // pred_region
          _
        $region120: #{_lambda_.1} parent=11 // pred_fallthru
          _
        // Predicated region
        $region121: #{_lambda_.1} parent=11 // pred_check
          %p1036 = pneg %p778
        $region122: #{_lambda_.1} parent=11 // pred_check_branch
          %1038 = sbr.rel (%p1036) target = $region124
        $region123: #{_lambda_.1} parent=11 // pred_region
          %s1040 = ssub.s32 16, 16
          %1041 = vsyncadd [#allocation9], %s1040
          %s1043 = sshll.u32 [#allocation10], 4
          %s1044 = int_to_ptr.vmem [resolvable:$true] %s1043
          %1046 = dma.hbm_to_vmem [thread:$0]  %s63, 16, %s1044, [#allocation9]
        $region124: #{_lambda_.1} parent=11 // pred_fallthru
          _
      $region12: #{_lambda_.1} parent=5 // pred_fallthru
        _
      %p1047 = scmp.lt.s32.totalorder %s86, 2
      // Predicated region
      $region125: #{_lambda_.1} parent=5 // pred_check
        %p1048 = pneg %p1047
      $region126: #{_lambda_.1} parent=5 // pred_check_branch
        %1050 = sbr.rel (%p1048) target = $region128
      $region127: #{_lambda_.1} parent=5 // pred_region
        // Predicated region
        $region129: #{_lambda_.1} parent=127 // pred_check
          %p1051 = pneg %p106
        $region130: #{_lambda_.1} parent=127 // pred_check_branch
          %1053 = sbr.rel (%p1051) target = $region132
        $region131: #{_lambda_.1} parent=127 // pred_region
          %p1054 = scmp.lt.s32.totalorder %s86, 1
          %s1055 = scalar_select %p1054, %s86, 1
          %s1056 = smul.addr %s1055, 8
          %s1057 = scalar_lea.vmem %s1, %s1056
        $region132: #{_lambda_.1} parent=127 // pred_fallthru
          _
        // Predicated region
        $region133: #{_lambda_.1} parent=127 // pred_check
          %p1058 = pneg %p132
        $region134: #{_lambda_.1} parent=127 // pred_check_branch
          %1060 = sbr.rel (%p1058) target = $region136
        $region135: #{_lambda_.1} parent=127 // pred_region
          %p1061 = scmp.lt.s32.totalorder %s86, 1
          %s1062 = scalar_select %p1061, %s86, 1
          %s1063 = smul.addr %s1062, 8
          %s1064 = scalar_lea.vmem %s3, %s1063
        $region136: #{_lambda_.1} parent=127 // pred_fallthru
          _
        // Predicated region
        $region137: #{_lambda_.1} parent=127 // pred_check
          %p1065 = pneg %p158
        $region138: #{_lambda_.1} parent=127 // pred_check_branch
          %1067 = sbr.rel (%p1065) target = $region140
        $region139: #{_lambda_.1} parent=127 // pred_region
          %p1068 = scmp.lt.s32.totalorder %s86, 1
          %s1069 = scalar_select %p1068, %s86, 1
          %s1070 = scalar_lea.vmem %s5, %s1069
        $region140: #{_lambda_.1} parent=127 // pred_fallthru
          _
        // Predicated region
        $region141: #{_lambda_.1} parent=127 // pred_check
          %p1071 = pneg %p184
        $region142: #{_lambda_.1} parent=127 // pred_check_branch
          %1073 = sbr.rel (%p1071) target = $region144
        $region143: #{_lambda_.1} parent=127 // pred_region
          %p1074 = scmp.lt.s32.totalorder %s86, 1
          %s1075 = scalar_select %p1074, %s86, 1
          %s1076 = smul.addr %s1075, 4
          %s1077 = scalar_lea.vmem %s7, %s1076
        $region144: #{_lambda_.1} parent=127 // pred_fallthru
          _
      $region128: #{_lambda_.1} parent=5 // pred_fallthru
        _
      %p1078 = scmp.le.s32.totalorder 1, %s86
      %p1079 = scmp.lt.s32.totalorder %s86, 3
      %p1080 = pnand %p1078, %p1079
      %p1081 = pneg %p1080
      // Predicated region
      $region145: #{_lambda_.1} parent=5 // pred_check
        _
      $region146: #{_lambda_.1} parent=5 // pred_check_branch
        %1083 = sbr.rel (%p1080) target = $region148
      $region147: #{_lambda_.1} parent=5 // pred_region
        %s1084 = ssub.s32 %s86, 1
        // Predicated region
        $region149: #{_lambda_.1} parent=147 // pred_check
          %p1085 = pneg %p610
        $region150: #{_lambda_.1} parent=147 // pred_check_branch
          %1087 = sbr.rel (%p1085) target = $region152
        $region151: #{_lambda_.1} parent=147 // pred_region
          %1088 = dma.done [#allocation3], 16
        $region152: #{_lambda_.1} parent=147 // pred_fallthru
          _
        // Predicated region
        $region153: #{_lambda_.1} parent=147 // pred_check
          %p1089 = pneg %p652
        $region154: #{_lambda_.1} parent=147 // pred_check_branch
          %1091 = sbr.rel (%p1089) target = $region156
        $region155: #{_lambda_.1} parent=147 // pred_region
          %1092 = dma.done [#allocation6], 16
        $region156: #{_lambda_.1} parent=147 // pred_fallthru
          _
        // Predicated region
        $region157: #{_lambda_.1} parent=147 // pred_check
          %p1093 = pneg %p694
        $region158: #{_lambda_.1} parent=147 // pred_check_branch
          %1095 = sbr.rel (%p1093) target = $region160
        $region159: #{_lambda_.1} parent=147 // pred_region
          %1096 = dma.done [#allocation6], 16
        $region160: #{_lambda_.1} parent=147 // pred_fallthru
          _
        // Predicated region
        $region161: #{_lambda_.1} parent=147 // pred_check
          %p1097 = pneg %p736
        $region162: #{_lambda_.1} parent=147 // pred_check_branch
          %1099 = sbr.rel (%p1097) target = $region164
        $region163: #{_lambda_.1} parent=147 // pred_region
          %1100 = dma.done [#allocation9], 16
        $region164: #{_lambda_.1} parent=147 // pred_fallthru
          _
        // Predicated region
        $region165: #{_lambda_.1} parent=147 // pred_check
          %p1101 = pneg %p778
        $region166: #{_lambda_.1} parent=147 // pred_check_branch
          %1103 = sbr.rel (%p1101) target = $region168
        $region167: #{_lambda_.1} parent=147 // pred_region
          %1104 = dma.done [#allocation9], 16
        $region168: #{_lambda_.1} parent=147 // pred_fallthru
          _
        %p1105 = scmp.lt.s32.totalorder %s91, 1
        %s1106 = scalar_select %p1105, %s91, 1
        %s1107 = smul.addr %s1106, 8
        %s1108 = scalar_lea.vmem %s1, %s1107
        %p1109 = pneg %p112
        %p1110 = pneg %p109
        %p1111 = scmp.lt.s32.totalorder %s91, 1
        %s1112 = scalar_select %p1111, %s91, 1
        %s1113 = smul.addr %s1112, 8
        %s1114 = scalar_lea.vmem %s3, %s1113
        %p1115 = pneg %p138
        %p1116 = pneg %p135
        %p1117 = scmp.lt.s32.totalorder %s91, 1
        %s1118 = scalar_select %p1117, %s91, 1
        %s1119 = scalar_lea.vmem %s5, %s1118
        %p1120 = pneg %p164
        %p1121 = pneg %p161
        %p1122 = scmp.lt.s32.totalorder %s91, 1
        %s1123 = scalar_select %p1122, %s91, 1
        %s1124 = smul.addr %s1123, 4
        %s1125 = scalar_lea.vmem %s7, %s1124
        %p1126 = pneg %p190
        %p1127 = pneg %p187
        %p1128 = pneg %p211
        %p1129 = pneg %p208
        %p1130 = pneg %p232
        %p1131 = pneg %p229
        %p1132 = pneg %p253
        %p1133 = pneg %p250
        %p1134 = pneg %p274
        %p1135 = pneg %p271
        %p1136 = pneg %p295
        %p1137 = pneg %p292
        %p1138 = pneg %p316
        %p1139 = pneg %p313
        %p1140 = pneg %p337
        %p1141 = pneg %p334
        %p1142 = pneg %p358
        %p1143 = pneg %p355
        %p1144 = pneg %p379
        %p1145 = pneg %p376
        %p1146 = pneg %p400
        %p1147 = pneg %p397
        %p1148 = pneg %p421
        %p1149 = pneg %p418
        %p1150 = pneg %p442
        %p1151 = pneg %p439
        %p1152 = pneg %p463
        %p1153 = pneg %p460
        %p1154 = pneg %p484
        %p1155 = pneg %p481
        %p1156 = pneg %p505
        %p1157 = pneg %p502
        %p1158 = pneg %p526
        %p1159 = pneg %p523
        %p1160 = pneg %p547
        %p1161 = pneg %p544
        %p1162 = pneg %p568
        %p1163 = pneg %p565
        %p1164 = pneg %p589
        %p1165 = pneg %p586
        %p1166 = pneg %p610
        %p1167 = pneg %p607
        %p1168 = pneg %p631
        %p1169 = pneg %p628
        %p1170 = pneg %p652
        %p1171 = pneg %p649
        %p1172 = pneg %p673
        %p1173 = pneg %p670
        %p1174 = pneg %p694
        %p1175 = pneg %p691
        %p1176 = pneg %p715
        %p1177 = pneg %p712
        %p1178 = pneg %p736
        %p1179 = pneg %p733
        %p1180 = pneg %p757
        %p1181 = pneg %p754
        %p1182 = pneg %p778
        %p1183 = pneg %p775
        %p1184 = pneg %p804
        %p1185 = pneg %p801
        %p1186 = scmp.lt.s32.totalorder %s91, 1
        %s1187 = scalar_select %p1186, %s91, 1
        %s1188 = smul.addr %s1187, 8
        %s1189 = scalar_lea.vmem %s65, %s1188
        %p1190 = pneg %p830
        %p1191 = pneg %p827
        %p1192 = scmp.lt.s32.totalorder %s91, 1
        %s1193 = scalar_select %p1192, %s91, 1
        %s1194 = smul.addr %s1193, 8
        %s1195 = scalar_lea.vmem %s67, %s1194
        %p1196 = pneg %p856
        %p1197 = pneg %p853
        %p1198 = scmp.lt.s32.totalorder %s91, 1
        %s1199 = scalar_select %p1198, %s91, 1
        %s1200 = smul.addr %s1199, 8
        %s1201 = scalar_lea.vmem %s69, %s1200
        %p1202 = pneg %p882
        %p1203 = pneg %p879
        %s1204 = sand.u32 %s869, 1
        %s1205 = scalar_lea.sflag [#allocation4], %s1204
        %s1206 = sand.u32 %s869, 1
        %s1207 = smul.addr %s1206, 4
        %s1208 = scalar_lea.vmem [#allocation11], %s1207
        %p1209 = pneg %p908
        %p1210 = pneg %p905
        %p1211 = scmp.lt.s32.totalorder %s91, 1
        %s1212 = scalar_select %p1211, %s91, 1
        %s1213 = smul.addr %s1212, 4
        %s1214 = smul.addr %s1213, 8
        %s1215 = scalar_lea.vmem %s73, %s1214
        %p1216 = scmp.lt.s32.totalorder %s91, 1
        %s1217 = scalar_select %p1216, %s91, 1
        %s1218 = smul.addr %s1217, 8
        %s1219 = scalar_lea.vmem %s1, %s1218
        %p1220 = scmp.lt.s32.totalorder %s91, 1
        %s1221 = scalar_select %p1220, %s91, 1
        %s1222 = smul.addr %s1221, 8
        %s1223 = scalar_lea.vmem %s3, %s1222
        %p1224 = scmp.lt.s32.totalorder %s91, 1
        %s1225 = scalar_select %p1224, %s91, 1
        %s1226 = scalar_lea.vmem %s5, %s1225
        %p1227 = scmp.lt.s32.totalorder %s91, 1
        %s1228 = scalar_select %p1227, %s91, 1
        %s1229 = smul.addr %s1228, 4
        %s1230 = scalar_lea.vmem %s7, %s1229
        %p1231 = scmp.lt.s32.totalorder %s91, 1
        %s1232 = scalar_select %p1231, %s91, 1
        %s1233 = smul.addr %s1232, 8
        %s1234 = scalar_lea.vmem %s65, %s1233
        %p1235 = scmp.lt.s32.totalorder %s91, 1
        %s1236 = scalar_select %p1235, %s91, 1
        %s1237 = smul.addr %s1236, 8
        %s1238 = scalar_lea.vmem %s67, %s1237
        %p1239 = scmp.lt.s32.totalorder %s91, 1
        %s1240 = scalar_select %p1239, %s91, 1
        %s1241 = smul.addr %s1240, 8
        %s1242 = scalar_lea.vmem %s69, %s1241
        %p1243 = scmp.lt.s32.totalorder %s91, 1
        %s1244 = scalar_select %p1243, %s91, 1
        %s1245 = smul.addr %s1244, 4
        %s1246 = smul.addr %s1245, 8
        %s1247 = scalar_lea.vmem %s73, %s1246
        %v1248 = vld [vmem:[%s1219] sm:$0x1f]
        %v1249 = vld [vmem:[%s1223] sm:$0x1f]
        %v1250 = vld [vmem:[%s1226] sm:$0x1]
        %v1251 = vld [vmem:[%s9] sm:$0xff]
        %v1252 = vld [vmem:[%s9 + $0x8] sm:$0xff]
        %v1253 = vld [vmem:[%s9 + $0x10] sm:$0xff]
        %v1254 = vld [vmem:[%s9 + $0x18] sm:$0xff]
        %v1255 = vld [vmem:[%s11] sm:$0x1]
        %v1257 = vlaneseq
        %v1258 = vshrl.u32 %v1257, 7
        %v1259 = vsub.s32 0, %v1258
        %v1260 = vrot.slane %v1255, %v1259
        %vm1262 = vcmask 261120
        %v1264 = vsel %vm1262, %v1248, 0
        %1266 = vmatprep.subr.mxu0 0.0
        %1267 = vmatpush1.msra.mxu0 0.0
        %1268 = vmatprep.subr.mxu0 0.0
        %1269 = vmatpush1.msra.mxu0 0.0
        %1270 = vmatprep.subr.mxu0 0.0
        %1271 = vmatpush1.msra.mxu0 0.0
        %1272 = vmatprep.subr.mxu0 0.0
        %1273 = vmatpush1.msra.mxu0 0.0
        %1274 = vmatprep.subr.mxu0 0.0
        %1275 = vmatpush1.msra.mxu0 0.0
        %1276 = vmatprep.subr.mxu0 0.0
        %1277 = vmatpush1.msra.mxu0 0.0
        %1278 = vmatprep.subr.mxu0 0.0
        %1279 = vmatpush1.msra.mxu0 0.0
        %1280 = vmatprep.subr.mxu0 0.0
        %1281 = vmatpush1.msra.mxu0 0.0
        %1282 = vmatprep.subr.mxu0 0.0
        %1283 = vmatpush1.msra.mxu0 0.0
        %1284 = vmatprep.subr.mxu0 0.0
        %1285 = vmatpush1.msra.mxu0 0.0
        %1286 = vmatprep.subr.mxu0 0.0
        %1287 = vmatpush1.msra.mxu0 0.0
        %1288 = vmatprep.subr.mxu0 0.0
        %1289 = vmatpush1.msra.mxu0 0.0
        %1290 = vmatprep.subr.mxu0 0.0
        %1291 = vmatpush1.msra.mxu0 %v1254
        %1292 = vmatprep.subr.mxu0 0.0
        %1293 = vmatpush1.msra.mxu0 %v1253
        %1294 = vmatprep.subr.mxu0 0.0
        %1295 = vmatpush1.msra.mxu0 %v1252
        %1296 = vmatprep.subr.mxu0 0.0
        %1297 = vmatpush1.msra.mxu0 %v1251
        %1298 = vmatprep.subr.mxu0 0.0
        %1299 = vmatpush2.msra.mxu0 0.0
        %1300 = vmatprep.subr.mxu0 0.0
        %1301 = vmatpush2.msra.mxu0 0.0
        %1302 = vmatprep.subr.mxu0 0.0
        %1303 = vmatpush2.msra.mxu0 0.0
        %1304 = vmatprep.subr.mxu0 0.0
        %1305 = vmatpush2.msra.mxu0 0.0
        %1306 = vmatprep.subr.mxu0 0.0
        %1307 = vmatpush2.msra.mxu0 0.0
        %1308 = vmatprep.subr.mxu0 0.0
        %1309 = vmatpush2.msra.mxu0 0.0
        %1310 = vmatprep.subr.mxu0 0.0
        %1311 = vmatpush2.msra.mxu0 0.0
        %1312 = vmatprep.subr.mxu0 0.0
        %1313 = vmatpush2.msra.mxu0 0.0
        %1314 = vmatprep.subr.mxu0 0.0
        %1315 = vmatpush2.msra.mxu0 0.0
        %1316 = vmatprep.subr.mxu0 0.0
        %1317 = vmatpush2.msra.mxu0 0.0
        %1318 = vmatprep.subr.mxu0 0.0
        %1319 = vmatpush2.msra.mxu0 0.0
        %1320 = vmatprep.subr.mxu0 0.0
        %1321 = vmatpush2.msra.mxu0 0.0
        %1322 = vmatprep.subr.mxu0 0.0
        %1323 = vmatpush2.msra.mxu0 0.0
        %1324 = vmatprep.subr.mxu0 0.0
        %1325 = vmatpush2.msra.mxu0 0.0
        %1326 = vmatprep.subr.mxu0 0.0
        %1327 = vmatpush2.msra.mxu0 0.0
        %1328 = vmatprep.subr.mxu0 0.0
        %1329 = vmatpush2.msra.mxu0 0.0
        %1330 = vmatprep.mubr.f32.mxu0 0.0
        %1331 = vmatmul.mubr.f32.gmra.mxu0 %v1264
        %v1332 = vpop.f32.mrf.mxu0
        %v1333 = vadd.f32 %v1260, %v1332
        %v1334 = vpop.f32.mrf.mxu0
        %1335 = vdwg.mxu0
        %v1336 = vmax.f32 %v1333, 0.0
        %v1337 = vlaneseq
        %v1338 = vshrl.u32 %v1337, 7
        %v1339 = vlaneseq
        %v1340 = vand.u32 %v1339, 127
        %v1341 = vadd.s32 %v1338, 4294967295
        %vm1342 = vcmp.eq.s32.totalorder %v1340, %v1341
        %v1343 = vsel %vm1342, 1, 0
        %v1344 = vcvt.s32.f32 %v1343
        %v1345 = vadd.s32 %v1338, 1
        %vm1346 = vcmp.eq.s32.totalorder %v1340, %v1345
        %v1347 = vsel %vm1346, 1, 0
        %v1348 = vcvt.s32.f32 %v1347
        %v1349 = vld [vmem:[%s15] sm:$0x1]
        %vm1350 = vcmask 39936
        %v1352 = vsel %vm1350, %v1344, 0
        %vm1354 = vcmask 1044480
        %v1356 = vsel %vm1354, %v1336, 0
        %1358 = vmatprep.subr.mxu0 0.0
        %1359 = vmatpush1.msra.mxu0 0.0
        %1360 = vmatprep.subr.mxu0 0.0
        %1361 = vmatpush1.msra.mxu0 0.0
        %1362 = vmatprep.subr.mxu0 0.0
        %1363 = vmatpush1.msra.mxu0 0.0
        %1364 = vmatprep.subr.mxu0 0.0
        %1365 = vmatpush1.msra.mxu0 0.0
        %1366 = vmatprep.subr.mxu0 0.0
        %1367 = vmatpush1.msra.mxu0 0.0
        %1368 = vmatprep.subr.mxu0 0.0
        %1369 = vmatpush1.msra.mxu0 0.0
        %1370 = vmatprep.subr.mxu0 0.0
        %1371 = vmatpush1.msra.mxu0 0.0
        %1372 = vmatprep.subr.mxu0 0.0
        %1373 = vmatpush1.msra.mxu0 0.0
        %1374 = vmatprep.subr.mxu0 0.0
        %1375 = vmatpush1.msra.mxu0 0.0
        %1376 = vmatprep.subr.mxu0 0.0
        %1377 = vmatpush1.msra.mxu0 0.0
        %1378 = vmatprep.subr.mxu0 0.0
        %1379 = vmatpush1.msra.mxu0 0.0
        %1380 = vmatprep.subr.mxu0 0.0
        %1381 = vmatpush1.msra.mxu0 0.0
        %1382 = vmatprep.subr.mxu0 0.0
        %1383 = vmatpush1.msra.mxu0 0.0
        %1384 = vmatprep.subr.mxu0 0.0
        %1385 = vmatpush1.msra.mxu0 0.0
        %1386 = vmatprep.subr.mxu0 0.0
        %1387 = vmatpush1.msra.mxu0 0.0
        %1388 = vmatprep.subr.mxu0 0.0
        %1389 = vmatpush1.msra.mxu0 %v1356
        %1390 = vmatprep.subr.mxu0 0.0
        %1391 = vmatpush2.msra.mxu0 0.0
        %1392 = vmatprep.subr.mxu0 0.0
        %1393 = vmatpush2.msra.mxu0 0.0
        %1394 = vmatprep.subr.mxu0 0.0
        %1395 = vmatpush2.msra.mxu0 0.0
        %1396 = vmatprep.subr.mxu0 0.0
        %1397 = vmatpush2.msra.mxu0 0.0
        %1398 = vmatprep.subr.mxu0 0.0
        %1399 = vmatpush2.msra.mxu0 0.0
        %1400 = vmatprep.subr.mxu0 0.0
        %1401 = vmatpush2.msra.mxu0 0.0
        %1402 = vmatprep.subr.mxu0 0.0
        %1403 = vmatpush2.msra.mxu0 0.0
        %1404 = vmatprep.subr.mxu0 0.0
        %1405 = vmatpush2.msra.mxu0 0.0
        %1406 = vmatprep.subr.mxu0 0.0
        %1407 = vmatpush2.msra.mxu0 0.0
        %1408 = vmatprep.subr.mxu0 0.0
        %1409 = vmatpush2.msra.mxu0 0.0
        %1410 = vmatprep.subr.mxu0 0.0
        %1411 = vmatpush2.msra.mxu0 0.0
        %1412 = vmatprep.subr.mxu0 0.0
        %1413 = vmatpush2.msra.mxu0 0.0
        %1414 = vmatprep.subr.mxu0 0.0
        %1415 = vmatpush2.msra.mxu0 0.0
        %1416 = vmatprep.subr.mxu0 0.0
        %1417 = vmatpush2.msra.mxu0 0.0
        %1418 = vmatprep.subr.mxu0 0.0
        %1419 = vmatpush2.msra.mxu0 0.0
        %1420 = vmatprep.subr.mxu0 0.0
        %1421 = vmatpush2.msra.mxu0 0.0
        %1422 = vmatprep.mubr.f32.mxu0 0.0
        %1423 = vmatmul.mubr.f32.gmra.mxu0 %v1352
        %v1424 = vpop.f32.mrf.mxu0
        %v1425 = vadd.f32 0.0, %v1424
        %v1426 = vpop.f32.mrf.mxu0
        %1427 = vdwg.mxu0
        %v1428 = vld [vmem:[%s13] sm:$0xff]
        %v1429 = vld [vmem:[%s13 + $0x8] sm:$0xff]
        %v1430 = vld [vmem:[%s13 + $0x10] sm:$0xff]
        %v1431 = vld [vmem:[%s13 + $0x18] sm:$0xff]
        %v1433 = vsel %vm1262, %v1425, 0
        %1435 = vmatprep.subr.mxu0 0.0
        %1436 = vmatpush1.msra.mxu0 0.0
        %1437 = vmatprep.subr.mxu0 0.0
        %1438 = vmatpush1.msra.mxu0 0.0
        %1439 = vmatprep.subr.mxu0 0.0
        %1440 = vmatpush1.msra.mxu0 0.0
        %1441 = vmatprep.subr.mxu0 0.0
        %1442 = vmatpush1.msra.mxu0 0.0
        %1443 = vmatprep.subr.mxu0 0.0
        %1444 = vmatpush1.msra.mxu0 0.0
        %1445 = vmatprep.subr.mxu0 0.0
        %1446 = vmatpush1.msra.mxu0 0.0
        %1447 = vmatprep.subr.mxu0 0.0
        %1448 = vmatpush1.msra.mxu0 0.0
        %1449 = vmatprep.subr.mxu0 0.0
        %1450 = vmatpush1.msra.mxu0 0.0
        %1451 = vmatprep.subr.mxu0 0.0
        %1452 = vmatpush1.msra.mxu0 0.0
        %1453 = vmatprep.subr.mxu0 0.0
        %1454 = vmatpush1.msra.mxu0 0.0
        %1455 = vmatprep.subr.mxu0 0.0
        %1456 = vmatpush1.msra.mxu0 0.0
        %1457 = vmatprep.subr.mxu0 0.0
        %1458 = vmatpush1.msra.mxu0 0.0
        %1459 = vmatprep.subr.mxu0 0.0
        %1460 = vmatpush1.msra.mxu0 %v1431
        %1461 = vmatprep.subr.mxu0 0.0
        %1462 = vmatpush1.msra.mxu0 %v1430
        %1463 = vmatprep.subr.mxu0 0.0
        %1464 = vmatpush1.msra.mxu0 %v1429
        %1465 = vmatprep.subr.mxu0 0.0
        %1466 = vmatpush1.msra.mxu0 %v1428
        %1467 = vmatprep.subr.mxu0 0.0
        %1468 = vmatpush2.msra.mxu0 0.0
        %1469 = vmatprep.subr.mxu0 0.0
        %1470 = vmatpush2.msra.mxu0 0.0
        %1471 = vmatprep.subr.mxu0 0.0
        %1472 = vmatpush2.msra.mxu0 0.0
        %1473 = vmatprep.subr.mxu0 0.0
        %1474 = vmatpush2.msra.mxu0 0.0
        %1475 = vmatprep.subr.mxu0 0.0
        %1476 = vmatpush2.msra.mxu0 0.0
        %1477 = vmatprep.subr.mxu0 0.0
        %1478 = vmatpush2.msra.mxu0 0.0
        %1479 = vmatprep.subr.mxu0 0.0
        %1480 = vmatpush2.msra.mxu0 0.0
        %1481 = vmatprep.subr.mxu0 0.0
        %1482 = vmatpush2.msra.mxu0 0.0
        %1483 = vmatprep.subr.mxu0 0.0
        %1484 = vmatpush2.msra.mxu0 0.0
        %1485 = vmatprep.subr.mxu0 0.0
        %1486 = vmatpush2.msra.mxu0 0.0
        %1487 = vmatprep.subr.mxu0 0.0
        %1488 = vmatpush2.msra.mxu0 0.0
        %1489 = vmatprep.subr.mxu0 0.0
        %1490 = vmatpush2.msra.mxu0 0.0
        %1491 = vmatprep.subr.mxu0 0.0
        %1492 = vmatpush2.msra.mxu0 0.0
        %1493 = vmatprep.subr.mxu0 0.0
        %1494 = vmatpush2.msra.mxu0 0.0
        %1495 = vmatprep.subr.mxu0 0.0
        %1496 = vmatpush2.msra.mxu0 0.0
        %1497 = vmatprep.subr.mxu0 0.0
        %1498 = vmatpush2.msra.mxu0 0.0
        %1499 = vmatprep.mubr.f32.mxu0 0.0
        %1500 = vmatmul.mubr.f32.gmra.mxu0 %v1433
        %v1501 = vpop.f32.mrf.mxu0
        %v1502 = vadd.f32 0.0, %v1501
        %v1503 = vpop.f32.mrf.mxu0
        %1504 = vdwg.mxu0
        %v1506 = vlaneseq
        %v1507 = vshrl.u32 %v1506, 7
        %v1508 = vsub.s32 0, %v1507
        %v1509 = vrot.slane %v1349, %v1508
        %v1511 = vadd.f32 %v1509, %v1502
        %s1512 = scalar_lea.vmem %s13, 32
        %v1513 = vld [vmem:[%s1512] sm:$0xff]
        %v1514 = vld [vmem:[%s1512 + $0x8] sm:$0xff]
        %v1515 = vld [vmem:[%s1512 + $0x10] sm:$0xff]
        %v1516 = vld [vmem:[%s1512 + $0x18] sm:$0xff]
        %v1517 = vsel %vm1262, %v1336, 0
        %1519 = vmatprep.subr.mxu0 0.0
        %1520 = vmatpush1.msra.mxu0 0.0
        %1521 = vmatprep.subr.mxu0 0.0
        %1522 = vmatpush1.msra.mxu0 0.0
        %1523 = vmatprep.subr.mxu0 0.0
        %1524 = vmatpush1.msra.mxu0 0.0
        %1525 = vmatprep.subr.mxu0 0.0
        %1526 = vmatpush1.msra.mxu0 0.0
        %1527 = vmatprep.subr.mxu0 0.0
        %1528 = vmatpush1.msra.mxu0 0.0
        %1529 = vmatprep.subr.mxu0 0.0
        %1530 = vmatpush1.msra.mxu0 0.0
        %1531 = vmatprep.subr.mxu0 0.0
        %1532 = vmatpush1.msra.mxu0 0.0
        %1533 = vmatprep.subr.mxu0 0.0
        %1534 = vmatpush1.msra.mxu0 0.0
        %1535 = vmatprep.subr.mxu0 0.0
        %1536 = vmatpush1.msra.mxu0 0.0
        %1537 = vmatprep.subr.mxu0 0.0
        %1538 = vmatpush1.msra.mxu0 0.0
        %1539 = vmatprep.subr.mxu0 0.0
        %1540 = vmatpush1.msra.mxu0 0.0
        %1541 = vmatprep.subr.mxu0 0.0
        %1542 = vmatpush1.msra.mxu0 0.0
        %1543 = vmatprep.subr.mxu0 0.0
        %1544 = vmatpush1.msra.mxu0 %v1516
        %1545 = vmatprep.subr.mxu0 0.0
        %1546 = vmatpush1.msra.mxu0 %v1515
        %1547 = vmatprep.subr.mxu0 0.0
        %1548 = vmatpush1.msra.mxu0 %v1514
        %1549 = vmatprep.subr.mxu0 0.0
        %1550 = vmatpush1.msra.mxu0 %v1513
        %1551 = vmatprep.subr.mxu0 0.0
        %1552 = vmatpush2.msra.mxu0 0.0
        %1553 = vmatprep.subr.mxu0 0.0
        %1554 = vmatpush2.msra.mxu0 0.0
        %1555 = vmatprep.subr.mxu0 0.0
        %1556 = vmatpush2.msra.mxu0 0.0
        %1557 = vmatprep.subr.mxu0 0.0
        %1558 = vmatpush2.msra.mxu0 0.0
        %1559 = vmatprep.subr.mxu0 0.0
        %1560 = vmatpush2.msra.mxu0 0.0
        %1561 = vmatprep.subr.mxu0 0.0
        %1562 = vmatpush2.msra.mxu0 0.0
        %1563 = vmatprep.subr.mxu0 0.0
        %1564 = vmatpush2.msra.mxu0 0.0
        %1565 = vmatprep.subr.mxu0 0.0
        %1566 = vmatpush2.msra.mxu0 0.0
        %1567 = vmatprep.subr.mxu0 0.0
        %1568 = vmatpush2.msra.mxu0 0.0
        %1569 = vmatprep.subr.mxu0 0.0
        %1570 = vmatpush2.msra.mxu0 0.0
        %1571 = vmatprep.subr.mxu0 0.0
        %1572 = vmatpush2.msra.mxu0 0.0
        %1573 = vmatprep.subr.mxu0 0.0
        %1574 = vmatpush2.msra.mxu0 0.0
        %1575 = vmatprep.subr.mxu0 0.0
        %1576 = vmatpush2.msra.mxu0 0.0
        %1577 = vmatprep.subr.mxu0 0.0
        %1578 = vmatpush2.msra.mxu0 0.0
        %1579 = vmatprep.subr.mxu0 0.0
        %1580 = vmatpush2.msra.mxu0 0.0
        %1581 = vmatprep.subr.mxu0 0.0
        %1582 = vmatpush2.msra.mxu0 0.0
        %1583 = vmatprep.mubr.f32.mxu0 0.0
        %1584 = vmatmul.mubr.f32.gmra.mxu0 %v1517
        %v1585 = vpop.f32.mrf.mxu0
        %v1586 = vadd.f32 0.0, %v1585
        %v1587 = vpop.f32.mrf.mxu0
        %1588 = vdwg.mxu0
        %v1589 = vadd.f32 %v1511, %v1586
        %v1591 = vsel %vm1350, %v1348, 0
        %1593 = vmatprep.subr.mxu0 0.0
        %1594 = vmatpush1.msra.mxu0 0.0
        %1595 = vmatprep.subr.mxu0 0.0
        %1596 = vmatpush1.msra.mxu0 0.0
        %1597 = vmatprep.subr.mxu0 0.0
        %1598 = vmatpush1.msra.mxu0 0.0
        %1599 = vmatprep.subr.mxu0 0.0
        %1600 = vmatpush1.msra.mxu0 0.0
        %1601 = vmatprep.subr.mxu0 0.0
        %1602 = vmatpush1.msra.mxu0 0.0
        %1603 = vmatprep.subr.mxu0 0.0
        %1604 = vmatpush1.msra.mxu0 0.0
        %1605 = vmatprep.subr.mxu0 0.0
        %1606 = vmatpush1.msra.mxu0 0.0
        %1607 = vmatprep.subr.mxu0 0.0
        %1608 = vmatpush1.msra.mxu0 0.0
        %1609 = vmatprep.subr.mxu0 0.0
        %1610 = vmatpush1.msra.mxu0 0.0
        %1611 = vmatprep.subr.mxu0 0.0
        %1612 = vmatpush1.msra.mxu0 0.0
        %1613 = vmatprep.subr.mxu0 0.0
        %1614 = vmatpush1.msra.mxu0 0.0
        %1615 = vmatprep.subr.mxu0 0.0
        %1616 = vmatpush1.msra.mxu0 0.0
        %1617 = vmatprep.subr.mxu0 0.0
        %1618 = vmatpush1.msra.mxu0 0.0
        %1619 = vmatprep.subr.mxu0 0.0
        %1620 = vmatpush1.msra.mxu0 0.0
        %1621 = vmatprep.subr.mxu0 0.0
        %1622 = vmatpush1.msra.mxu0 0.0
        %1623 = vmatprep.subr.mxu0 0.0
        %1624 = vmatpush1.msra.mxu0 %v1356
        %1625 = vmatprep.subr.mxu0 0.0
        %1626 = vmatpush2.msra.mxu0 0.0
        %1627 = vmatprep.subr.mxu0 0.0
        %1628 = vmatpush2.msra.mxu0 0.0
        %1629 = vmatprep.subr.mxu0 0.0
        %1630 = vmatpush2.msra.mxu0 0.0
        %1631 = vmatprep.subr.mxu0 0.0
        %1632 = vmatpush2.msra.mxu0 0.0
        %1633 = vmatprep.subr.mxu0 0.0
        %1634 = vmatpush2.msra.mxu0 0.0
        %1635 = vmatprep.subr.mxu0 0.0
        %1636 = vmatpush2.msra.mxu0 0.0
        %1637 = vmatprep.subr.mxu0 0.0
        %1638 = vmatpush2.msra.mxu0 0.0
        %1639 = vmatprep.subr.mxu0 0.0
        %1640 = vmatpush2.msra.mxu0 0.0
        %1641 = vmatprep.subr.mxu0 0.0
        %1642 = vmatpush2.msra.mxu0 0.0
        %1643 = vmatprep.subr.mxu0 0.0
        %1644 = vmatpush2.msra.mxu0 0.0
        %1645 = vmatprep.subr.mxu0 0.0
        %1646 = vmatpush2.msra.mxu0 0.0
        %1647 = vmatprep.subr.mxu0 0.0
        %1648 = vmatpush2.msra.mxu0 0.0
        %1649 = vmatprep.subr.mxu0 0.0
        %1650 = vmatpush2.msra.mxu0 0.0
        %1651 = vmatprep.subr.mxu0 0.0
        %1652 = vmatpush2.msra.mxu0 0.0
        %1653 = vmatprep.subr.mxu0 0.0
        %1654 = vmatpush2.msra.mxu0 0.0
        %1655 = vmatprep.subr.mxu0 0.0
        %1656 = vmatpush2.msra.mxu0 0.0
        %1657 = vmatprep.mubr.f32.mxu0 0.0
        %1658 = vmatmul.mubr.f32.gmra.mxu0 %v1591
        %v1659 = vpop.f32.mrf.mxu0
        %v1660 = vadd.f32 0.0, %v1659
        %v1661 = vpop.f32.mrf.mxu0
        %1662 = vdwg.mxu0
        %s1663 = scalar_lea.vmem %s13, 64
        %v1664 = vld [vmem:[%s1663] sm:$0xff]
        %v1665 = vld [vmem:[%s1663 + $0x8] sm:$0xff]
        %v1666 = vld [vmem:[%s1663 + $0x10] sm:$0xff]
        %v1667 = vld [vmem:[%s1663 + $0x18] sm:$0xff]
        %v1669 = vsel %vm1262, %v1660, 0
        %1671 = vmatprep.subr.mxu0 0.0
        %1672 = vmatpush1.msra.mxu0 0.0
        %1673 = vmatprep.subr.mxu0 0.0
        %1674 = vmatpush1.msra.mxu0 0.0
        %1675 = vmatprep.subr.mxu0 0.0
        %1676 = vmatpush1.msra.mxu0 0.0
        %1677 = vmatprep.subr.mxu0 0.0
        %1678 = vmatpush1.msra.mxu0 0.0
        %1679 = vmatprep.subr.mxu0 0.0
        %1680 = vmatpush1.msra.mxu0 0.0
        %1681 = vmatprep.subr.mxu0 0.0
        %1682 = vmatpush1.msra.mxu0 0.0
        %1683 = vmatprep.subr.mxu0 0.0
        %1684 = vmatpush1.msra.mxu0 0.0
        %1685 = vmatprep.subr.mxu0 0.0
        %1686 = vmatpush1.msra.mxu0 0.0
        %1687 = vmatprep.subr.mxu0 0.0
        %1688 = vmatpush1.msra.mxu0 0.0
        %1689 = vmatprep.subr.mxu0 0.0
        %1690 = vmatpush1.msra.mxu0 0.0
        %1691 = vmatprep.subr.mxu0 0.0
        %1692 = vmatpush1.msra.mxu0 0.0
        %1693 = vmatprep.subr.mxu0 0.0
        %1694 = vmatpush1.msra.mxu0 0.0
        %1695 = vmatprep.subr.mxu0 0.0
        %1696 = vmatpush1.msra.mxu0 %v1667
        %1697 = vmatprep.subr.mxu0 0.0
        %1698 = vmatpush1.msra.mxu0 %v1666
        %1699 = vmatprep.subr.mxu0 0.0
        %1700 = vmatpush1.msra.mxu0 %v1665
        %1701 = vmatprep.subr.mxu0 0.0
        %1702 = vmatpush1.msra.mxu0 %v1664
        %1703 = vmatprep.subr.mxu0 0.0
        %1704 = vmatpush2.msra.mxu0 0.0
        %1705 = vmatprep.subr.mxu0 0.0
        %1706 = vmatpush2.msra.mxu0 0.0
        %1707 = vmatprep.subr.mxu0 0.0
        %1708 = vmatpush2.msra.mxu0 0.0
        %1709 = vmatprep.subr.mxu0 0.0
        %1710 = vmatpush2.msra.mxu0 0.0
        %1711 = vmatprep.subr.mxu0 0.0
        %1712 = vmatpush2.msra.mxu0 0.0
        %1713 = vmatprep.subr.mxu0 0.0
        %1714 = vmatpush2.msra.mxu0 0.0
        %1715 = vmatprep.subr.mxu0 0.0
        %1716 = vmatpush2.msra.mxu0 0.0
        %1717 = vmatprep.subr.mxu0 0.0
        %1718 = vmatpush2.msra.mxu0 0.0
        %1719 = vmatprep.subr.mxu0 0.0
        %1720 = vmatpush2.msra.mxu0 0.0
        %1721 = vmatprep.subr.mxu0 0.0
        %1722 = vmatpush2.msra.mxu0 0.0
        %1723 = vmatprep.subr.mxu0 0.0
        %1724 = vmatpush2.msra.mxu0 0.0
        %1725 = vmatprep.subr.mxu0 0.0
        %1726 = vmatpush2.msra.mxu0 0.0
        %1727 = vmatprep.subr.mxu0 0.0
        %1728 = vmatpush2.msra.mxu0 0.0
        %1729 = vmatprep.subr.mxu0 0.0
        %1730 = vmatpush2.msra.mxu0 0.0
        %1731 = vmatprep.subr.mxu0 0.0
        %1732 = vmatpush2.msra.mxu0 0.0
        %1733 = vmatprep.subr.mxu0 0.0
        %1734 = vmatpush2.msra.mxu0 0.0
        %1735 = vmatprep.mubr.f32.mxu0 0.0
        %1736 = vmatmul.mubr.f32.gmra.mxu0 %v1669
        %v1737 = vpop.f32.mrf.mxu0
        %v1738 = vadd.f32 0.0, %v1737
        %v1739 = vpop.f32.mrf.mxu0
        %1740 = vdwg.mxu0
        %v1741 = vadd.f32 %v1589, %v1738
        %v1742 = vmax.f32 %v1741, 0.0
        %v1743 = vld [vmem:[%s17] sm:$0x1]
        %v1744 = vadd.f32 %v1743, 1.0
        %v1746 = vlaneseq
        %v1747 = vshrl.u32 %v1746, 7
        %v1748 = vsub.s32 0, %v1747
        %v1749 = vrot.slane %v1744, %v1748
        %v1751 = vmul.f32 %v1742, %v1749
        %v1752 = vld [vmem:[%s19] sm:$0x1]
        %v1754 = vlaneseq
        %v1755 = vshrl.u32 %v1754, 7
        %v1756 = vsub.s32 0, %v1755
        %v1757 = vrot.slane %v1752, %v1756
        %v1759 = vadd.f32 %v1751, %v1757
        %s1760 = scalar_lea.vmem %s15, 1
        %v1761 = vld [vmem:[%s1760] sm:$0x1]
        %v1763 = vsel %vm1354, %v1759, 0
        %1765 = vmatprep.subr.mxu0 0.0
        %1766 = vmatpush1.msra.mxu0 0.0
        %1767 = vmatprep.subr.mxu0 0.0
        %1768 = vmatpush1.msra.mxu0 0.0
        %1769 = vmatprep.subr.mxu0 0.0
        %1770 = vmatpush1.msra.mxu0 0.0
        %1771 = vmatprep.subr.mxu0 0.0
        %1772 = vmatpush1.msra.mxu0 0.0
        %1773 = vmatprep.subr.mxu0 0.0
        %1774 = vmatpush1.msra.mxu0 0.0
        %1775 = vmatprep.subr.mxu0 0.0
        %1776 = vmatpush1.msra.mxu0 0.0
        %1777 = vmatprep.subr.mxu0 0.0
        %1778 = vmatpush1.msra.mxu0 0.0
        %1779 = vmatprep.subr.mxu0 0.0
        %1780 = vmatpush1.msra.mxu0 0.0
        %1781 = vmatprep.subr.mxu0 0.0
        %1782 = vmatpush1.msra.mxu0 0.0
        %1783 = vmatprep.subr.mxu0 0.0
        %1784 = vmatpush1.msra.mxu0 0.0
        %1785 = vmatprep.subr.mxu0 0.0
        %1786 = vmatpush1.msra.mxu0 0.0
        %1787 = vmatprep.subr.mxu0 0.0
        %1788 = vmatpush1.msra.mxu0 0.0
        %1789 = vmatprep.subr.mxu0 0.0
        %1790 = vmatpush1.msra.mxu0 0.0
        %1791 = vmatprep.subr.mxu0 0.0
        %1792 = vmatpush1.msra.mxu0 0.0
        %1793 = vmatprep.subr.mxu0 0.0
        %1794 = vmatpush1.msra.mxu0 0.0
        %1795 = vmatprep.subr.mxu0 0.0
        %1796 = vmatpush1.msra.mxu0 %v1763
        %1797 = vmatprep.subr.mxu0 0.0
        %1798 = vmatpush2.msra.mxu0 0.0
        %1799 = vmatprep.subr.mxu0 0.0
        %1800 = vmatpush2.msra.mxu0 0.0
        %1801 = vmatprep.subr.mxu0 0.0
        %1802 = vmatpush2.msra.mxu0 0.0
        %1803 = vmatprep.subr.mxu0 0.0
        %1804 = vmatpush2.msra.mxu0 0.0
        %1805 = vmatprep.subr.mxu0 0.0
        %1806 = vmatpush2.msra.mxu0 0.0
        %1807 = vmatprep.subr.mxu0 0.0
        %1808 = vmatpush2.msra.mxu0 0.0
        %1809 = vmatprep.subr.mxu0 0.0
        %1810 = vmatpush2.msra.mxu0 0.0
        %1811 = vmatprep.subr.mxu0 0.0
        %1812 = vmatpush2.msra.mxu0 0.0
        %1813 = vmatprep.subr.mxu0 0.0
        %1814 = vmatpush2.msra.mxu0 0.0
        %1815 = vmatprep.subr.mxu0 0.0
        %1816 = vmatpush2.msra.mxu0 0.0
        %1817 = vmatprep.subr.mxu0 0.0
        %1818 = vmatpush2.msra.mxu0 0.0
        %1819 = vmatprep.subr.mxu0 0.0
        %1820 = vmatpush2.msra.mxu0 0.0
        %1821 = vmatprep.subr.mxu0 0.0
        %1822 = vmatpush2.msra.mxu0 0.0
        %1823 = vmatprep.subr.mxu0 0.0
        %1824 = vmatpush2.msra.mxu0 0.0
        %1825 = vmatprep.subr.mxu0 0.0
        %1826 = vmatpush2.msra.mxu0 0.0
        %1827 = vmatprep.subr.mxu0 0.0
        %1828 = vmatpush2.msra.mxu0 0.0
        %1829 = vmatprep.mubr.f32.mxu0 0.0
        %1830 = vmatmul.mubr.f32.gmra.mxu0 %v1352
        %v1831 = vpop.f32.mrf.mxu0
        %v1832 = vadd.f32 0.0, %v1831
        %v1833 = vpop.f32.mrf.mxu0
        %1834 = vdwg.mxu0
        %s1835 = scalar_lea.vmem %s13, 96
        %v1836 = vld [vmem:[%s1835] sm:$0xff]
        %v1837 = vld [vmem:[%s1835 + $0x8] sm:$0xff]
        %v1838 = vld [vmem:[%s1835 + $0x10] sm:$0xff]
        %v1839 = vld [vmem:[%s1835 + $0x18] sm:$0xff]
        %v1841 = vsel %vm1262, %v1832, 0
        %1843 = vmatprep.subr.mxu0 0.0
        %1844 = vmatpush1.msra.mxu0 0.0
        %1845 = vmatprep.subr.mxu0 0.0
        %1846 = vmatpush1.msra.mxu0 0.0
        %1847 = vmatprep.subr.mxu0 0.0
        %1848 = vmatpush1.msra.mxu0 0.0
        %1849 = vmatprep.subr.mxu0 0.0
        %1850 = vmatpush1.msra.mxu0 0.0
        %1851 = vmatprep.subr.mxu0 0.0
        %1852 = vmatpush1.msra.mxu0 0.0
        %1853 = vmatprep.subr.mxu0 0.0
        %1854 = vmatpush1.msra.mxu0 0.0
        %1855 = vmatprep.subr.mxu0 0.0
        %1856 = vmatpush1.msra.mxu0 0.0
        %1857 = vmatprep.subr.mxu0 0.0
        %1858 = vmatpush1.msra.mxu0 0.0
        %1859 = vmatprep.subr.mxu0 0.0
        %1860 = vmatpush1.msra.mxu0 0.0
        %1861 = vmatprep.subr.mxu0 0.0
        %1862 = vmatpush1.msra.mxu0 0.0
        %1863 = vmatprep.subr.mxu0 0.0
        %1864 = vmatpush1.msra.mxu0 0.0
        %1865 = vmatprep.subr.mxu0 0.0
        %1866 = vmatpush1.msra.mxu0 0.0
        %1867 = vmatprep.subr.mxu0 0.0
        %1868 = vmatpush1.msra.mxu0 %v1839
        %1869 = vmatprep.subr.mxu0 0.0
        %1870 = vmatpush1.msra.mxu0 %v1838
        %1871 = vmatprep.subr.mxu0 0.0
        %1872 = vmatpush1.msra.mxu0 %v1837
        %1873 = vmatprep.subr.mxu0 0.0
        %1874 = vmatpush1.msra.mxu0 %v1836
        %1875 = vmatprep.subr.mxu0 0.0
        %1876 = vmatpush2.msra.mxu0 0.0
        %1877 = vmatprep.subr.mxu0 0.0
        %1878 = vmatpush2.msra.mxu0 0.0
        %1879 = vmatprep.subr.mxu0 0.0
        %1880 = vmatpush2.msra.mxu0 0.0
        %1881 = vmatprep.subr.mxu0 0.0
        %1882 = vmatpush2.msra.mxu0 0.0
        %1883 = vmatprep.subr.mxu0 0.0
        %1884 = vmatpush2.msra.mxu0 0.0
        %1885 = vmatprep.subr.mxu0 0.0
        %1886 = vmatpush2.msra.mxu0 0.0
        %1887 = vmatprep.subr.mxu0 0.0
        %1888 = vmatpush2.msra.mxu0 0.0
        %1889 = vmatprep.subr.mxu0 0.0
        %1890 = vmatpush2.msra.mxu0 0.0
        %1891 = vmatprep.subr.mxu0 0.0
        %1892 = vmatpush2.msra.mxu0 0.0
        %1893 = vmatprep.subr.mxu0 0.0
        %1894 = vmatpush2.msra.mxu0 0.0
        %1895 = vmatprep.subr.mxu0 0.0
        %1896 = vmatpush2.msra.mxu0 0.0
        %1897 = vmatprep.subr.mxu0 0.0
        %1898 = vmatpush2.msra.mxu0 0.0
        %1899 = vmatprep.subr.mxu0 0.0
        %1900 = vmatpush2.msra.mxu0 0.0
        %1901 = vmatprep.subr.mxu0 0.0
        %1902 = vmatpush2.msra.mxu0 0.0
        %1903 = vmatprep.subr.mxu0 0.0
        %1904 = vmatpush2.msra.mxu0 0.0
        %1905 = vmatprep.subr.mxu0 0.0
        %1906 = vmatpush2.msra.mxu0 0.0
        %1907 = vmatprep.mubr.f32.mxu0 0.0
        %1908 = vmatmul.mubr.f32.gmra.mxu0 %v1841
        %v1909 = vpop.f32.mrf.mxu0
        %v1910 = vadd.f32 0.0, %v1909
        %v1911 = vpop.f32.mrf.mxu0
        %1912 = vdwg.mxu0
        %v1914 = vlaneseq
        %v1915 = vshrl.u32 %v1914, 7
        %v1916 = vsub.s32 0, %v1915
        %v1917 = vrot.slane %v1761, %v1916
        %v1919 = vadd.f32 %v1917, %v1910
        %s1920 = scalar_lea.vmem %s13, 128
        %v1921 = vld [vmem:[%s1920] sm:$0xff]
        %v1922 = vld [vmem:[%s1920 + $0x8] sm:$0xff]
        %v1923 = vld [vmem:[%s1920 + $0x10] sm:$0xff]
        %v1924 = vld [vmem:[%s1920 + $0x18] sm:$0xff]
        %v1925 = vsel %vm1262, %v1759, 0
        %1927 = vmatprep.subr.mxu0 0.0
        %1928 = vmatpush1.msra.mxu0 0.0
        %1929 = vmatprep.subr.mxu0 0.0
        %1930 = vmatpush1.msra.mxu0 0.0
        %1931 = vmatprep.subr.mxu0 0.0
        %1932 = vmatpush1.msra.mxu0 0.0
        %1933 = vmatprep.subr.mxu0 0.0
        %1934 = vmatpush1.msra.mxu0 0.0
        %1935 = vmatprep.subr.mxu0 0.0
        %1936 = vmatpush1.msra.mxu0 0.0
        %1937 = vmatprep.subr.mxu0 0.0
        %1938 = vmatpush1.msra.mxu0 0.0
        %1939 = vmatprep.subr.mxu0 0.0
        %1940 = vmatpush1.msra.mxu0 0.0
        %1941 = vmatprep.subr.mxu0 0.0
        %1942 = vmatpush1.msra.mxu0 0.0
        %1943 = vmatprep.subr.mxu0 0.0
        %1944 = vmatpush1.msra.mxu0 0.0
        %1945 = vmatprep.subr.mxu0 0.0
        %1946 = vmatpush1.msra.mxu0 0.0
        %1947 = vmatprep.subr.mxu0 0.0
        %1948 = vmatpush1.msra.mxu0 0.0
        %1949 = vmatprep.subr.mxu0 0.0
        %1950 = vmatpush1.msra.mxu0 0.0
        %1951 = vmatprep.subr.mxu0 0.0
        %1952 = vmatpush1.msra.mxu0 %v1924
        %1953 = vmatprep.subr.mxu0 0.0
        %1954 = vmatpush1.msra.mxu0 %v1923
        %1955 = vmatprep.subr.mxu0 0.0
        %1956 = vmatpush1.msra.mxu0 %v1922
        %1957 = vmatprep.subr.mxu0 0.0
        %1958 = vmatpush1.msra.mxu0 %v1921
        %1959 = vmatprep.subr.mxu0 0.0
        %1960 = vmatpush2.msra.mxu0 0.0
        %1961 = vmatprep.subr.mxu0 0.0
        %1962 = vmatpush2.msra.mxu0 0.0
        %1963 = vmatprep.subr.mxu0 0.0
        %1964 = vmatpush2.msra.mxu0 0.0
        %1965 = vmatprep.subr.mxu0 0.0
        %1966 = vmatpush2.msra.mxu0 0.0
        %1967 = vmatprep.subr.mxu0 0.0
        %1968 = vmatpush2.msra.mxu0 0.0
        %1969 = vmatprep.subr.mxu0 0.0
        %1970 = vmatpush2.msra.mxu0 0.0
        %1971 = vmatprep.subr.mxu0 0.0
        %1972 = vmatpush2.msra.mxu0 0.0
        %1973 = vmatprep.subr.mxu0 0.0
        %1974 = vmatpush2.msra.mxu0 0.0
        %1975 = vmatprep.subr.mxu0 0.0
        %1976 = vmatpush2.msra.mxu0 0.0
        %1977 = vmatprep.subr.mxu0 0.0
        %1978 = vmatpush2.msra.mxu0 0.0
        %1979 = vmatprep.subr.mxu0 0.0
        %1980 = vmatpush2.msra.mxu0 0.0
        %1981 = vmatprep.subr.mxu0 0.0
        %1982 = vmatpush2.msra.mxu0 0.0
        %1983 = vmatprep.subr.mxu0 0.0
        %1984 = vmatpush2.msra.mxu0 0.0
        %1985 = vmatprep.subr.mxu0 0.0
        %1986 = vmatpush2.msra.mxu0 0.0
        %1987 = vmatprep.subr.mxu0 0.0
        %1988 = vmatpush2.msra.mxu0 0.0
        %1989 = vmatprep.subr.mxu0 0.0
        %1990 = vmatpush2.msra.mxu0 0.0
        %1991 = vmatprep.mubr.f32.mxu0 0.0
        %1992 = vmatmul.mubr.f32.gmra.mxu0 %v1925
        %v1993 = vpop.f32.mrf.mxu0
        %v1994 = vadd.f32 0.0, %v1993
        %v1995 = vpop.f32.mrf.mxu0
        %1996 = vdwg.mxu0
        %v1997 = vadd.f32 %v1919, %v1994
        %1998 = vmatprep.subr.mxu0 0.0
        %1999 = vmatpush1.msra.mxu0 0.0
        %2000 = vmatprep.subr.mxu0 0.0
        %2001 = vmatpush1.msra.mxu0 0.0
        %2002 = vmatprep.subr.mxu0 0.0
        %2003 = vmatpush1.msra.mxu0 0.0
        %2004 = vmatprep.subr.mxu0 0.0
        %2005 = vmatpush1.msra.mxu0 0.0
        %2006 = vmatprep.subr.mxu0 0.0
        %2007 = vmatpush1.msra.mxu0 0.0
        %2008 = vmatprep.subr.mxu0 0.0
        %2009 = vmatpush1.msra.mxu0 0.0
        %2010 = vmatprep.subr.mxu0 0.0
        %2011 = vmatpush1.msra.mxu0 0.0
        %2012 = vmatprep.subr.mxu0 0.0
        %2013 = vmatpush1.msra.mxu0 0.0
        %2014 = vmatprep.subr.mxu0 0.0
        %2015 = vmatpush1.msra.mxu0 0.0
        %2016 = vmatprep.subr.mxu0 0.0
        %2017 = vmatpush1.msra.mxu0 0.0
        %2018 = vmatprep.subr.mxu0 0.0
        %2019 = vmatpush1.msra.mxu0 0.0
        %2020 = vmatprep.subr.mxu0 0.0
        %2021 = vmatpush1.msra.mxu0 0.0
        %2022 = vmatprep.subr.mxu0 0.0
        %2023 = vmatpush1.msra.mxu0 0.0
        %2024 = vmatprep.subr.mxu0 0.0
        %2025 = vmatpush1.msra.mxu0 0.0
        %2026 = vmatprep.subr.mxu0 0.0
        %2027 = vmatpush1.msra.mxu0 0.0
        %2028 = vmatprep.subr.mxu0 0.0
        %2029 = vmatpush1.msra.mxu0 %v1763
        %2030 = vmatprep.subr.mxu0 0.0
        %2031 = vmatpush2.msra.mxu0 0.0
        %2032 = vmatprep.subr.mxu0 0.0
        %2033 = vmatpush2.msra.mxu0 0.0
        %2034 = vmatprep.subr.mxu0 0.0
        %2035 = vmatpush2.msra.mxu0 0.0
        %2036 = vmatprep.subr.mxu0 0.0
        %2037 = vmatpush2.msra.mxu0 0.0
        %2038 = vmatprep.subr.mxu0 0.0
        %2039 = vmatpush2.msra.mxu0 0.0
        %2040 = vmatprep.subr.mxu0 0.0
        %2041 = vmatpush2.msra.mxu0 0.0
        %2042 = vmatprep.subr.mxu0 0.0
        %2043 = vmatpush2.msra.mxu0 0.0
        %2044 = vmatprep.subr.mxu0 0.0
        %2045 = vmatpush2.msra.mxu0 0.0
        %2046 = vmatprep.subr.mxu0 0.0
        %2047 = vmatpush2.msra.mxu0 0.0
        %2048 = vmatprep.subr.mxu0 0.0
        %2049 = vmatpush2.msra.mxu0 0.0
        %2050 = vmatprep.subr.mxu0 0.0
        %2051 = vmatpush2.msra.mxu0 0.0
        %2052 = vmatprep.subr.mxu0 0.0
        %2053 = vmatpush2.msra.mxu0 0.0
        %2054 = vmatprep.subr.mxu0 0.0
        %2055 = vmatpush2.msra.mxu0 0.0
        %2056 = vmatprep.subr.mxu0 0.0
        %2057 = vmatpush2.msra.mxu0 0.0
        %2058 = vmatprep.subr.mxu0 0.0
        %2059 = vmatpush2.msra.mxu0 0.0
        %2060 = vmatprep.subr.mxu0 0.0
        %2061 = vmatpush2.msra.mxu0 0.0
        %2062 = vmatprep.mubr.f32.mxu0 0.0
        %2063 = vmatmul.mubr.f32.gmra.mxu0 %v1591
        %v2064 = vpop.f32.mrf.mxu0
        %v2065 = vadd.f32 0.0, %v2064
        %v2066 = vpop.f32.mrf.mxu0
        %2067 = vdwg.mxu0
        %s2068 = scalar_lea.vmem %s13, 160
        %v2069 = vld [vmem:[%s2068] sm:$0xff]
        %v2070 = vld [vmem:[%s2068 + $0x8] sm:$0xff]
        %v2071 = vld [vmem:[%s2068 + $0x10] sm:$0xff]
        %v2072 = vld [vmem:[%s2068 + $0x18] sm:$0xff]
        %v2074 = vsel %vm1262, %v2065, 0
        %2076 = vmatprep.subr.mxu0 0.0
        %2077 = vmatpush1.msra.mxu0 0.0
        %2078 = vmatprep.subr.mxu0 0.0
        %2079 = vmatpush1.msra.mxu0 0.0
        %2080 = vmatprep.subr.mxu0 0.0
        %2081 = vmatpush1.msra.mxu0 0.0
        %2082 = vmatprep.subr.mxu0 0.0
        %2083 = vmatpush1.msra.mxu0 0.0
        %2084 = vmatprep.subr.mxu0 0.0
        %2085 = vmatpush1.msra.mxu0 0.0
        %2086 = vmatprep.subr.mxu0 0.0
        %2087 = vmatpush1.msra.mxu0 0.0
        %2088 = vmatprep.subr.mxu0 0.0
        %2089 = vmatpush1.msra.mxu0 0.0
        %2090 = vmatprep.subr.mxu0 0.0
        %2091 = vmatpush1.msra.mxu0 0.0
        %2092 = vmatprep.subr.mxu0 0.0
        %2093 = vmatpush1.msra.mxu0 0.0
        %2094 = vmatprep.subr.mxu0 0.0
        %2095 = vmatpush1.msra.mxu0 0.0
        %2096 = vmatprep.subr.mxu0 0.0
        %2097 = vmatpush1.msra.mxu0 0.0
        %2098 = vmatprep.subr.mxu0 0.0
        %2099 = vmatpush1.msra.mxu0 0.0
        %2100 = vmatprep.subr.mxu0 0.0
        %2101 = vmatpush1.msra.mxu0 %v2072
        %2102 = vmatprep.subr.mxu0 0.0
        %2103 = vmatpush1.msra.mxu0 %v2071
        %2104 = vmatprep.subr.mxu0 0.0
        %2105 = vmatpush1.msra.mxu0 %v2070
        %2106 = vmatprep.subr.mxu0 0.0
        %2107 = vmatpush1.msra.mxu0 %v2069
        %2108 = vmatprep.subr.mxu0 0.0
        %2109 = vmatpush2.msra.mxu0 0.0
        %2110 = vmatprep.subr.mxu0 0.0
        %2111 = vmatpush2.msra.mxu0 0.0
        %2112 = vmatprep.subr.mxu0 0.0
        %2113 = vmatpush2.msra.mxu0 0.0
        %2114 = vmatprep.subr.mxu0 0.0
        %2115 = vmatpush2.msra.mxu0 0.0
        %2116 = vmatprep.subr.mxu0 0.0
        %2117 = vmatpush2.msra.mxu0 0.0
        %2118 = vmatprep.subr.mxu0 0.0
        %2119 = vmatpush2.msra.mxu0 0.0
        %2120 = vmatprep.subr.mxu0 0.0
        %2121 = vmatpush2.msra.mxu0 0.0
        %2122 = vmatprep.subr.mxu0 0.0
        %2123 = vmatpush2.msra.mxu0 0.0
        %2124 = vmatprep.subr.mxu0 0.0
        %2125 = vmatpush2.msra.mxu0 0.0
        %2126 = vmatprep.subr.mxu0 0.0
        %2127 = vmatpush2.msra.mxu0 0.0
        %2128 = vmatprep.subr.mxu0 0.0
        %2129 = vmatpush2.msra.mxu0 0.0
        %2130 = vmatprep.subr.mxu0 0.0
        %2131 = vmatpush2.msra.mxu0 0.0
        %2132 = vmatprep.subr.mxu0 0.0
        %2133 = vmatpush2.msra.mxu0 0.0
        %2134 = vmatprep.subr.mxu0 0.0
        %2135 = vmatpush2.msra.mxu0 0.0
        %2136 = vmatprep.subr.mxu0 0.0
        %2137 = vmatpush2.msra.mxu0 0.0
        %2138 = vmatprep.subr.mxu0 0.0
        %2139 = vmatpush2.msra.mxu0 0.0
        %2140 = vmatprep.mubr.f32.mxu0 0.0
        %2141 = vmatmul.mubr.f32.gmra.mxu0 %v2074
        %v2142 = vpop.f32.mrf.mxu0
        %v2143 = vadd.f32 0.0, %v2142
        %v2144 = vpop.f32.mrf.mxu0
        %2145 = vdwg.mxu0
        %v2146 = vadd.f32 %v1997, %v2143
        %v2147 = vmax.f32 %v2146, 0.0
        %s2148 = scalar_lea.vmem %s17, 1
        %v2149 = vld [vmem:[%s2148] sm:$0x1]
        %v2150 = vadd.f32 %v2149, 1.0
        %v2152 = vlaneseq
        %v2153 = vshrl.u32 %v2152, 7
        %v2154 = vsub.s32 0, %v2153
        %v2155 = vrot.slane %v2150, %v2154
        %v2157 = vmul.f32 %v2147, %v2155
        %s2158 = scalar_lea.vmem %s19, 1
        %v2159 = vld [vmem:[%s2158] sm:$0x1]
        %v2161 = vlaneseq
        %v2162 = vshrl.u32 %v2161, 7
        %v2163 = vsub.s32 0, %v2162
        %v2164 = vrot.slane %v2159, %v2163
        %v2166 = vadd.f32 %v2157, %v2164
        %2168 = vset.pattern.permute.xlu0 0
        %2169 = vperm.xlu0 %2168, %v1249
        %v2170 = vpop.permute.xlu0 %2169
        %v2172 = vmul.f32 %v2166, %v2170
        %vm2173 = vcmask 258048
        %2174 = vst.msk [vmem:[%s1238] sm:$0x1f] %vm2173, %v2172
        %v2175 = vld [vmem:[%s21] sm:$0xff]
        %v2176 = vld [vmem:[%s21 + $0x8] sm:$0xff]
        %v2177 = vld [vmem:[%s21 + $0x10] sm:$0xff]
        %v2178 = vld [vmem:[%s21 + $0x18] sm:$0xff]
        %v2179 = vld [vmem:[%s23] sm:$0x1]
        %v2181 = vlaneseq
        %v2182 = vshrl.u32 %v2181, 7
        %v2183 = vsub.s32 0, %v2182
        %v2184 = vrot.slane %v2179, %v2183
        %v2187 = vsel %vm1262, %v2172, 0
        %2189 = vmatprep.subr.mxu0 0.0
        %2190 = vmatpush1.msra.mxu0 0.0
        %2191 = vmatprep.subr.mxu0 0.0
        %2192 = vmatpush1.msra.mxu0 0.0
        %2193 = vmatprep.subr.mxu0 0.0
        %2194 = vmatpush1.msra.mxu0 0.0
        %2195 = vmatprep.subr.mxu0 0.0
        %2196 = vmatpush1.msra.mxu0 0.0
        %2197 = vmatprep.subr.mxu0 0.0
        %2198 = vmatpush1.msra.mxu0 0.0
        %2199 = vmatprep.subr.mxu0 0.0
        %2200 = vmatpush1.msra.mxu0 0.0
        %2201 = vmatprep.subr.mxu0 0.0
        %2202 = vmatpush1.msra.mxu0 0.0
        %2203 = vmatprep.subr.mxu0 0.0
        %2204 = vmatpush1.msra.mxu0 0.0
        %2205 = vmatprep.subr.mxu0 0.0
        %2206 = vmatpush1.msra.mxu0 0.0
        %2207 = vmatprep.subr.mxu0 0.0
        %2208 = vmatpush1.msra.mxu0 0.0
        %2209 = vmatprep.subr.mxu0 0.0
        %2210 = vmatpush1.msra.mxu0 0.0
        %2211 = vmatprep.subr.mxu0 0.0
        %2212 = vmatpush1.msra.mxu0 0.0
        %2213 = vmatprep.subr.mxu0 0.0
        %2214 = vmatpush1.msra.mxu0 %v2178
        %2215 = vmatprep.subr.mxu0 0.0
        %2216 = vmatpush1.msra.mxu0 %v2177
        %2217 = vmatprep.subr.mxu0 0.0
        %2218 = vmatpush1.msra.mxu0 %v2176
        %2219 = vmatprep.subr.mxu0 0.0
        %2220 = vmatpush1.msra.mxu0 %v2175
        %2221 = vmatprep.subr.mxu0 0.0
        %2222 = vmatpush2.msra.mxu0 0.0
        %2223 = vmatprep.subr.mxu0 0.0
        %2224 = vmatpush2.msra.mxu0 0.0
        %2225 = vmatprep.subr.mxu0 0.0
        %2226 = vmatpush2.msra.mxu0 0.0
        %2227 = vmatprep.subr.mxu0 0.0
        %2228 = vmatpush2.msra.mxu0 0.0
        %2229 = vmatprep.subr.mxu0 0.0
        %2230 = vmatpush2.msra.mxu0 0.0
        %2231 = vmatprep.subr.mxu0 0.0
        %2232 = vmatpush2.msra.mxu0 0.0
        %2233 = vmatprep.subr.mxu0 0.0
        %2234 = vmatpush2.msra.mxu0 0.0
        %2235 = vmatprep.subr.mxu0 0.0
        %2236 = vmatpush2.msra.mxu0 0.0
        %2237 = vmatprep.subr.mxu0 0.0
        %2238 = vmatpush2.msra.mxu0 0.0
        %2239 = vmatprep.subr.mxu0 0.0
        %2240 = vmatpush2.msra.mxu0 0.0
        %2241 = vmatprep.subr.mxu0 0.0
        %2242 = vmatpush2.msra.mxu0 0.0
        %2243 = vmatprep.subr.mxu0 0.0
        %2244 = vmatpush2.msra.mxu0 0.0
        %2245 = vmatprep.subr.mxu0 0.0
        %2246 = vmatpush2.msra.mxu0 0.0
        %2247 = vmatprep.subr.mxu0 0.0
        %2248 = vmatpush2.msra.mxu0 0.0
        %2249 = vmatprep.subr.mxu0 0.0
        %2250 = vmatpush2.msra.mxu0 0.0
        %2251 = vmatprep.subr.mxu0 0.0
        %2252 = vmatpush2.msra.mxu0 0.0
        %2253 = vmatprep.mubr.f32.mxu0 0.0
        %2254 = vmatmul.mubr.f32.gmra.mxu0 %v2187
        %v2255 = vpop.f32.mrf.mxu0
        %v2256 = vadd.f32 %v2184, %v2255
        %v2257 = vpop.f32.mrf.mxu0
        %2258 = vdwg.mxu0
        %vm2259 = vcmask 61440
        %2260 = vst.msk [vmem:[%s1247] sm:$0x1f] %vm2259, %v2256
        %v2261 = vmul.f32 %v2256, 0.5
        %v2262 = vsel %vm2259, %v2261, -inf
        %2263 = vmax.xlane.f32.xlu0 %v2262
        %v2264 = vpop.xlane.xlu0 %2263
        %v2265 = vsub.f32 %v2261, %v2264
        %v2266 = vmul.f32 %v2265, 1.442695
        %v2267 = vpow.pop %v2266
        %v2268 = vsel %vm2259, %v2267, 0.0
        %2269 = vadd.xlane.f32.xlu0 %v2268
        %v2270 = vpop.xlane.xlu0 %2269
        %v2271 = vrcp.pop %v2270
        %v2272 = vmul.f32 %v2267, %v2271
        %v2273 = vld [vmem:[%s25] sm:$0xff]
        %s2274 = scalar_lea.vmem %s21, 32
        %v2275 = vld [vmem:[%s2274] sm:$0xff]
        %v2276 = vld [vmem:[%s2274 + $0x8] sm:$0xff]
        %v2277 = vld [vmem:[%s2274 + $0x10] sm:$0xff]
        %v2278 = vld [vmem:[%s2274 + $0x18] sm:$0xff]
        %s2279 = scalar_lea.vmem %s23, 1
        %v2280 = vld [vmem:[%s2279] sm:$0x1]
        %v2282 = vlaneseq
        %v2283 = vshrl.u32 %v2282, 7
        %v2284 = vsub.s32 0, %v2283
        %v2285 = vrot.slane %v2280, %v2284
        %2287 = vmatprep.subr.mxu0 0.0
        %2288 = vmatpush1.msra.mxu0 0.0
        %2289 = vmatprep.subr.mxu0 0.0
        %2290 = vmatpush1.msra.mxu0 0.0
        %2291 = vmatprep.subr.mxu0 0.0
        %2292 = vmatpush1.msra.mxu0 0.0
        %2293 = vmatprep.subr.mxu0 0.0
        %2294 = vmatpush1.msra.mxu0 0.0
        %2295 = vmatprep.subr.mxu0 0.0
        %2296 = vmatpush1.msra.mxu0 0.0
        %2297 = vmatprep.subr.mxu0 0.0
        %2298 = vmatpush1.msra.mxu0 0.0
        %2299 = vmatprep.subr.mxu0 0.0
        %2300 = vmatpush1.msra.mxu0 0.0
        %2301 = vmatprep.subr.mxu0 0.0
        %2302 = vmatpush1.msra.mxu0 0.0
        %2303 = vmatprep.subr.mxu0 0.0
        %2304 = vmatpush1.msra.mxu0 0.0
        %2305 = vmatprep.subr.mxu0 0.0
        %2306 = vmatpush1.msra.mxu0 0.0
        %2307 = vmatprep.subr.mxu0 0.0
        %2308 = vmatpush1.msra.mxu0 0.0
        %2309 = vmatprep.subr.mxu0 0.0
        %2310 = vmatpush1.msra.mxu0 0.0
        %2311 = vmatprep.subr.mxu0 0.0
        %2312 = vmatpush1.msra.mxu0 %v2278
        %2313 = vmatprep.subr.mxu0 0.0
        %2314 = vmatpush1.msra.mxu0 %v2277
        %2315 = vmatprep.subr.mxu0 0.0
        %2316 = vmatpush1.msra.mxu0 %v2276
        %2317 = vmatprep.subr.mxu0 0.0
        %2318 = vmatpush1.msra.mxu0 %v2275
        %2319 = vmatprep.subr.mxu0 0.0
        %2320 = vmatpush2.msra.mxu0 0.0
        %2321 = vmatprep.subr.mxu0 0.0
        %2322 = vmatpush2.msra.mxu0 0.0
        %2323 = vmatprep.subr.mxu0 0.0
        %2324 = vmatpush2.msra.mxu0 0.0
        %2325 = vmatprep.subr.mxu0 0.0
        %2326 = vmatpush2.msra.mxu0 0.0
        %2327 = vmatprep.subr.mxu0 0.0
        %2328 = vmatpush2.msra.mxu0 0.0
        %2329 = vmatprep.subr.mxu0 0.0
        %2330 = vmatpush2.msra.mxu0 0.0
        %2331 = vmatprep.subr.mxu0 0.0
        %2332 = vmatpush2.msra.mxu0 0.0
        %2333 = vmatprep.subr.mxu0 0.0
        %2334 = vmatpush2.msra.mxu0 0.0
        %2335 = vmatprep.subr.mxu0 0.0
        %2336 = vmatpush2.msra.mxu0 0.0
        %2337 = vmatprep.subr.mxu0 0.0
        %2338 = vmatpush2.msra.mxu0 0.0
        %2339 = vmatprep.subr.mxu0 0.0
        %2340 = vmatpush2.msra.mxu0 0.0
        %2341 = vmatprep.subr.mxu0 0.0
        %2342 = vmatpush2.msra.mxu0 0.0
        %2343 = vmatprep.subr.mxu0 0.0
        %2344 = vmatpush2.msra.mxu0 0.0
        %2345 = vmatprep.subr.mxu0 0.0
        %2346 = vmatpush2.msra.mxu0 0.0
        %2347 = vmatprep.subr.mxu0 0.0
        %2348 = vmatpush2.msra.mxu0 0.0
        %2349 = vmatprep.subr.mxu0 0.0
        %2350 = vmatpush2.msra.mxu0 0.0
        %2351 = vmatprep.mubr.f32.mxu0 0.0
        %2352 = vmatmul.mubr.f32.gmra.mxu0 %v2187
        %v2353 = vpop.f32.mrf.mxu0
        %v2354 = vadd.f32 %v2285, %v2353
        %v2355 = vpop.f32.mrf.mxu0
        %2356 = vdwg.mxu0
        %s2357 = scalar_lea.vmem %s1247, 8
        %2358 = vst.msk [vmem:[%s2357] sm:$0x1f] %vm2259, %v2354
        %v2359 = vmul.f32 %v2354, 0.5
        %v2360 = vsel %vm2259, %v2359, -inf
        %2361 = vmax.xlane.f32.xlu0 %v2360
        %v2362 = vpop.xlane.xlu0 %2361
        %v2363 = vsub.f32 %v2359, %v2362
        %v2364 = vmul.f32 %v2363, 1.442695
        %v2365 = vpow.pop %v2364
        %v2366 = vsel %vm2259, %v2365, 0.0
        %2367 = vadd.xlane.f32.xlu0 %v2366
        %v2368 = vpop.xlane.xlu0 %2367
        %v2369 = vrcp.pop %v2368
        %v2370 = vmul.f32 %v2365, %v2369
        %s2371 = scalar_lea.vmem %s25, 8
        %v2372 = vld [vmem:[%s2371] sm:$0xff]
        %vm2373 = vcmask 64512
        %v2375 = vsel %vm2373, %v2370, 0
        %2377 = vmatprep.subr.mxu0 0.0
        %2378 = vmatpush1.msra.mxu0 0.0
        %2379 = vmatprep.subr.mxu0 0.0
        %2380 = vmatpush1.msra.mxu0 0.0
        %2381 = vmatprep.subr.mxu0 0.0
        %2382 = vmatpush1.msra.mxu0 0.0
        %2383 = vmatprep.subr.mxu0 0.0
        %2384 = vmatpush1.msra.mxu0 0.0
        %2385 = vmatprep.subr.mxu0 0.0
        %2386 = vmatpush1.msra.mxu0 0.0
        %2387 = vmatprep.subr.mxu0 0.0
        %2388 = vmatpush1.msra.mxu0 0.0
        %2389 = vmatprep.subr.mxu0 0.0
        %2390 = vmatpush1.msra.mxu0 0.0
        %2391 = vmatprep.subr.mxu0 0.0
        %2392 = vmatpush1.msra.mxu0 0.0
        %2393 = vmatprep.subr.mxu0 0.0
        %2394 = vmatpush1.msra.mxu0 0.0
        %2395 = vmatprep.subr.mxu0 0.0
        %2396 = vmatpush1.msra.mxu0 0.0
        %2397 = vmatprep.subr.mxu0 0.0
        %2398 = vmatpush1.msra.mxu0 0.0
        %2399 = vmatprep.subr.mxu0 0.0
        %2400 = vmatpush1.msra.mxu0 0.0
        %2401 = vmatprep.subr.mxu0 0.0
        %2402 = vmatpush1.msra.mxu0 0.0
        %2403 = vmatprep.subr.mxu0 0.0
        %2404 = vmatpush1.msra.mxu0 0.0
        %2405 = vmatprep.subr.mxu0 0.0
        %2406 = vmatpush1.msra.mxu0 0.0
        %2407 = vmatprep.subr.mxu0 0.0
        %2408 = vmatpush1.msra.mxu0 %v2372
        %2409 = vmatprep.subr.mxu0 0.0
        %2410 = vmatpush2.msra.mxu0 0.0
        %2411 = vmatprep.subr.mxu0 0.0
        %2412 = vmatpush2.msra.mxu0 0.0
        %2413 = vmatprep.subr.mxu0 0.0
        %2414 = vmatpush2.msra.mxu0 0.0
        %2415 = vmatprep.subr.mxu0 0.0
        %2416 = vmatpush2.msra.mxu0 0.0
        %2417 = vmatprep.subr.mxu0 0.0
        %2418 = vmatpush2.msra.mxu0 0.0
        %2419 = vmatprep.subr.mxu0 0.0
        %2420 = vmatpush2.msra.mxu0 0.0
        %2421 = vmatprep.subr.mxu0 0.0
        %2422 = vmatpush2.msra.mxu0 0.0
        %2423 = vmatprep.subr.mxu0 0.0
        %2424 = vmatpush2.msra.mxu0 0.0
        %2425 = vmatprep.subr.mxu0 0.0
        %2426 = vmatpush2.msra.mxu0 0.0
        %2427 = vmatprep.subr.mxu0 0.0
        %2428 = vmatpush2.msra.mxu0 0.0
        %2429 = vmatprep.subr.mxu0 0.0
        %2430 = vmatpush2.msra.mxu0 0.0
        %2431 = vmatprep.subr.mxu0 0.0
        %2432 = vmatpush2.msra.mxu0 0.0
        %2433 = vmatprep.subr.mxu0 0.0
        %2434 = vmatpush2.msra.mxu0 0.0
        %2435 = vmatprep.subr.mxu0 0.0
        %2436 = vmatpush2.msra.mxu0 0.0
        %2437 = vmatprep.subr.mxu0 0.0
        %2438 = vmatpush2.msra.mxu0 0.0
        %2439 = vmatprep.subr.mxu0 0.0
        %2440 = vmatpush2.msra.mxu0 0.0
        %2441 = vmatprep.mubr.f32.mxu0 0.0
        %2442 = vmatmul.mubr.f32.gmra.mxu0 %v2375
        %v2443 = vpop.f32.mrf.mxu0
        %v2444 = vadd.f32 0.0, %v2443
        %v2445 = vpop.f32.mrf.mxu0
        %2446 = vdwg.mxu0
        %v2448 = vsel %vm2373, %v2272, 0
        %2450 = vmatprep.subr.mxu0 0.0
        %2451 = vmatpush1.msra.mxu0 0.0
        %2452 = vmatprep.subr.mxu0 0.0
        %2453 = vmatpush1.msra.mxu0 0.0
        %2454 = vmatprep.subr.mxu0 0.0
        %2455 = vmatpush1.msra.mxu0 0.0
        %2456 = vmatprep.subr.mxu0 0.0
        %2457 = vmatpush1.msra.mxu0 0.0
        %2458 = vmatprep.subr.mxu0 0.0
        %2459 = vmatpush1.msra.mxu0 0.0
        %2460 = vmatprep.subr.mxu0 0.0
        %2461 = vmatpush1.msra.mxu0 0.0
        %2462 = vmatprep.subr.mxu0 0.0
        %2463 = vmatpush1.msra.mxu0 0.0
        %2464 = vmatprep.subr.mxu0 0.0
        %2465 = vmatpush1.msra.mxu0 0.0
        %2466 = vmatprep.subr.mxu0 0.0
        %2467 = vmatpush1.msra.mxu0 0.0
        %2468 = vmatprep.subr.mxu0 0.0
        %2469 = vmatpush1.msra.mxu0 0.0
        %2470 = vmatprep.subr.mxu0 0.0
        %2471 = vmatpush1.msra.mxu0 0.0
        %2472 = vmatprep.subr.mxu0 0.0
        %2473 = vmatpush1.msra.mxu0 0.0
        %2474 = vmatprep.subr.mxu0 0.0
        %2475 = vmatpush1.msra.mxu0 0.0
        %2476 = vmatprep.subr.mxu0 0.0
        %2477 = vmatpush1.msra.mxu0 0.0
        %2478 = vmatprep.subr.mxu0 0.0
        %2479 = vmatpush1.msra.mxu0 0.0
        %2480 = vmatprep.subr.mxu0 0.0
        %2481 = vmatpush1.msra.mxu0 %v2273
        %2482 = vmatprep.subr.mxu0 0.0
        %2483 = vmatpush2.msra.mxu0 0.0
        %2484 = vmatprep.subr.mxu0 0.0
        %2485 = vmatpush2.msra.mxu0 0.0
        %2486 = vmatprep.subr.mxu0 0.0
        %2487 = vmatpush2.msra.mxu0 0.0
        %2488 = vmatprep.subr.mxu0 0.0
        %2489 = vmatpush2.msra.mxu0 0.0
        %2490 = vmatprep.subr.mxu0 0.0
        %2491 = vmatpush2.msra.mxu0 0.0
        %2492 = vmatprep.subr.mxu0 0.0
        %2493 = vmatpush2.msra.mxu0 0.0
        %2494 = vmatprep.subr.mxu0 0.0
        %2495 = vmatpush2.msra.mxu0 0.0
        %2496 = vmatprep.subr.mxu0 0.0
        %2497 = vmatpush2.msra.mxu0 0.0
        %2498 = vmatprep.subr.mxu0 0.0
        %2499 = vmatpush2.msra.mxu0 0.0
        %2500 = vmatprep.subr.mxu0 0.0
        %2501 = vmatpush2.msra.mxu0 0.0
        %2502 = vmatprep.subr.mxu0 0.0
        %2503 = vmatpush2.msra.mxu0 0.0
        %2504 = vmatprep.subr.mxu0 0.0
        %2505 = vmatpush2.msra.mxu0 0.0
        %2506 = vmatprep.subr.mxu0 0.0
        %2507 = vmatpush2.msra.mxu0 0.0
        %2508 = vmatprep.subr.mxu0 0.0
        %2509 = vmatpush2.msra.mxu0 0.0
        %2510 = vmatprep.subr.mxu0 0.0
        %2511 = vmatpush2.msra.mxu0 0.0
        %2512 = vmatprep.subr.mxu0 0.0
        %2513 = vmatpush2.msra.mxu0 0.0
        %2514 = vmatprep.mubr.f32.mxu0 0.0
        %2515 = vmatmul.mubr.f32.gmra.mxu0 %v2448
        %v2516 = vpop.f32.mrf.mxu0
        %v2517 = vadd.f32 %v2444, %v2516
        %v2518 = vpop.f32.mrf.mxu0
        %2519 = vdwg.mxu0
        %s2520 = scalar_lea.vmem %s21, 64
        %v2521 = vld [vmem:[%s2520] sm:$0xff]
        %v2522 = vld [vmem:[%s2520 + $0x8] sm:$0xff]
        %v2523 = vld [vmem:[%s2520 + $0x10] sm:$0xff]
        %v2524 = vld [vmem:[%s2520 + $0x18] sm:$0xff]
        %s2525 = scalar_lea.vmem %s23, 2
        %v2526 = vld [vmem:[%s2525] sm:$0x1]
        %v2528 = vlaneseq
        %v2529 = vshrl.u32 %v2528, 7
        %v2530 = vsub.s32 0, %v2529
        %v2531 = vrot.slane %v2526, %v2530
        %2533 = vmatprep.subr.mxu0 0.0
        %2534 = vmatpush1.msra.mxu0 0.0
        %2535 = vmatprep.subr.mxu0 0.0
        %2536 = vmatpush1.msra.mxu0 0.0
        %2537 = vmatprep.subr.mxu0 0.0
        %2538 = vmatpush1.msra.mxu0 0.0
        %2539 = vmatprep.subr.mxu0 0.0
        %2540 = vmatpush1.msra.mxu0 0.0
        %2541 = vmatprep.subr.mxu0 0.0
        %2542 = vmatpush1.msra.mxu0 0.0
        %2543 = vmatprep.subr.mxu0 0.0
        %2544 = vmatpush1.msra.mxu0 0.0
        %2545 = vmatprep.subr.mxu0 0.0
        %2546 = vmatpush1.msra.mxu0 0.0
        %2547 = vmatprep.subr.mxu0 0.0
        %2548 = vmatpush1.msra.mxu0 0.0
        %2549 = vmatprep.subr.mxu0 0.0
        %2550 = vmatpush1.msra.mxu0 0.0
        %2551 = vmatprep.subr.mxu0 0.0
        %2552 = vmatpush1.msra.mxu0 0.0
        %2553 = vmatprep.subr.mxu0 0.0
        %2554 = vmatpush1.msra.mxu0 0.0
        %2555 = vmatprep.subr.mxu0 0.0
        %2556 = vmatpush1.msra.mxu0 0.0
        %2557 = vmatprep.subr.mxu0 0.0
        %2558 = vmatpush1.msra.mxu0 %v2524
        %2559 = vmatprep.subr.mxu0 0.0
        %2560 = vmatpush1.msra.mxu0 %v2523
        %2561 = vmatprep.subr.mxu0 0.0
        %2562 = vmatpush1.msra.mxu0 %v2522
        %2563 = vmatprep.subr.mxu0 0.0
        %2564 = vmatpush1.msra.mxu0 %v2521
        %2565 = vmatprep.subr.mxu0 0.0
        %2566 = vmatpush2.msra.mxu0 0.0
        %2567 = vmatprep.subr.mxu0 0.0
        %2568 = vmatpush2.msra.mxu0 0.0
        %2569 = vmatprep.subr.mxu0 0.0
        %2570 = vmatpush2.msra.mxu0 0.0
        %2571 = vmatprep.subr.mxu0 0.0
        %2572 = vmatpush2.msra.mxu0 0.0
        %2573 = vmatprep.subr.mxu0 0.0
        %2574 = vmatpush2.msra.mxu0 0.0
        %2575 = vmatprep.subr.mxu0 0.0
        %2576 = vmatpush2.msra.mxu0 0.0
        %2577 = vmatprep.subr.mxu0 0.0
        %2578 = vmatpush2.msra.mxu0 0.0
        %2579 = vmatprep.subr.mxu0 0.0
        %2580 = vmatpush2.msra.mxu0 0.0
        %2581 = vmatprep.subr.mxu0 0.0
        %2582 = vmatpush2.msra.mxu0 0.0
        %2583 = vmatprep.subr.mxu0 0.0
        %2584 = vmatpush2.msra.mxu0 0.0
        %2585 = vmatprep.subr.mxu0 0.0
        %2586 = vmatpush2.msra.mxu0 0.0
        %2587 = vmatprep.subr.mxu0 0.0
        %2588 = vmatpush2.msra.mxu0 0.0
        %2589 = vmatprep.subr.mxu0 0.0
        %2590 = vmatpush2.msra.mxu0 0.0
        %2591 = vmatprep.subr.mxu0 0.0
        %2592 = vmatpush2.msra.mxu0 0.0
        %2593 = vmatprep.subr.mxu0 0.0
        %2594 = vmatpush2.msra.mxu0 0.0
        %2595 = vmatprep.subr.mxu0 0.0
        %2596 = vmatpush2.msra.mxu0 0.0
        %2597 = vmatprep.mubr.f32.mxu0 0.0
        %2598 = vmatmul.mubr.f32.gmra.mxu0 %v2187
        %v2599 = vpop.f32.mrf.mxu0
        %v2600 = vadd.f32 %v2531, %v2599
        %v2601 = vpop.f32.mrf.mxu0
        %2602 = vdwg.mxu0
        %s2603 = scalar_lea.vmem %s1247, 16
        %2604 = vst.msk [vmem:[%s2603] sm:$0x1f] %vm2259, %v2600
        %v2605 = vmul.f32 %v2600, 0.5
        %v2606 = vsel %vm2259, %v2605, -inf
        %2607 = vmax.xlane.f32.xlu0 %v2606
        %v2608 = vpop.xlane.xlu0 %2607
        %v2609 = vsub.f32 %v2605, %v2608
        %v2610 = vmul.f32 %v2609, 1.442695
        %v2611 = vpow.pop %v2610
        %v2612 = vsel %vm2259, %v2611, 0.0
        %2613 = vadd.xlane.f32.xlu0 %v2612
        %v2614 = vpop.xlane.xlu0 %2613
        %v2615 = vrcp.pop %v2614
        %v2616 = vmul.f32 %v2611, %v2615
        %s2617 = scalar_lea.vmem %s25, 16
        %v2618 = vld [vmem:[%s2617] sm:$0xff]
        %v2620 = vsel %vm2373, %v2616, 0
        %2622 = vmatprep.subr.mxu0 0.0
        %2623 = vmatpush1.msra.mxu0 0.0
        %2624 = vmatprep.subr.mxu0 0.0
        %2625 = vmatpush1.msra.mxu0 0.0
        %2626 = vmatprep.subr.mxu0 0.0
        %2627 = vmatpush1.msra.mxu0 0.0
        %2628 = vmatprep.subr.mxu0 0.0
        %2629 = vmatpush1.msra.mxu0 0.0
        %2630 = vmatprep.subr.mxu0 0.0
        %2631 = vmatpush1.msra.mxu0 0.0
        %2632 = vmatprep.subr.mxu0 0.0
        %2633 = vmatpush1.msra.mxu0 0.0
        %2634 = vmatprep.subr.mxu0 0.0
        %2635 = vmatpush1.msra.mxu0 0.0
        %2636 = vmatprep.subr.mxu0 0.0
        %2637 = vmatpush1.msra.mxu0 0.0
        %2638 = vmatprep.subr.mxu0 0.0
        %2639 = vmatpush1.msra.mxu0 0.0
        %2640 = vmatprep.subr.mxu0 0.0
        %2641 = vmatpush1.msra.mxu0 0.0
        %2642 = vmatprep.subr.mxu0 0.0
        %2643 = vmatpush1.msra.mxu0 0.0
        %2644 = vmatprep.subr.mxu0 0.0
        %2645 = vmatpush1.msra.mxu0 0.0
        %2646 = vmatprep.subr.mxu0 0.0
        %2647 = vmatpush1.msra.mxu0 0.0
        %2648 = vmatprep.subr.mxu0 0.0
        %2649 = vmatpush1.msra.mxu0 0.0
        %2650 = vmatprep.subr.mxu0 0.0
        %2651 = vmatpush1.msra.mxu0 0.0
        %2652 = vmatprep.subr.mxu0 0.0
        %2653 = vmatpush1.msra.mxu0 %v2618
        %2654 = vmatprep.subr.mxu0 0.0
        %2655 = vmatpush2.msra.mxu0 0.0
        %2656 = vmatprep.subr.mxu0 0.0
        %2657 = vmatpush2.msra.mxu0 0.0
        %2658 = vmatprep.subr.mxu0 0.0
        %2659 = vmatpush2.msra.mxu0 0.0
        %2660 = vmatprep.subr.mxu0 0.0
        %2661 = vmatpush2.msra.mxu0 0.0
        %2662 = vmatprep.subr.mxu0 0.0
        %2663 = vmatpush2.msra.mxu0 0.0
        %2664 = vmatprep.subr.mxu0 0.0
        %2665 = vmatpush2.msra.mxu0 0.0
        %2666 = vmatprep.subr.mxu0 0.0
        %2667 = vmatpush2.msra.mxu0 0.0
        %2668 = vmatprep.subr.mxu0 0.0
        %2669 = vmatpush2.msra.mxu0 0.0
        %2670 = vmatprep.subr.mxu0 0.0
        %2671 = vmatpush2.msra.mxu0 0.0
        %2672 = vmatprep.subr.mxu0 0.0
        %2673 = vmatpush2.msra.mxu0 0.0
        %2674 = vmatprep.subr.mxu0 0.0
        %2675 = vmatpush2.msra.mxu0 0.0
        %2676 = vmatprep.subr.mxu0 0.0
        %2677 = vmatpush2.msra.mxu0 0.0
        %2678 = vmatprep.subr.mxu0 0.0
        %2679 = vmatpush2.msra.mxu0 0.0
        %2680 = vmatprep.subr.mxu0 0.0
        %2681 = vmatpush2.msra.mxu0 0.0
        %2682 = vmatprep.subr.mxu0 0.0
        %2683 = vmatpush2.msra.mxu0 0.0
        %2684 = vmatprep.subr.mxu0 0.0
        %2685 = vmatpush2.msra.mxu0 0.0
        %2686 = vmatprep.mubr.f32.mxu0 0.0
        %2687 = vmatmul.mubr.f32.gmra.mxu0 %v2620
        %v2688 = vpop.f32.mrf.mxu0
        %v2689 = vadd.f32 0.0, %v2688
        %v2690 = vpop.f32.mrf.mxu0
        %2691 = vdwg.mxu0
        %v2692 = vadd.f32 %v2517, %v2689
        %s2693 = scalar_lea.vmem %s21, 96
        %v2694 = vld [vmem:[%s2693] sm:$0xff]
        %v2695 = vld [vmem:[%s2693 + $0x8] sm:$0xff]
        %v2696 = vld [vmem:[%s2693 + $0x10] sm:$0xff]
        %v2697 = vld [vmem:[%s2693 + $0x18] sm:$0xff]
        %s2698 = scalar_lea.vmem %s23, 3
        %v2699 = vld [vmem:[%s2698] sm:$0x1]
        %v2701 = vlaneseq
        %v2702 = vshrl.u32 %v2701, 7
        %v2703 = vsub.s32 0, %v2702
        %v2704 = vrot.slane %v2699, %v2703
        %2706 = vmatprep.subr.mxu0 0.0
        %2707 = vmatpush1.msra.mxu0 0.0
        %2708 = vmatprep.subr.mxu0 0.0
        %2709 = vmatpush1.msra.mxu0 0.0
        %2710 = vmatprep.subr.mxu0 0.0
        %2711 = vmatpush1.msra.mxu0 0.0
        %2712 = vmatprep.subr.mxu0 0.0
        %2713 = vmatpush1.msra.mxu0 0.0
        %2714 = vmatprep.subr.mxu0 0.0
        %2715 = vmatpush1.msra.mxu0 0.0
        %2716 = vmatprep.subr.mxu0 0.0
        %2717 = vmatpush1.msra.mxu0 0.0
        %2718 = vmatprep.subr.mxu0 0.0
        %2719 = vmatpush1.msra.mxu0 0.0
        %2720 = vmatprep.subr.mxu0 0.0
        %2721 = vmatpush1.msra.mxu0 0.0
        %2722 = vmatprep.subr.mxu0 0.0
        %2723 = vmatpush1.msra.mxu0 0.0
        %2724 = vmatprep.subr.mxu0 0.0
        %2725 = vmatpush1.msra.mxu0 0.0
        %2726 = vmatprep.subr.mxu0 0.0
        %2727 = vmatpush1.msra.mxu0 0.0
        %2728 = vmatprep.subr.mxu0 0.0
        %2729 = vmatpush1.msra.mxu0 0.0
        %2730 = vmatprep.subr.mxu0 0.0
        %2731 = vmatpush1.msra.mxu0 %v2697
        %2732 = vmatprep.subr.mxu0 0.0
        %2733 = vmatpush1.msra.mxu0 %v2696
        %2734 = vmatprep.subr.mxu0 0.0
        %2735 = vmatpush1.msra.mxu0 %v2695
        %2736 = vmatprep.subr.mxu0 0.0
        %2737 = vmatpush1.msra.mxu0 %v2694
        %2738 = vmatprep.subr.mxu0 0.0
        %2739 = vmatpush2.msra.mxu0 0.0
        %2740 = vmatprep.subr.mxu0 0.0
        %2741 = vmatpush2.msra.mxu0 0.0
        %2742 = vmatprep.subr.mxu0 0.0
        %2743 = vmatpush2.msra.mxu0 0.0
        %2744 = vmatprep.subr.mxu0 0.0
        %2745 = vmatpush2.msra.mxu0 0.0
        %2746 = vmatprep.subr.mxu0 0.0
        %2747 = vmatpush2.msra.mxu0 0.0
        %2748 = vmatprep.subr.mxu0 0.0
        %2749 = vmatpush2.msra.mxu0 0.0
        %2750 = vmatprep.subr.mxu0 0.0
        %2751 = vmatpush2.msra.mxu0 0.0
        %2752 = vmatprep.subr.mxu0 0.0
        %2753 = vmatpush2.msra.mxu0 0.0
        %2754 = vmatprep.subr.mxu0 0.0
        %2755 = vmatpush2.msra.mxu0 0.0
        %2756 = vmatprep.subr.mxu0 0.0
        %2757 = vmatpush2.msra.mxu0 0.0
        %2758 = vmatprep.subr.mxu0 0.0
        %2759 = vmatpush2.msra.mxu0 0.0
        %2760 = vmatprep.subr.mxu0 0.0
        %2761 = vmatpush2.msra.mxu0 0.0
        %2762 = vmatprep.subr.mxu0 0.0
        %2763 = vmatpush2.msra.mxu0 0.0
        %2764 = vmatprep.subr.mxu0 0.0
        %2765 = vmatpush2.msra.mxu0 0.0
        %2766 = vmatprep.subr.mxu0 0.0
        %2767 = vmatpush2.msra.mxu0 0.0
        %2768 = vmatprep.subr.mxu0 0.0
        %2769 = vmatpush2.msra.mxu0 0.0
        %2770 = vmatprep.mubr.f32.mxu0 0.0
        %2771 = vmatmul.mubr.f32.gmra.mxu0 %v2187
        %v2772 = vpop.f32.mrf.mxu0
        %v2773 = vadd.f32 %v2704, %v2772
        %v2774 = vpop.f32.mrf.mxu0
        %2775 = vdwg.mxu0
        %s2776 = scalar_lea.vmem %s1247, 24
        %2777 = vst.msk [vmem:[%s2776] sm:$0x1f] %vm2259, %v2773
        %v2778 = vmul.f32 %v2773, 0.5
        %v2779 = vsel %vm2259, %v2778, -inf
        %2780 = vmax.xlane.f32.xlu0 %v2779
        %v2781 = vpop.xlane.xlu0 %2780
        %v2782 = vsub.f32 %v2778, %v2781
        %v2783 = vmul.f32 %v2782, 1.442695
        %v2784 = vpow.pop %v2783
        %v2785 = vsel %vm2259, %v2784, 0.0
        %2786 = vadd.xlane.f32.xlu0 %v2785
        %v2787 = vpop.xlane.xlu0 %2786
        %v2788 = vrcp.pop %v2787
        %v2789 = vmul.f32 %v2784, %v2788
        %s2790 = scalar_lea.vmem %s25, 24
        %v2791 = vld [vmem:[%s2790] sm:$0xff]
        %v2793 = vsel %vm2373, %v2789, 0
        %2795 = vmatprep.subr.mxu0 0.0
        %2796 = vmatpush1.msra.mxu0 0.0
        %2797 = vmatprep.subr.mxu0 0.0
        %2798 = vmatpush1.msra.mxu0 0.0
        %2799 = vmatprep.subr.mxu0 0.0
        %2800 = vmatpush1.msra.mxu0 0.0
        %2801 = vmatprep.subr.mxu0 0.0
        %2802 = vmatpush1.msra.mxu0 0.0
        %2803 = vmatprep.subr.mxu0 0.0
        %2804 = vmatpush1.msra.mxu0 0.0
        %2805 = vmatprep.subr.mxu0 0.0
        %2806 = vmatpush1.msra.mxu0 0.0
        %2807 = vmatprep.subr.mxu0 0.0
        %2808 = vmatpush1.msra.mxu0 0.0
        %2809 = vmatprep.subr.mxu0 0.0
        %2810 = vmatpush1.msra.mxu0 0.0
        %2811 = vmatprep.subr.mxu0 0.0
        %2812 = vmatpush1.msra.mxu0 0.0
        %2813 = vmatprep.subr.mxu0 0.0
        %2814 = vmatpush1.msra.mxu0 0.0
        %2815 = vmatprep.subr.mxu0 0.0
        %2816 = vmatpush1.msra.mxu0 0.0
        %2817 = vmatprep.subr.mxu0 0.0
        %2818 = vmatpush1.msra.mxu0 0.0
        %2819 = vmatprep.subr.mxu0 0.0
        %2820 = vmatpush1.msra.mxu0 0.0
        %2821 = vmatprep.subr.mxu0 0.0
        %2822 = vmatpush1.msra.mxu0 0.0
        %2823 = vmatprep.subr.mxu0 0.0
        %2824 = vmatpush1.msra.mxu0 0.0
        %2825 = vmatprep.subr.mxu0 0.0
        %2826 = vmatpush1.msra.mxu0 %v2791
        %2827 = vmatprep.subr.mxu0 0.0
        %2828 = vmatpush2.msra.mxu0 0.0
        %2829 = vmatprep.subr.mxu0 0.0
        %2830 = vmatpush2.msra.mxu0 0.0
        %2831 = vmatprep.subr.mxu0 0.0
        %2832 = vmatpush2.msra.mxu0 0.0
        %2833 = vmatprep.subr.mxu0 0.0
        %2834 = vmatpush2.msra.mxu0 0.0
        %2835 = vmatprep.subr.mxu0 0.0
        %2836 = vmatpush2.msra.mxu0 0.0
        %2837 = vmatprep.subr.mxu0 0.0
        %2838 = vmatpush2.msra.mxu0 0.0
        %2839 = vmatprep.subr.mxu0 0.0
        %2840 = vmatpush2.msra.mxu0 0.0
        %2841 = vmatprep.subr.mxu0 0.0
        %2842 = vmatpush2.msra.mxu0 0.0
        %2843 = vmatprep.subr.mxu0 0.0
        %2844 = vmatpush2.msra.mxu0 0.0
        %2845 = vmatprep.subr.mxu0 0.0
        %2846 = vmatpush2.msra.mxu0 0.0
        %2847 = vmatprep.subr.mxu0 0.0
        %2848 = vmatpush2.msra.mxu0 0.0
        %2849 = vmatprep.subr.mxu0 0.0
        %2850 = vmatpush2.msra.mxu0 0.0
        %2851 = vmatprep.subr.mxu0 0.0
        %2852 = vmatpush2.msra.mxu0 0.0
        %2853 = vmatprep.subr.mxu0 0.0
        %2854 = vmatpush2.msra.mxu0 0.0
        %2855 = vmatprep.subr.mxu0 0.0
        %2856 = vmatpush2.msra.mxu0 0.0
        %2857 = vmatprep.subr.mxu0 0.0
        %2858 = vmatpush2.msra.mxu0 0.0
        %2859 = vmatprep.mubr.f32.mxu0 0.0
        %2860 = vmatmul.mubr.f32.gmra.mxu0 %v2793
        %v2861 = vpop.f32.mrf.mxu0
        %v2862 = vadd.f32 0.0, %v2861
        %v2863 = vpop.f32.mrf.mxu0
        %2864 = vdwg.mxu0
        %v2865 = vadd.f32 %v2692, %v2862
        %v2866 = vmul.f32 %v2865, %v2170
        %2867 = vst.msk [vmem:[%s1242] sm:$0x1f] %vm2173, %v2866
        %v2868 = vld [vmem:[%s27] sm:$0xf]
        %v2869 = vld [vmem:[%s29] sm:$0xff]
        %v2870 = vld [vmem:[%s29 + $0x8] sm:$0xff]
        %v2871 = vld [vmem:[%s29 + $0x10] sm:$0xff]
        %v2872 = vld [vmem:[%s29 + $0x18] sm:$0xff]
        %v2873 = vld [vmem:[%s31] sm:$0x1]
        %v2875 = vlaneseq
        %v2876 = vshrl.u32 %v2875, 7
        %v2877 = vsub.s32 0, %v2876
        %v2878 = vrot.slane %v2873, %v2877
        %v2881 = vsel %vm1262, %v2868, 0
        %2883 = vmatprep.subr.mxu0 0.0
        %2884 = vmatpush1.msra.mxu0 0.0
        %2885 = vmatprep.subr.mxu0 0.0
        %2886 = vmatpush1.msra.mxu0 0.0
        %2887 = vmatprep.subr.mxu0 0.0
        %2888 = vmatpush1.msra.mxu0 0.0
        %2889 = vmatprep.subr.mxu0 0.0
        %2890 = vmatpush1.msra.mxu0 0.0
        %2891 = vmatprep.subr.mxu0 0.0
        %2892 = vmatpush1.msra.mxu0 0.0
        %2893 = vmatprep.subr.mxu0 0.0
        %2894 = vmatpush1.msra.mxu0 0.0
        %2895 = vmatprep.subr.mxu0 0.0
        %2896 = vmatpush1.msra.mxu0 0.0
        %2897 = vmatprep.subr.mxu0 0.0
        %2898 = vmatpush1.msra.mxu0 0.0
        %2899 = vmatprep.subr.mxu0 0.0
        %2900 = vmatpush1.msra.mxu0 0.0
        %2901 = vmatprep.subr.mxu0 0.0
        %2902 = vmatpush1.msra.mxu0 0.0
        %2903 = vmatprep.subr.mxu0 0.0
        %2904 = vmatpush1.msra.mxu0 0.0
        %2905 = vmatprep.subr.mxu0 0.0
        %2906 = vmatpush1.msra.mxu0 0.0
        %2907 = vmatprep.subr.mxu0 0.0
        %2908 = vmatpush1.msra.mxu0 %v2872
        %2909 = vmatprep.subr.mxu0 0.0
        %2910 = vmatpush1.msra.mxu0 %v2871
        %2911 = vmatprep.subr.mxu0 0.0
        %2912 = vmatpush1.msra.mxu0 %v2870
        %2913 = vmatprep.subr.mxu0 0.0
        %2914 = vmatpush1.msra.mxu0 %v2869
        %2915 = vmatprep.subr.mxu0 0.0
        %2916 = vmatpush2.msra.mxu0 0.0
        %2917 = vmatprep.subr.mxu0 0.0
        %2918 = vmatpush2.msra.mxu0 0.0
        %2919 = vmatprep.subr.mxu0 0.0
        %2920 = vmatpush2.msra.mxu0 0.0
        %2921 = vmatprep.subr.mxu0 0.0
        %2922 = vmatpush2.msra.mxu0 0.0
        %2923 = vmatprep.subr.mxu0 0.0
        %2924 = vmatpush2.msra.mxu0 0.0
        %2925 = vmatprep.subr.mxu0 0.0
        %2926 = vmatpush2.msra.mxu0 0.0
        %2927 = vmatprep.subr.mxu0 0.0
        %2928 = vmatpush2.msra.mxu0 0.0
        %2929 = vmatprep.subr.mxu0 0.0
        %2930 = vmatpush2.msra.mxu0 0.0
        %2931 = vmatprep.subr.mxu0 0.0
        %2932 = vmatpush2.msra.mxu0 0.0
        %2933 = vmatprep.subr.mxu0 0.0
        %2934 = vmatpush2.msra.mxu0 0.0
        %2935 = vmatprep.subr.mxu0 0.0
        %2936 = vmatpush2.msra.mxu0 0.0
        %2937 = vmatprep.subr.mxu0 0.0
        %2938 = vmatpush2.msra.mxu0 0.0
        %2939 = vmatprep.subr.mxu0 0.0
        %2940 = vmatpush2.msra.mxu0 0.0
        %2941 = vmatprep.subr.mxu0 0.0
        %2942 = vmatpush2.msra.mxu0 0.0
        %2943 = vmatprep.subr.mxu0 0.0
        %2944 = vmatpush2.msra.mxu0 0.0
        %2945 = vmatprep.subr.mxu0 0.0
        %2946 = vmatpush2.msra.mxu0 0.0
        %2947 = vmatprep.mubr.f32.mxu0 0.0
        %2948 = vmatmul.mubr.f32.gmra.mxu0 %v2881
        %v2949 = vpop.f32.mrf.mxu0
        %v2950 = vadd.f32 %v2878, %v2949
        %v2951 = vpop.f32.mrf.mxu0
        %2952 = vdwg.mxu0
        %v2953 = vld [vmem:[%s33] sm:$0xff]
        %v2954 = vld [vmem:[%s33 + $0x8] sm:$0xff]
        %v2955 = vld [vmem:[%s33 + $0x10] sm:$0xff]
        %v2956 = vld [vmem:[%s33 + $0x18] sm:$0xff]
        %v2957 = vld [vmem:[%s35] sm:$0x1]
        %v2959 = vlaneseq
        %v2960 = vshrl.u32 %v2959, 7
        %v2961 = vsub.s32 0, %v2960
        %v2962 = vrot.slane %v2957, %v2961
        %2964 = vmatprep.subr.mxu0 0.0
        %2965 = vmatpush1.msra.mxu0 0.0
        %2966 = vmatprep.subr.mxu0 0.0
        %2967 = vmatpush1.msra.mxu0 0.0
        %2968 = vmatprep.subr.mxu0 0.0
        %2969 = vmatpush1.msra.mxu0 0.0
        %2970 = vmatprep.subr.mxu0 0.0
        %2971 = vmatpush1.msra.mxu0 0.0
        %2972 = vmatprep.subr.mxu0 0.0
        %2973 = vmatpush1.msra.mxu0 0.0
        %2974 = vmatprep.subr.mxu0 0.0
        %2975 = vmatpush1.msra.mxu0 0.0
        %2976 = vmatprep.subr.mxu0 0.0
        %2977 = vmatpush1.msra.mxu0 0.0
        %2978 = vmatprep.subr.mxu0 0.0
        %2979 = vmatpush1.msra.mxu0 0.0
        %2980 = vmatprep.subr.mxu0 0.0
        %2981 = vmatpush1.msra.mxu0 0.0
        %2982 = vmatprep.subr.mxu0 0.0
        %2983 = vmatpush1.msra.mxu0 0.0
        %2984 = vmatprep.subr.mxu0 0.0
        %2985 = vmatpush1.msra.mxu0 0.0
        %2986 = vmatprep.subr.mxu0 0.0
        %2987 = vmatpush1.msra.mxu0 0.0
        %2988 = vmatprep.subr.mxu0 0.0
        %2989 = vmatpush1.msra.mxu0 %v2956
        %2990 = vmatprep.subr.mxu0 0.0
        %2991 = vmatpush1.msra.mxu0 %v2955
        %2992 = vmatprep.subr.mxu0 0.0
        %2993 = vmatpush1.msra.mxu0 %v2954
        %2994 = vmatprep.subr.mxu0 0.0
        %2995 = vmatpush1.msra.mxu0 %v2953
        %2996 = vmatprep.subr.mxu0 0.0
        %2997 = vmatpush2.msra.mxu0 0.0
        %2998 = vmatprep.subr.mxu0 0.0
        %2999 = vmatpush2.msra.mxu0 0.0
        %3000 = vmatprep.subr.mxu0 0.0
        %3001 = vmatpush2.msra.mxu0 0.0
        %3002 = vmatprep.subr.mxu0 0.0
        %3003 = vmatpush2.msra.mxu0 0.0
        %3004 = vmatprep.subr.mxu0 0.0
        %3005 = vmatpush2.msra.mxu0 0.0
        %3006 = vmatprep.subr.mxu0 0.0
        %3007 = vmatpush2.msra.mxu0 0.0
        %3008 = vmatprep.subr.mxu0 0.0
        %3009 = vmatpush2.msra.mxu0 0.0
        %3010 = vmatprep.subr.mxu0 0.0
        %3011 = vmatpush2.msra.mxu0 0.0
        %3012 = vmatprep.subr.mxu0 0.0
        %3013 = vmatpush2.msra.mxu0 0.0
        %3014 = vmatprep.subr.mxu0 0.0
        %3015 = vmatpush2.msra.mxu0 0.0
        %3016 = vmatprep.subr.mxu0 0.0
        %3017 = vmatpush2.msra.mxu0 0.0
        %3018 = vmatprep.subr.mxu0 0.0
        %3019 = vmatpush2.msra.mxu0 0.0
        %3020 = vmatprep.subr.mxu0 0.0
        %3021 = vmatpush2.msra.mxu0 0.0
        %3022 = vmatprep.subr.mxu0 0.0
        %3023 = vmatpush2.msra.mxu0 0.0
        %3024 = vmatprep.subr.mxu0 0.0
        %3025 = vmatpush2.msra.mxu0 0.0
        %3026 = vmatprep.subr.mxu0 0.0
        %3027 = vmatpush2.msra.mxu0 0.0
        %3028 = vmatprep.mubr.f32.mxu0 0.0
        %3029 = vmatmul.mubr.f32.gmra.mxu0 %v2187
        %v3030 = vpop.f32.mrf.mxu0
        %v3031 = vadd.f32 %v2962, %v3030
        %v3032 = vpop.f32.mrf.mxu0
        %3033 = vdwg.mxu0
        %v3034 = vld [vmem:[%s37] sm:$0xff]
        %v3035 = vld [vmem:[%s37 + $0x8] sm:$0xff]
        %v3036 = vld [vmem:[%s37 + $0x10] sm:$0xff]
        %v3037 = vld [vmem:[%s37 + $0x18] sm:$0xff]
        %v3038 = vld [vmem:[%s39] sm:$0x1]
        %v3040 = vlaneseq
        %v3041 = vshrl.u32 %v3040, 7
        %v3042 = vsub.s32 0, %v3041
        %v3043 = vrot.slane %v3038, %v3042
        %3045 = vmatprep.subr.mxu0 0.0
        %3046 = vmatpush1.msra.mxu0 0.0
        %3047 = vmatprep.subr.mxu0 0.0
        %3048 = vmatpush1.msra.mxu0 0.0
        %3049 = vmatprep.subr.mxu0 0.0
        %3050 = vmatpush1.msra.mxu0 0.0
        %3051 = vmatprep.subr.mxu0 0.0
        %3052 = vmatpush1.msra.mxu0 0.0
        %3053 = vmatprep.subr.mxu0 0.0
        %3054 = vmatpush1.msra.mxu0 0.0
        %3055 = vmatprep.subr.mxu0 0.0
        %3056 = vmatpush1.msra.mxu0 0.0
        %3057 = vmatprep.subr.mxu0 0.0
        %3058 = vmatpush1.msra.mxu0 0.0
        %3059 = vmatprep.subr.mxu0 0.0
        %3060 = vmatpush1.msra.mxu0 0.0
        %3061 = vmatprep.subr.mxu0 0.0
        %3062 = vmatpush1.msra.mxu0 0.0
        %3063 = vmatprep.subr.mxu0 0.0
        %3064 = vmatpush1.msra.mxu0 0.0
        %3065 = vmatprep.subr.mxu0 0.0
        %3066 = vmatpush1.msra.mxu0 0.0
        %3067 = vmatprep.subr.mxu0 0.0
        %3068 = vmatpush1.msra.mxu0 0.0
        %3069 = vmatprep.subr.mxu0 0.0
        %3070 = vmatpush1.msra.mxu0 %v3037
        %3071 = vmatprep.subr.mxu0 0.0
        %3072 = vmatpush1.msra.mxu0 %v3036
        %3073 = vmatprep.subr.mxu0 0.0
        %3074 = vmatpush1.msra.mxu0 %v3035
        %3075 = vmatprep.subr.mxu0 0.0
        %3076 = vmatpush1.msra.mxu0 %v3034
        %3077 = vmatprep.subr.mxu0 0.0
        %3078 = vmatpush2.msra.mxu0 0.0
        %3079 = vmatprep.subr.mxu0 0.0
        %3080 = vmatpush2.msra.mxu0 0.0
        %3081 = vmatprep.subr.mxu0 0.0
        %3082 = vmatpush2.msra.mxu0 0.0
        %3083 = vmatprep.subr.mxu0 0.0
        %3084 = vmatpush2.msra.mxu0 0.0
        %3085 = vmatprep.subr.mxu0 0.0
        %3086 = vmatpush2.msra.mxu0 0.0
        %3087 = vmatprep.subr.mxu0 0.0
        %3088 = vmatpush2.msra.mxu0 0.0
        %3089 = vmatprep.subr.mxu0 0.0
        %3090 = vmatpush2.msra.mxu0 0.0
        %3091 = vmatprep.subr.mxu0 0.0
        %3092 = vmatpush2.msra.mxu0 0.0
        %3093 = vmatprep.subr.mxu0 0.0
        %3094 = vmatpush2.msra.mxu0 0.0
        %3095 = vmatprep.subr.mxu0 0.0
        %3096 = vmatpush2.msra.mxu0 0.0
        %3097 = vmatprep.subr.mxu0 0.0
        %3098 = vmatpush2.msra.mxu0 0.0
        %3099 = vmatprep.subr.mxu0 0.0
        %3100 = vmatpush2.msra.mxu0 0.0
        %3101 = vmatprep.subr.mxu0 0.0
        %3102 = vmatpush2.msra.mxu0 0.0
        %3103 = vmatprep.subr.mxu0 0.0
        %3104 = vmatpush2.msra.mxu0 0.0
        %3105 = vmatprep.subr.mxu0 0.0
        %3106 = vmatpush2.msra.mxu0 0.0
        %3107 = vmatprep.subr.mxu0 0.0
        %3108 = vmatpush2.msra.mxu0 0.0
        %3109 = vmatprep.mubr.f32.mxu0 0.0
        %3110 = vmatmul.mubr.f32.gmra.mxu0 %v2187
        %v3111 = vpop.f32.mrf.mxu0
        %v3112 = vadd.f32 %v3043, %v3111
        %v3113 = vpop.f32.mrf.mxu0
        %3114 = vdwg.mxu0
        %v3116 = vsel %vm1262, %v2950, 0
        %v3119 = vsel %vm1262, %v3031, 0
        %3121 = vmatprep.subr.mxu0 0.0
        %3122 = vmatpush1.xpose.msra.mxu0 0.0
        %3123 = vmatprep.subr.mxu0 0.0
        %3124 = vmatpush1.xpose.msra.mxu0 0.0
        %3125 = vmatprep.subr.mxu0 0.0
        %3126 = vmatpush1.xpose.msra.mxu0 0.0
        %3127 = vmatprep.subr.mxu0 0.0
        %3128 = vmatpush1.xpose.msra.mxu0 0.0
        %3129 = vmatprep.subr.mxu0 0.0
        %3130 = vmatpush1.xpose.msra.mxu0 0.0
        %3131 = vmatprep.subr.mxu0 0.0
        %3132 = vmatpush1.xpose.msra.mxu0 0.0
        %3133 = vmatprep.subr.mxu0 0.0
        %3134 = vmatpush1.xpose.msra.mxu0 0.0
        %3135 = vmatprep.subr.mxu0 0.0
        %3136 = vmatpush1.xpose.msra.mxu0 0.0
        %3137 = vmatprep.subr.mxu0 0.0
        %3138 = vmatpush1.xpose.msra.mxu0 0.0
        %3139 = vmatprep.subr.mxu0 0.0
        %3140 = vmatpush1.xpose.msra.mxu0 0.0
        %3141 = vmatprep.subr.mxu0 0.0
        %3142 = vmatpush1.xpose.msra.mxu0 0.0
        %3143 = vmatprep.subr.mxu0 0.0
        %3144 = vmatpush1.xpose.msra.mxu0 0.0
        %3145 = vmatprep.subr.mxu0 0.0
        %3146 = vmatpush1.xpose.msra.mxu0 0.0
        %3147 = vmatprep.subr.mxu0 0.0
        %3148 = vmatpush1.xpose.msra.mxu0 0.0
        %3149 = vmatprep.subr.mxu0 0.0
        %3150 = vmatpush1.xpose.msra.mxu0 0.0
        %3151 = vmatprep.subr.mxu0 0.0
        %3152 = vmatpush1.xpose.msra.mxu0 %v3119
        %3153 = vmatprep.subr.mxu0 0.0
        %3154 = vmatpush2.xpose.msra.mxu0 0.0
        %3155 = vmatprep.subr.mxu0 0.0
        %3156 = vmatpush2.xpose.msra.mxu0 0.0
        %3157 = vmatprep.subr.mxu0 0.0
        %3158 = vmatpush2.xpose.msra.mxu0 0.0
        %3159 = vmatprep.subr.mxu0 0.0
        %3160 = vmatpush2.xpose.msra.mxu0 0.0
        %3161 = vmatprep.subr.mxu0 0.0
        %3162 = vmatpush2.xpose.msra.mxu0 0.0
        %3163 = vmatprep.subr.mxu0 0.0
        %3164 = vmatpush2.xpose.msra.mxu0 0.0
        %3165 = vmatprep.subr.mxu0 0.0
        %3166 = vmatpush2.xpose.msra.mxu0 0.0
        %3167 = vmatprep.subr.mxu0 0.0
        %3168 = vmatpush2.xpose.msra.mxu0 0.0
        %3169 = vmatprep.subr.mxu0 0.0
        %3170 = vmatpush2.xpose.msra.mxu0 0.0
        %3171 = vmatprep.subr.mxu0 0.0
        %3172 = vmatpush2.xpose.msra.mxu0 0.0
        %3173 = vmatprep.subr.mxu0 0.0
        %3174 = vmatpush2.xpose.msra.mxu0 0.0
        %3175 = vmatprep.subr.mxu0 0.0
        %3176 = vmatpush2.xpose.msra.mxu0 0.0
        %3177 = vmatprep.subr.mxu0 0.0
        %3178 = vmatpush2.xpose.msra.mxu0 0.0
        %3179 = vmatprep.subr.mxu0 0.0
        %3180 = vmatpush2.xpose.msra.mxu0 0.0
        %3181 = vmatprep.subr.mxu0 0.0
        %3182 = vmatpush2.xpose.msra.mxu0 0.0
        %3183 = vmatprep.subr.mxu0 0.0
        %3184 = vmatpush2.xpose.msra.mxu0 0.0
        %3185 = vmatprep.mubr.f32.mxu0 0.0
        %3186 = vmatmul.mubr.f32.gmra.mxu0 %v3116
        %v3187 = vpop.f32.mrf.mxu0
        %v3188 = vadd.f32 0.0, %v3187
        %v3189 = vpop.f32.mrf.mxu0
        %3190 = vdwg.mxu0
        %v3191 = vmul.f32 %v3188, 0.17677669
        %v3192 = vsub.f32 %v1250, 1.0
        %v3193 = vmul.f32 %v3192, 1e+09
        %v3195 = vlaneseq
        %v3196 = vshrl.u32 %v3195, 7
        %v3197 = vsub.s32 0, %v3196
        %v3198 = vrot.slane %v3193, %v3197
        %v3200 = vadd.f32 %v3191, %v3198
        %vm3201 = vcmask 35840
        %v3202 = vsel %vm3201, %v3200, -inf
        %3203 = vmax.xlane.f32.xlu0 %v3202
        %v3204 = vpop.xlane.xlu0 %3203
        %v3205 = vsub.f32 %v3200, %v3204
        %v3206 = vmul.f32 %v3205, 1.442695
        %v3207 = vpow.pop %v3206
        %v3208 = vsel %vm3201, %v3207, 0.0
        %3209 = vadd.xlane.f32.xlu0 %v3208
        %v3210 = vpop.xlane.xlu0 %3209
        %v3211 = vrcp.pop %v3210
        %v3212 = vmul.f32 %v3207, %v3211
        %v3214 = vsel %vm1350, %v3212, 0
        %v3217 = vsel %vm1354, %v3112, 0
        %3219 = vmatprep.subr.mxu0 0.0
        %3220 = vmatpush1.msra.mxu0 0.0
        %3221 = vmatprep.subr.mxu0 0.0
        %3222 = vmatpush1.msra.mxu0 0.0
        %3223 = vmatprep.subr.mxu0 0.0
        %3224 = vmatpush1.msra.mxu0 0.0
        %3225 = vmatprep.subr.mxu0 0.0
        %3226 = vmatpush1.msra.mxu0 0.0
        %3227 = vmatprep.subr.mxu0 0.0
        %3228 = vmatpush1.msra.mxu0 0.0
        %3229 = vmatprep.subr.mxu0 0.0
        %3230 = vmatpush1.msra.mxu0 0.0
        %3231 = vmatprep.subr.mxu0 0.0
        %3232 = vmatpush1.msra.mxu0 0.0
        %3233 = vmatprep.subr.mxu0 0.0
        %3234 = vmatpush1.msra.mxu0 0.0
        %3235 = vmatprep.subr.mxu0 0.0
        %3236 = vmatpush1.msra.mxu0 0.0
        %3237 = vmatprep.subr.mxu0 0.0
        %3238 = vmatpush1.msra.mxu0 0.0
        %3239 = vmatprep.subr.mxu0 0.0
        %3240 = vmatpush1.msra.mxu0 0.0
        %3241 = vmatprep.subr.mxu0 0.0
        %3242 = vmatpush1.msra.mxu0 0.0
        %3243 = vmatprep.subr.mxu0 0.0
        %3244 = vmatpush1.msra.mxu0 0.0
        %3245 = vmatprep.subr.mxu0 0.0
        %3246 = vmatpush1.msra.mxu0 0.0
        %3247 = vmatprep.subr.mxu0 0.0
        %3248 = vmatpush1.msra.mxu0 0.0
        %3249 = vmatprep.subr.mxu0 0.0
        %3250 = vmatpush1.msra.mxu0 %v3217
        %3251 = vmatprep.subr.mxu0 0.0
        %3252 = vmatpush2.msra.mxu0 0.0
        %3253 = vmatprep.subr.mxu0 0.0
        %3254 = vmatpush2.msra.mxu0 0.0
        %3255 = vmatprep.subr.mxu0 0.0
        %3256 = vmatpush2.msra.mxu0 0.0
        %3257 = vmatprep.subr.mxu0 0.0
        %3258 = vmatpush2.msra.mxu0 0.0
        %3259 = vmatprep.subr.mxu0 0.0
        %3260 = vmatpush2.msra.mxu0 0.0
        %3261 = vmatprep.subr.mxu0 0.0
        %3262 = vmatpush2.msra.mxu0 0.0
        %3263 = vmatprep.subr.mxu0 0.0
        %3264 = vmatpush2.msra.mxu0 0.0
        %3265 = vmatprep.subr.mxu0 0.0
        %3266 = vmatpush2.msra.mxu0 0.0
        %3267 = vmatprep.subr.mxu0 0.0
        %3268 = vmatpush2.msra.mxu0 0.0
        %3269 = vmatprep.subr.mxu0 0.0
        %3270 = vmatpush2.msra.mxu0 0.0
        %3271 = vmatprep.subr.mxu0 0.0
        %3272 = vmatpush2.msra.mxu0 0.0
        %3273 = vmatprep.subr.mxu0 0.0
        %3274 = vmatpush2.msra.mxu0 0.0
        %3275 = vmatprep.subr.mxu0 0.0
        %3276 = vmatpush2.msra.mxu0 0.0
        %3277 = vmatprep.subr.mxu0 0.0
        %3278 = vmatpush2.msra.mxu0 0.0
        %3279 = vmatprep.subr.mxu0 0.0
        %3280 = vmatpush2.msra.mxu0 0.0
        %3281 = vmatprep.subr.mxu0 0.0
        %3282 = vmatpush2.msra.mxu0 0.0
        %3283 = vmatprep.mubr.f32.mxu0 0.0
        %3284 = vmatmul.mubr.f32.gmra.mxu0 %v3214
        %v3285 = vpop.f32.mrf.mxu0
        %v3286 = vadd.f32 0.0, %v3285
        %v3287 = vpop.f32.mrf.mxu0
        %3288 = vdwg.mxu0
        %v3289 = vld [vmem:[%s41] sm:$0xff]
        %v3290 = vld [vmem:[%s41 + $0x8] sm:$0xff]
        %v3291 = vld [vmem:[%s41 + $0x10] sm:$0xff]
        %v3292 = vld [vmem:[%s41 + $0x18] sm:$0xff]
        %v3293 = vld [vmem:[%s43] sm:$0x1]
        %v3295 = vlaneseq
        %v3296 = vshrl.u32 %v3295, 7
        %v3297 = vsub.s32 0, %v3296
        %v3298 = vrot.slane %v3293, %v3297
        %v3301 = vsel %vm1262, %v3286, 0
        %3303 = vmatprep.subr.mxu0 0.0
        %3304 = vmatpush1.msra.mxu0 0.0
        %3305 = vmatprep.subr.mxu0 0.0
        %3306 = vmatpush1.msra.mxu0 0.0
        %3307 = vmatprep.subr.mxu0 0.0
        %3308 = vmatpush1.msra.mxu0 0.0
        %3309 = vmatprep.subr.mxu0 0.0
        %3310 = vmatpush1.msra.mxu0 0.0
        %3311 = vmatprep.subr.mxu0 0.0
        %3312 = vmatpush1.msra.mxu0 0.0
        %3313 = vmatprep.subr.mxu0 0.0
        %3314 = vmatpush1.msra.mxu0 0.0
        %3315 = vmatprep.subr.mxu0 0.0
        %3316 = vmatpush1.msra.mxu0 0.0
        %3317 = vmatprep.subr.mxu0 0.0
        %3318 = vmatpush1.msra.mxu0 0.0
        %3319 = vmatprep.subr.mxu0 0.0
        %3320 = vmatpush1.msra.mxu0 0.0
        %3321 = vmatprep.subr.mxu0 0.0
        %3322 = vmatpush1.msra.mxu0 0.0
        %3323 = vmatprep.subr.mxu0 0.0
        %3324 = vmatpush1.msra.mxu0 0.0
        %3325 = vmatprep.subr.mxu0 0.0
        %3326 = vmatpush1.msra.mxu0 0.0
        %3327 = vmatprep.subr.mxu0 0.0
        %3328 = vmatpush1.msra.mxu0 %v3292
        %3329 = vmatprep.subr.mxu0 0.0
        %3330 = vmatpush1.msra.mxu0 %v3291
        %3331 = vmatprep.subr.mxu0 0.0
        %3332 = vmatpush1.msra.mxu0 %v3290
        %3333 = vmatprep.subr.mxu0 0.0
        %3334 = vmatpush1.msra.mxu0 %v3289
        %3335 = vmatprep.subr.mxu0 0.0
        %3336 = vmatpush2.msra.mxu0 0.0
        %3337 = vmatprep.subr.mxu0 0.0
        %3338 = vmatpush2.msra.mxu0 0.0
        %3339 = vmatprep.subr.mxu0 0.0
        %3340 = vmatpush2.msra.mxu0 0.0
        %3341 = vmatprep.subr.mxu0 0.0
        %3342 = vmatpush2.msra.mxu0 0.0
        %3343 = vmatprep.subr.mxu0 0.0
        %3344 = vmatpush2.msra.mxu0 0.0
        %3345 = vmatprep.subr.mxu0 0.0
        %3346 = vmatpush2.msra.mxu0 0.0
        %3347 = vmatprep.subr.mxu0 0.0
        %3348 = vmatpush2.msra.mxu0 0.0
        %3349 = vmatprep.subr.mxu0 0.0
        %3350 = vmatpush2.msra.mxu0 0.0
        %3351 = vmatprep.subr.mxu0 0.0
        %3352 = vmatpush2.msra.mxu0 0.0
        %3353 = vmatprep.subr.mxu0 0.0
        %3354 = vmatpush2.msra.mxu0 0.0
        %3355 = vmatprep.subr.mxu0 0.0
        %3356 = vmatpush2.msra.mxu0 0.0
        %3357 = vmatprep.subr.mxu0 0.0
        %3358 = vmatpush2.msra.mxu0 0.0
        %3359 = vmatprep.subr.mxu0 0.0
        %3360 = vmatpush2.msra.mxu0 0.0
        %3361 = vmatprep.subr.mxu0 0.0
        %3362 = vmatpush2.msra.mxu0 0.0
        %3363 = vmatprep.subr.mxu0 0.0
        %3364 = vmatpush2.msra.mxu0 0.0
        %3365 = vmatprep.subr.mxu0 0.0
        %3366 = vmatpush2.msra.mxu0 0.0
        %3367 = vmatprep.mubr.f32.mxu0 0.0
        %3368 = vmatmul.mubr.f32.gmra.mxu0 %v3301
        %v3369 = vpop.f32.mrf.mxu0
        %v3370 = vadd.f32 %v3298, %v3369
        %v3371 = vpop.f32.mrf.mxu0
        %3372 = vdwg.mxu0
        %vm3373 = vcmask 125952
        %3374 = vst.msk [vmem:[%s1208] sm:$0xf] %vm3373, %v3370
        %v3375 = vld [vmem:[%s45] sm:$0xff]
        %v3376 = vld [vmem:[%s45 + $0x8] sm:$0xff]
        %v3377 = vld [vmem:[%s45 + $0x10] sm:$0xff]
        %v3378 = vld [vmem:[%s45 + $0x18] sm:$0xff]
        %v3379 = vld [vmem:[#allocation2] sm:$0x1]
        %v3381 = vlaneseq
        %v3382 = vshrl.u32 %v3381, 7
        %v3383 = vsub.s32 0, %v3382
        %v3384 = vrot.slane %v3379, %v3383
        %v3387 = vsel %vm1262, %v2866, 0
        %3389 = vmatprep.subr.mxu0 0.0
        %3390 = vmatpush1.msra.mxu0 0.0
        %3391 = vmatprep.subr.mxu0 0.0
        %3392 = vmatpush1.msra.mxu0 0.0
        %3393 = vmatprep.subr.mxu0 0.0
        %3394 = vmatpush1.msra.mxu0 0.0
        %3395 = vmatprep.subr.mxu0 0.0
        %3396 = vmatpush1.msra.mxu0 0.0
        %3397 = vmatprep.subr.mxu0 0.0
        %3398 = vmatpush1.msra.mxu0 0.0
        %3399 = vmatprep.subr.mxu0 0.0
        %3400 = vmatpush1.msra.mxu0 0.0
        %3401 = vmatprep.subr.mxu0 0.0
        %3402 = vmatpush1.msra.mxu0 0.0
        %3403 = vmatprep.subr.mxu0 0.0
        %3404 = vmatpush1.msra.mxu0 0.0
        %3405 = vmatprep.subr.mxu0 0.0
        %3406 = vmatpush1.msra.mxu0 0.0
        %3407 = vmatprep.subr.mxu0 0.0
        %3408 = vmatpush1.msra.mxu0 0.0
        %3409 = vmatprep.subr.mxu0 0.0
        %3410 = vmatpush1.msra.mxu0 0.0
        %3411 = vmatprep.subr.mxu0 0.0
        %3412 = vmatpush1.msra.mxu0 0.0
        %3413 = vmatprep.subr.mxu0 0.0
        %3414 = vmatpush1.msra.mxu0 %v3378
        %3415 = vmatprep.subr.mxu0 0.0
        %3416 = vmatpush1.msra.mxu0 %v3377
        %3417 = vmatprep.subr.mxu0 0.0
        %3418 = vmatpush1.msra.mxu0 %v3376
        %3419 = vmatprep.subr.mxu0 0.0
        %3420 = vmatpush1.msra.mxu0 %v3375
        %3421 = vmatprep.subr.mxu0 0.0
        %3422 = vmatpush2.msra.mxu0 0.0
        %3423 = vmatprep.subr.mxu0 0.0
        %3424 = vmatpush2.msra.mxu0 0.0
        %3425 = vmatprep.subr.mxu0 0.0
        %3426 = vmatpush2.msra.mxu0 0.0
        %3427 = vmatprep.subr.mxu0 0.0
        %3428 = vmatpush2.msra.mxu0 0.0
        %3429 = vmatprep.subr.mxu0 0.0
        %3430 = vmatpush2.msra.mxu0 0.0
        %3431 = vmatprep.subr.mxu0 0.0
        %3432 = vmatpush2.msra.mxu0 0.0
        %3433 = vmatprep.subr.mxu0 0.0
        %3434 = vmatpush2.msra.mxu0 0.0
        %3435 = vmatprep.subr.mxu0 0.0
        %3436 = vmatpush2.msra.mxu0 0.0
        %3437 = vmatprep.subr.mxu0 0.0
        %3438 = vmatpush2.msra.mxu0 0.0
        %3439 = vmatprep.subr.mxu0 0.0
        %3440 = vmatpush2.msra.mxu0 0.0
        %3441 = vmatprep.subr.mxu0 0.0
        %3442 = vmatpush2.msra.mxu0 0.0
        %3443 = vmatprep.subr.mxu0 0.0
        %3444 = vmatpush2.msra.mxu0 0.0
        %3445 = vmatprep.subr.mxu0 0.0
        %3446 = vmatpush2.msra.mxu0 0.0
        %3447 = vmatprep.subr.mxu0 0.0
        %3448 = vmatpush2.msra.mxu0 0.0
        %3449 = vmatprep.subr.mxu0 0.0
        %3450 = vmatpush2.msra.mxu0 0.0
        %3451 = vmatprep.subr.mxu0 0.0
        %3452 = vmatpush2.msra.mxu0 0.0
        %3453 = vmatprep.mubr.f32.mxu0 0.0
        %3454 = vmatmul.mubr.f32.gmra.mxu0 %v3387
        %v3455 = vpop.f32.mrf.mxu0
        %v3456 = vadd.f32 %v3384, %v3455
        %v3457 = vpop.f32.mrf.mxu0
        %3458 = vdwg.mxu0
        %v3459 = vld [vmem:[%s49] sm:$0xff]
        %v3460 = vld [vmem:[%s49 + $0x8] sm:$0xff]
        %v3461 = vld [vmem:[#allocation5] sm:$0x1]
        %v3463 = vlaneseq
        %v3464 = vshrl.u32 %v3463, 7
        %v3465 = vsub.s32 0, %v3464
        %v3466 = vrot.slane %v3461, %v3465
        %vm3468 = vcmask 130048
        %v3470 = vsel %vm3468, %v3370, 0
        %3472 = vmatprep.subr.mxu0 0.0
        %3473 = vmatpush1.msra.mxu0 0.0
        %3474 = vmatprep.subr.mxu0 0.0
        %3475 = vmatpush1.msra.mxu0 0.0
        %3476 = vmatprep.subr.mxu0 0.0
        %3477 = vmatpush1.msra.mxu0 0.0
        %3478 = vmatprep.subr.mxu0 0.0
        %3479 = vmatpush1.msra.mxu0 0.0
        %3480 = vmatprep.subr.mxu0 0.0
        %3481 = vmatpush1.msra.mxu0 0.0
        %3482 = vmatprep.subr.mxu0 0.0
        %3483 = vmatpush1.msra.mxu0 0.0
        %3484 = vmatprep.subr.mxu0 0.0
        %3485 = vmatpush1.msra.mxu0 0.0
        %3486 = vmatprep.subr.mxu0 0.0
        %3487 = vmatpush1.msra.mxu0 0.0
        %3488 = vmatprep.subr.mxu0 0.0
        %3489 = vmatpush1.msra.mxu0 0.0
        %3490 = vmatprep.subr.mxu0 0.0
        %3491 = vmatpush1.msra.mxu0 0.0
        %3492 = vmatprep.subr.mxu0 0.0
        %3493 = vmatpush1.msra.mxu0 0.0
        %3494 = vmatprep.subr.mxu0 0.0
        %3495 = vmatpush1.msra.mxu0 0.0
        %3496 = vmatprep.subr.mxu0 0.0
        %3497 = vmatpush1.msra.mxu0 0.0
        %3498 = vmatprep.subr.mxu0 0.0
        %3499 = vmatpush1.msra.mxu0 0.0
        %3500 = vmatprep.subr.mxu0 0.0
        %3501 = vmatpush1.msra.mxu0 %v3460
        %3502 = vmatprep.subr.mxu0 0.0
        %3503 = vmatpush1.msra.mxu0 %v3459
        %3504 = vmatprep.subr.mxu0 0.0
        %3505 = vmatpush2.msra.mxu0 0.0
        %3506 = vmatprep.subr.mxu0 0.0
        %3507 = vmatpush2.msra.mxu0 0.0
        %3508 = vmatprep.subr.mxu0 0.0
        %3509 = vmatpush2.msra.mxu0 0.0
        %3510 = vmatprep.subr.mxu0 0.0
        %3511 = vmatpush2.msra.mxu0 0.0
        %3512 = vmatprep.subr.mxu0 0.0
        %3513 = vmatpush2.msra.mxu0 0.0
        %3514 = vmatprep.subr.mxu0 0.0
        %3515 = vmatpush2.msra.mxu0 0.0
        %3516 = vmatprep.subr.mxu0 0.0
        %3517 = vmatpush2.msra.mxu0 0.0
        %3518 = vmatprep.subr.mxu0 0.0
        %3519 = vmatpush2.msra.mxu0 0.0
        %3520 = vmatprep.subr.mxu0 0.0
        %3521 = vmatpush2.msra.mxu0 0.0
        %3522 = vmatprep.subr.mxu0 0.0
        %3523 = vmatpush2.msra.mxu0 0.0
        %3524 = vmatprep.subr.mxu0 0.0
        %3525 = vmatpush2.msra.mxu0 0.0
        %3526 = vmatprep.subr.mxu0 0.0
        %3527 = vmatpush2.msra.mxu0 0.0
        %3528 = vmatprep.subr.mxu0 0.0
        %3529 = vmatpush2.msra.mxu0 0.0
        %3530 = vmatprep.subr.mxu0 0.0
        %3531 = vmatpush2.msra.mxu0 0.0
        %3532 = vmatprep.subr.mxu0 0.0
        %3533 = vmatpush2.msra.mxu0 0.0
        %3534 = vmatprep.subr.mxu0 0.0
        %3535 = vmatpush2.msra.mxu0 0.0
        %3536 = vmatprep.mubr.f32.mxu0 0.0
        %3537 = vmatmul.mubr.f32.gmra.mxu0 %v3470
        %v3538 = vpop.f32.mrf.mxu0
        %v3539 = vadd.f32 %v3466, %v3538
        %v3540 = vpop.f32.mrf.mxu0
        %3541 = vdwg.mxu0
        %v3542 = vld [vmem:[%s53] sm:$0xff]
        %v3543 = vld [vmem:[%s53 + $0x8] sm:$0xff]
        %v3544 = vld [vmem:[#allocation7] sm:$0x1]
        %v3546 = vlaneseq
        %v3547 = vshrl.u32 %v3546, 7
        %v3548 = vsub.s32 0, %v3547
        %v3549 = vrot.slane %v3544, %v3548
        %3551 = vmatprep.subr.mxu0 0.0
        %3552 = vmatpush1.msra.mxu0 0.0
        %3553 = vmatprep.subr.mxu0 0.0
        %3554 = vmatpush1.msra.mxu0 0.0
        %3555 = vmatprep.subr.mxu0 0.0
        %3556 = vmatpush1.msra.mxu0 0.0
        %3557 = vmatprep.subr.mxu0 0.0
        %3558 = vmatpush1.msra.mxu0 0.0
        %3559 = vmatprep.subr.mxu0 0.0
        %3560 = vmatpush1.msra.mxu0 0.0
        %3561 = vmatprep.subr.mxu0 0.0
        %3562 = vmatpush1.msra.mxu0 0.0
        %3563 = vmatprep.subr.mxu0 0.0
        %3564 = vmatpush1.msra.mxu0 0.0
        %3565 = vmatprep.subr.mxu0 0.0
        %3566 = vmatpush1.msra.mxu0 0.0
        %3567 = vmatprep.subr.mxu0 0.0
        %3568 = vmatpush1.msra.mxu0 0.0
        %3569 = vmatprep.subr.mxu0 0.0
        %3570 = vmatpush1.msra.mxu0 0.0
        %3571 = vmatprep.subr.mxu0 0.0
        %3572 = vmatpush1.msra.mxu0 0.0
        %3573 = vmatprep.subr.mxu0 0.0
        %3574 = vmatpush1.msra.mxu0 0.0
        %3575 = vmatprep.subr.mxu0 0.0
        %3576 = vmatpush1.msra.mxu0 0.0
        %3577 = vmatprep.subr.mxu0 0.0
        %3578 = vmatpush1.msra.mxu0 0.0
        %3579 = vmatprep.subr.mxu0 0.0
        %3580 = vmatpush1.msra.mxu0 %v3543
        %3581 = vmatprep.subr.mxu0 0.0
        %3582 = vmatpush1.msra.mxu0 %v3542
        %3583 = vmatprep.subr.mxu0 0.0
        %3584 = vmatpush2.msra.mxu0 0.0
        %3585 = vmatprep.subr.mxu0 0.0
        %3586 = vmatpush2.msra.mxu0 0.0
        %3587 = vmatprep.subr.mxu0 0.0
        %3588 = vmatpush2.msra.mxu0 0.0
        %3589 = vmatprep.subr.mxu0 0.0
        %3590 = vmatpush2.msra.mxu0 0.0
        %3591 = vmatprep.subr.mxu0 0.0
        %3592 = vmatpush2.msra.mxu0 0.0
        %3593 = vmatprep.subr.mxu0 0.0
        %3594 = vmatpush2.msra.mxu0 0.0
        %3595 = vmatprep.subr.mxu0 0.0
        %3596 = vmatpush2.msra.mxu0 0.0
        %3597 = vmatprep.subr.mxu0 0.0
        %3598 = vmatpush2.msra.mxu0 0.0
        %3599 = vmatprep.subr.mxu0 0.0
        %3600 = vmatpush2.msra.mxu0 0.0
        %3601 = vmatprep.subr.mxu0 0.0
        %3602 = vmatpush2.msra.mxu0 0.0
        %3603 = vmatprep.subr.mxu0 0.0
        %3604 = vmatpush2.msra.mxu0 0.0
        %3605 = vmatprep.subr.mxu0 0.0
        %3606 = vmatpush2.msra.mxu0 0.0
        %3607 = vmatprep.subr.mxu0 0.0
        %3608 = vmatpush2.msra.mxu0 0.0
        %3609 = vmatprep.subr.mxu0 0.0
        %3610 = vmatpush2.msra.mxu0 0.0
        %3611 = vmatprep.subr.mxu0 0.0
        %3612 = vmatpush2.msra.mxu0 0.0
        %3613 = vmatprep.subr.mxu0 0.0
        %3614 = vmatpush2.msra.mxu0 0.0
        %3615 = vmatprep.mubr.f32.mxu0 0.0
        %3616 = vmatmul.mubr.f32.gmra.mxu0 %v3470
        %v3617 = vpop.f32.mrf.mxu0
        %v3618 = vadd.f32 %v3549, %v3617
        %v3619 = vpop.f32.mrf.mxu0
        %3620 = vdwg.mxu0
        %v3622 = vsel %vm1262, %v3456, 0
        %v3625 = vsel %vm1262, %v3539, 0
        %3627 = vmatprep.subr.mxu0 0.0
        %3628 = vmatpush1.xpose.msra.mxu0 0.0
        %3629 = vmatprep.subr.mxu0 0.0
        %3630 = vmatpush1.xpose.msra.mxu0 0.0
        %3631 = vmatprep.subr.mxu0 0.0
        %3632 = vmatpush1.xpose.msra.mxu0 0.0
        %3633 = vmatprep.subr.mxu0 0.0
        %3634 = vmatpush1.xpose.msra.mxu0 0.0
        %3635 = vmatprep.subr.mxu0 0.0
        %3636 = vmatpush1.xpose.msra.mxu0 0.0
        %3637 = vmatprep.subr.mxu0 0.0
        %3638 = vmatpush1.xpose.msra.mxu0 0.0
        %3639 = vmatprep.subr.mxu0 0.0
        %3640 = vmatpush1.xpose.msra.mxu0 0.0
        %3641 = vmatprep.subr.mxu0 0.0
        %3642 = vmatpush1.xpose.msra.mxu0 0.0
        %3643 = vmatprep.subr.mxu0 0.0
        %3644 = vmatpush1.xpose.msra.mxu0 0.0
        %3645 = vmatprep.subr.mxu0 0.0
        %3646 = vmatpush1.xpose.msra.mxu0 0.0
        %3647 = vmatprep.subr.mxu0 0.0
        %3648 = vmatpush1.xpose.msra.mxu0 0.0
        %3649 = vmatprep.subr.mxu0 0.0
        %3650 = vmatpush1.xpose.msra.mxu0 0.0
        %3651 = vmatprep.subr.mxu0 0.0
        %3652 = vmatpush1.xpose.msra.mxu0 0.0
        %3653 = vmatprep.subr.mxu0 0.0
        %3654 = vmatpush1.xpose.msra.mxu0 0.0
        %3655 = vmatprep.subr.mxu0 0.0
        %3656 = vmatpush1.xpose.msra.mxu0 0.0
        %3657 = vmatprep.subr.mxu0 0.0
        %3658 = vmatpush1.xpose.msra.mxu0 %v3625
        %3659 = vmatprep.subr.mxu0 0.0
        %3660 = vmatpush2.xpose.msra.mxu0 0.0
        %3661 = vmatprep.subr.mxu0 0.0
        %3662 = vmatpush2.xpose.msra.mxu0 0.0
        %3663 = vmatprep.subr.mxu0 0.0
        %3664 = vmatpush2.xpose.msra.mxu0 0.0
        %3665 = vmatprep.subr.mxu0 0.0
        %3666 = vmatpush2.xpose.msra.mxu0 0.0
        %3667 = vmatprep.subr.mxu0 0.0
        %3668 = vmatpush2.xpose.msra.mxu0 0.0
        %3669 = vmatprep.subr.mxu0 0.0
        %3670 = vmatpush2.xpose.msra.mxu0 0.0
        %3671 = vmatprep.subr.mxu0 0.0
        %3672 = vmatpush2.xpose.msra.mxu0 0.0
        %3673 = vmatprep.subr.mxu0 0.0
        %3674 = vmatpush2.xpose.msra.mxu0 0.0
        %3675 = vmatprep.subr.mxu0 0.0
        %3676 = vmatpush2.xpose.msra.mxu0 0.0
        %3677 = vmatprep.subr.mxu0 0.0
        %3678 = vmatpush2.xpose.msra.mxu0 0.0
        %3679 = vmatprep.subr.mxu0 0.0
        %3680 = vmatpush2.xpose.msra.mxu0 0.0
        %3681 = vmatprep.subr.mxu0 0.0
        %3682 = vmatpush2.xpose.msra.mxu0 0.0
        %3683 = vmatprep.subr.mxu0 0.0
        %3684 = vmatpush2.xpose.msra.mxu0 0.0
        %3685 = vmatprep.subr.mxu0 0.0
        %3686 = vmatpush2.xpose.msra.mxu0 0.0
        %3687 = vmatprep.subr.mxu0 0.0
        %3688 = vmatpush2.xpose.msra.mxu0 0.0
        %3689 = vmatprep.subr.mxu0 0.0
        %3690 = vmatpush2.xpose.msra.mxu0 0.0
        %3691 = vmatprep.mubr.f32.mxu0 0.0
        %3692 = vmatmul.mubr.f32.gmra.mxu0 %v3622
        %v3693 = vpop.f32.mrf.mxu0
        %v3694 = vadd.f32 0.0, %v3693
        %v3695 = vpop.f32.mrf.mxu0
        %3696 = vdwg.mxu0
        %v3697 = vmul.f32 %v3694, 0.17677669
        %vm3698 = vcmask 28672
        %v3699 = vsel %vm3698, %v3697, -inf
        %3700 = vmax.xlane.f32.xlu0 %v3699
        %v3701 = vpop.xlane.xlu0 %3700
        %v3702 = vsub.f32 %v3697, %v3701
        %v3703 = vmul.f32 %v3702, 1.442695
        %v3704 = vpow.pop %v3703
        %v3705 = vsel %vm3698, %v3704, 0.0
        %3706 = vadd.xlane.f32.xlu0 %v3705
        %v3707 = vpop.xlane.xlu0 %3706
        %v3708 = vrcp.pop %v3707
        %v3709 = vmul.f32 %v3704, %v3708
        %vm3710 = vcmask 31744
        %v3712 = vsel %vm3710, %v3709, 0
        %vm3714 = vcmask 1043456
        %v3716 = vsel %vm3714, %v3618, 0
        %3718 = vmatprep.subr.mxu0 0.0
        %3719 = vmatpush1.msra.mxu0 0.0
        %3720 = vmatprep.subr.mxu0 0.0
        %3721 = vmatpush1.msra.mxu0 0.0
        %3722 = vmatprep.subr.mxu0 0.0
        %3723 = vmatpush1.msra.mxu0 0.0
        %3724 = vmatprep.subr.mxu0 0.0
        %3725 = vmatpush1.msra.mxu0 0.0
        %3726 = vmatprep.subr.mxu0 0.0
        %3727 = vmatpush1.msra.mxu0 0.0
        %3728 = vmatprep.subr.mxu0 0.0
        %3729 = vmatpush1.msra.mxu0 0.0
        %3730 = vmatprep.subr.mxu0 0.0
        %3731 = vmatpush1.msra.mxu0 0.0
        %3732 = vmatprep.subr.mxu0 0.0
        %3733 = vmatpush1.msra.mxu0 0.0
        %3734 = vmatprep.subr.mxu0 0.0
        %3735 = vmatpush1.msra.mxu0 0.0
        %3736 = vmatprep.subr.mxu0 0.0
        %3737 = vmatpush1.msra.mxu0 0.0
        %3738 = vmatprep.subr.mxu0 0.0
        %3739 = vmatpush1.msra.mxu0 0.0
        %3740 = vmatprep.subr.mxu0 0.0
        %3741 = vmatpush1.msra.mxu0 0.0
        %3742 = vmatprep.subr.mxu0 0.0
        %3743 = vmatpush1.msra.mxu0 0.0
        %3744 = vmatprep.subr.mxu0 0.0
        %3745 = vmatpush1.msra.mxu0 0.0
        %3746 = vmatprep.subr.mxu0 0.0
        %3747 = vmatpush1.msra.mxu0 0.0
        %3748 = vmatprep.subr.mxu0 0.0
        %3749 = vmatpush1.msra.mxu0 %v3716
        %3750 = vmatprep.subr.mxu0 0.0
        %3751 = vmatpush2.msra.mxu0 0.0
        %3752 = vmatprep.subr.mxu0 0.0
        %3753 = vmatpush2.msra.mxu0 0.0
        %3754 = vmatprep.subr.mxu0 0.0
        %3755 = vmatpush2.msra.mxu0 0.0
        %3756 = vmatprep.subr.mxu0 0.0
        %3757 = vmatpush2.msra.mxu0 0.0
        %3758 = vmatprep.subr.mxu0 0.0
        %3759 = vmatpush2.msra.mxu0 0.0
        %3760 = vmatprep.subr.mxu0 0.0
        %3761 = vmatpush2.msra.mxu0 0.0
        %3762 = vmatprep.subr.mxu0 0.0
        %3763 = vmatpush2.msra.mxu0 0.0
        %3764 = vmatprep.subr.mxu0 0.0
        %3765 = vmatpush2.msra.mxu0 0.0
        %3766 = vmatprep.subr.mxu0 0.0
        %3767 = vmatpush2.msra.mxu0 0.0
        %3768 = vmatprep.subr.mxu0 0.0
        %3769 = vmatpush2.msra.mxu0 0.0
        %3770 = vmatprep.subr.mxu0 0.0
        %3771 = vmatpush2.msra.mxu0 0.0
        %3772 = vmatprep.subr.mxu0 0.0
        %3773 = vmatpush2.msra.mxu0 0.0
        %3774 = vmatprep.subr.mxu0 0.0
        %3775 = vmatpush2.msra.mxu0 0.0
        %3776 = vmatprep.subr.mxu0 0.0
        %3777 = vmatpush2.msra.mxu0 0.0
        %3778 = vmatprep.subr.mxu0 0.0
        %3779 = vmatpush2.msra.mxu0 0.0
        %3780 = vmatprep.subr.mxu0 0.0
        %3781 = vmatpush2.msra.mxu0 0.0
        %3782 = vmatprep.mubr.f32.mxu0 0.0
        %3783 = vmatmul.mubr.f32.gmra.mxu0 %v3712
        %v3784 = vpop.f32.mrf.mxu0
        %v3785 = vadd.f32 0.0, %v3784
        %v3786 = vpop.f32.mrf.mxu0
        %3787 = vdwg.mxu0
        %v3788 = vadd.f32 %v2866, %v3785
        %v3789 = vld [vmem:[%s57] sm:$0xff]
        %v3790 = vld [vmem:[%s57 + $0x8] sm:$0xff]
        %v3791 = vld [vmem:[%s57 + $0x10] sm:$0xff]
        %v3792 = vld [vmem:[%s57 + $0x18] sm:$0xff]
        %v3793 = vld [vmem:[#allocation8] sm:$0x1]
        %v3795 = vlaneseq
        %v3796 = vshrl.u32 %v3795, 7
        %v3797 = vsub.s32 0, %v3796
        %v3798 = vrot.slane %v3793, %v3797
        %v3801 = vsel %vm1262, %v3788, 0
        %3803 = vmatprep.subr.mxu0 0.0
        %3804 = vmatpush1.msra.mxu0 0.0
        %3805 = vmatprep.subr.mxu0 0.0
        %3806 = vmatpush1.msra.mxu0 0.0
        %3807 = vmatprep.subr.mxu0 0.0
        %3808 = vmatpush1.msra.mxu0 0.0
        %3809 = vmatprep.subr.mxu0 0.0
        %3810 = vmatpush1.msra.mxu0 0.0
        %3811 = vmatprep.subr.mxu0 0.0
        %3812 = vmatpush1.msra.mxu0 0.0
        %3813 = vmatprep.subr.mxu0 0.0
        %3814 = vmatpush1.msra.mxu0 0.0
        %3815 = vmatprep.subr.mxu0 0.0
        %3816 = vmatpush1.msra.mxu0 0.0
        %3817 = vmatprep.subr.mxu0 0.0
        %3818 = vmatpush1.msra.mxu0 0.0
        %3819 = vmatprep.subr.mxu0 0.0
        %3820 = vmatpush1.msra.mxu0 0.0
        %3821 = vmatprep.subr.mxu0 0.0
        %3822 = vmatpush1.msra.mxu0 0.0
        %3823 = vmatprep.subr.mxu0 0.0
        %3824 = vmatpush1.msra.mxu0 0.0
        %3825 = vmatprep.subr.mxu0 0.0
        %3826 = vmatpush1.msra.mxu0 0.0
        %3827 = vmatprep.subr.mxu0 0.0
        %3828 = vmatpush1.msra.mxu0 %v3792
        %3829 = vmatprep.subr.mxu0 0.0
        %3830 = vmatpush1.msra.mxu0 %v3791
        %3831 = vmatprep.subr.mxu0 0.0
        %3832 = vmatpush1.msra.mxu0 %v3790
        %3833 = vmatprep.subr.mxu0 0.0
        %3834 = vmatpush1.msra.mxu0 %v3789
        %3835 = vmatprep.subr.mxu0 0.0
        %3836 = vmatpush2.msra.mxu0 0.0
        %3837 = vmatprep.subr.mxu0 0.0
        %3838 = vmatpush2.msra.mxu0 0.0
        %3839 = vmatprep.subr.mxu0 0.0
        %3840 = vmatpush2.msra.mxu0 0.0
        %3841 = vmatprep.subr.mxu0 0.0
        %3842 = vmatpush2.msra.mxu0 0.0
        %3843 = vmatprep.subr.mxu0 0.0
        %3844 = vmatpush2.msra.mxu0 0.0
        %3845 = vmatprep.subr.mxu0 0.0
        %3846 = vmatpush2.msra.mxu0 0.0
        %3847 = vmatprep.subr.mxu0 0.0
        %3848 = vmatpush2.msra.mxu0 0.0
        %3849 = vmatprep.subr.mxu0 0.0
        %3850 = vmatpush2.msra.mxu0 0.0
        %3851 = vmatprep.subr.mxu0 0.0
        %3852 = vmatpush2.msra.mxu0 0.0
        %3853 = vmatprep.subr.mxu0 0.0
        %3854 = vmatpush2.msra.mxu0 0.0
        %3855 = vmatprep.subr.mxu0 0.0
        %3856 = vmatpush2.msra.mxu0 0.0
        %3857 = vmatprep.subr.mxu0 0.0
        %3858 = vmatpush2.msra.mxu0 0.0
        %3859 = vmatprep.subr.mxu0 0.0
        %3860 = vmatpush2.msra.mxu0 0.0
        %3861 = vmatprep.subr.mxu0 0.0
        %3862 = vmatpush2.msra.mxu0 0.0
        %3863 = vmatprep.subr.mxu0 0.0
        %3864 = vmatpush2.msra.mxu0 0.0
        %3865 = vmatprep.subr.mxu0 0.0
        %3866 = vmatpush2.msra.mxu0 0.0
        %3867 = vmatprep.mubr.f32.mxu0 0.0
        %3868 = vmatmul.mubr.f32.gmra.mxu0 %v3801
        %v3869 = vpop.f32.mrf.mxu0
        %v3870 = vadd.f32 %v3798, %v3869
        %v3871 = vpop.f32.mrf.mxu0
        %3872 = vdwg.mxu0
        %v3873 = vmax.f32 %v3870, 0.0
        %v3874 = vld [vmem:[%s61] sm:$0xff]
        %v3875 = vld [vmem:[%s61 + $0x8] sm:$0xff]
        %v3876 = vld [vmem:[%s61 + $0x10] sm:$0xff]
        %v3877 = vld [vmem:[%s61 + $0x18] sm:$0xff]
        %v3878 = vld [vmem:[%s61 + $0x20] sm:$0xff]
        %v3879 = vld [vmem:[%s61 + $0x28] sm:$0xff]
        %v3880 = vld [vmem:[#allocation10] sm:$0x1]
        %v3882 = vlaneseq
        %v3883 = vshrl.u32 %v3882, 7
        %v3884 = vsub.s32 0, %v3883
        %v3885 = vrot.slane %v3880, %v3884
        %vm3887 = vcmask 392192
        %v3889 = vsel %vm3887, %v3873, 0
        %3891 = vmatprep.subr.mxu0 0.0
        %3892 = vmatpush1.msra.mxu0 0.0
        %3893 = vmatprep.subr.mxu0 0.0
        %3894 = vmatpush1.msra.mxu0 0.0
        %3895 = vmatprep.subr.mxu0 0.0
        %3896 = vmatpush1.msra.mxu0 0.0
        %3897 = vmatprep.subr.mxu0 0.0
        %3898 = vmatpush1.msra.mxu0 0.0
        %3899 = vmatprep.subr.mxu0 0.0
        %3900 = vmatpush1.msra.mxu0 0.0
        %3901 = vmatprep.subr.mxu0 0.0
        %3902 = vmatpush1.msra.mxu0 0.0
        %3903 = vmatprep.subr.mxu0 0.0
        %3904 = vmatpush1.msra.mxu0 0.0
        %3905 = vmatprep.subr.mxu0 0.0
        %3906 = vmatpush1.msra.mxu0 0.0
        %3907 = vmatprep.subr.mxu0 0.0
        %3908 = vmatpush1.msra.mxu0 0.0
        %3909 = vmatprep.subr.mxu0 0.0
        %3910 = vmatpush1.msra.mxu0 0.0
        %3911 = vmatprep.subr.mxu0 0.0
        %3912 = vmatpush1.msra.mxu0 %v3879
        %3913 = vmatprep.subr.mxu0 0.0
        %3914 = vmatpush1.msra.mxu0 %v3878
        %3915 = vmatprep.subr.mxu0 0.0
        %3916 = vmatpush1.msra.mxu0 %v3877
        %3917 = vmatprep.subr.mxu0 0.0
        %3918 = vmatpush1.msra.mxu0 %v3876
        %3919 = vmatprep.subr.mxu0 0.0
        %3920 = vmatpush1.msra.mxu0 %v3875
        %3921 = vmatprep.subr.mxu0 0.0
        %3922 = vmatpush1.msra.mxu0 %v3874
        %3923 = vmatprep.subr.mxu0 0.0
        %3924 = vmatpush2.msra.mxu0 0.0
        %3925 = vmatprep.subr.mxu0 0.0
        %3926 = vmatpush2.msra.mxu0 0.0
        %3927 = vmatprep.subr.mxu0 0.0
        %3928 = vmatpush2.msra.mxu0 0.0
        %3929 = vmatprep.subr.mxu0 0.0
        %3930 = vmatpush2.msra.mxu0 0.0
        %3931 = vmatprep.subr.mxu0 0.0
        %3932 = vmatpush2.msra.mxu0 0.0
        %3933 = vmatprep.subr.mxu0 0.0
        %3934 = vmatpush2.msra.mxu0 0.0
        %3935 = vmatprep.subr.mxu0 0.0
        %3936 = vmatpush2.msra.mxu0 0.0
        %3937 = vmatprep.subr.mxu0 0.0
        %3938 = vmatpush2.msra.mxu0 0.0
        %3939 = vmatprep.subr.mxu0 0.0
        %3940 = vmatpush2.msra.mxu0 0.0
        %3941 = vmatprep.subr.mxu0 0.0
        %3942 = vmatpush2.msra.mxu0 0.0
        %3943 = vmatprep.subr.mxu0 0.0
        %3944 = vmatpush2.msra.mxu0 0.0
        %3945 = vmatprep.subr.mxu0 0.0
        %3946 = vmatpush2.msra.mxu0 0.0
        %3947 = vmatprep.subr.mxu0 0.0
        %3948 = vmatpush2.msra.mxu0 0.0
        %3949 = vmatprep.subr.mxu0 0.0
        %3950 = vmatpush2.msra.mxu0 0.0
        %3951 = vmatprep.subr.mxu0 0.0
        %3952 = vmatpush2.msra.mxu0 0.0
        %3953 = vmatprep.subr.mxu0 0.0
        %3954 = vmatpush2.msra.mxu0 0.0
        %3955 = vmatprep.mubr.f32.mxu0 0.0
        %3956 = vmatmul.mubr.f32.gmra.mxu0 %v3889
        %v3957 = vpop.f32.mrf.mxu0
        %v3958 = vadd.f32 %v3885, %v3957
        %v3959 = vpop.f32.mrf.mxu0
        %3960 = vdwg.mxu0
        %vm3961 = vcmp.gt.f32.partialorder %v1249, 0.0
        %v3962 = vsel %vm3961, 1, 0
        %3963 = vset.pattern.permute.xlu0 0
        %3964 = vperm.xlu0 %3963, %v3962
        %v3965 = vpop.permute.xlu0 %3964
        %vm3966 = vcmp.eq.s32.totalorder %v3965, 1
        %v3967 = vsel %vm3966, %v3958, -11.512925
        %3968 = vst.msk [vmem:[%s1234] sm:$0x1f] %vm2173, %v3967
        %p3969 = scmp.lt.s32.totalorder %s91, 1
        %s3970 = scalar_select %p3969, %s91, 1
        %s3971 = smul.addr %s3970, 8
        %s3972 = scalar_lea.vmem %s65, %s3971
        %p3973 = scmp.lt.s32.totalorder %s91, 1
        %s3974 = scalar_select %p3973, %s91, 1
        %s3975 = smul.addr %s3974, 8
        %s3976 = scalar_lea.vmem %s67, %s3975
        %p3977 = scmp.lt.s32.totalorder %s91, 1
        %s3978 = scalar_select %p3977, %s91, 1
        %s3979 = smul.addr %s3978, 8
        %s3980 = scalar_lea.vmem %s69, %s3979
        %s3981 = sand.u32 %s869, 1
        %s3982 = scalar_lea.sflag [#allocation4], %s3981
        %s3983 = sand.u32 %s869, 1
        %s3984 = smul.addr %s3983, 4
        %s3985 = scalar_lea.vmem [#allocation11], %s3984
        %p3986 = scmp.lt.s32.totalorder %s91, 1
        %s3987 = scalar_select %p3986, %s91, 1
        %s3988 = smul.addr %s3987, 4
        %s3989 = smul.addr %s3988, 8
        %s3990 = scalar_lea.vmem %s73, %s3989
        // Predicated region
        $region169: #{_lambda_.1} parent=147 // pred_check
          %p3991 = pneg %p801
        $region170: #{_lambda_.1} parent=147 // pred_check_branch
          %3993 = sbr.rel (%p3991) target = $region172
        $region171: #{_lambda_.1} parent=147 // pred_region
          _
        $region172: #{_lambda_.1} parent=147 // pred_fallthru
          _
        // Predicated region
        $region173: #{_lambda_.1} parent=147 // pred_check
          %p3994 = pneg %p827
        $region174: #{_lambda_.1} parent=147 // pred_check_branch
          %3996 = sbr.rel (%p3994) target = $region176
        $region175: #{_lambda_.1} parent=147 // pred_region
          _
        $region176: #{_lambda_.1} parent=147 // pred_fallthru
          _
        // Predicated region
        $region177: #{_lambda_.1} parent=147 // pred_check
          %p3997 = pneg %p853
        $region178: #{_lambda_.1} parent=147 // pred_check_branch
          %3999 = sbr.rel (%p3997) target = $region180
        $region179: #{_lambda_.1} parent=147 // pred_region
          _
        $region180: #{_lambda_.1} parent=147 // pred_fallthru
          _
        // Predicated region
        $region181: #{_lambda_.1} parent=147 // pred_check
          %p4000 = pneg %p879
        $region182: #{_lambda_.1} parent=147 // pred_check_branch
          %4002 = sbr.rel (%p4000) target = $region184
        $region183: #{_lambda_.1} parent=147 // pred_region
          %s4004 = ssub.s32 64, 64
          %4005 = vsyncadd %s3982, %s4004
          %s4006 = smul.addr %s91, 64
          %s4007 = scalar_lea.hbm %s71, %s4006
          %s4009 = sshll.u32 %s3985, 4
          %s4010 = int_to_ptr.vmem [resolvable:$true] %s4009
          %4012 = dma.vmem_to_hbm [thread:$0]  %s4010, 64, %s4007, %s3982
        $region184: #{_lambda_.1} parent=147 // pred_fallthru
          _
        // Predicated region
        $region185: #{_lambda_.1} parent=147 // pred_check
          %p4013 = pneg %p905
        $region186: #{_lambda_.1} parent=147 // pred_check_branch
          %4015 = sbr.rel (%p4013) target = $region188
        $region187: #{_lambda_.1} parent=147 // pred_region
          _
        $region188: #{_lambda_.1} parent=147 // pred_fallthru
          _
      $region148: #{_lambda_.1} parent=5 // pred_fallthru
        _
      %p4016 = scmp.le.s32.totalorder 2, %s86
      // Predicated region
      $region189: #{_lambda_.1} parent=5 // pred_check
        %p4017 = pneg %p4016
      $region190: #{_lambda_.1} parent=5 // pred_check_branch
        %4019 = sbr.rel (%p4017) target = $region192
      $region191: #{_lambda_.1} parent=5 // pred_region
        %s4020 = ssub.s32 %s86, 2
        // Predicated region
        $region193: #{_lambda_.1} parent=191 // pred_check
          %p4021 = pneg %p807
        $region194: #{_lambda_.1} parent=191 // pred_check_branch
          %4023 = sbr.rel (%p4021) target = $region196
        $region195: #{_lambda_.1} parent=191 // pred_region
          %p4024 = scmp.lt.s32.totalorder %s92, 1
          %s4025 = scalar_select %p4024, %s92, 1
          %s4026 = smul.addr %s4025, 8
          %s4027 = scalar_lea.vmem %s65, %s4026
        $region196: #{_lambda_.1} parent=191 // pred_fallthru
          _
        // Predicated region
        $region197: #{_lambda_.1} parent=191 // pred_check
          %p4028 = pneg %p833
        $region198: #{_lambda_.1} parent=191 // pred_check_branch
          %4030 = sbr.rel (%p4028) target = $region200
        $region199: #{_lambda_.1} parent=191 // pred_region
          %p4031 = scmp.lt.s32.totalorder %s92, 1
          %s4032 = scalar_select %p4031, %s92, 1
          %s4033 = smul.addr %s4032, 8
          %s4034 = scalar_lea.vmem %s67, %s4033
        $region200: #{_lambda_.1} parent=191 // pred_fallthru
          _
        // Predicated region
        $region201: #{_lambda_.1} parent=191 // pred_check
          %p4035 = pneg %p859
        $region202: #{_lambda_.1} parent=191 // pred_check_branch
          %4037 = sbr.rel (%p4035) target = $region204
        $region203: #{_lambda_.1} parent=191 // pred_region
          %p4038 = scmp.lt.s32.totalorder %s92, 1
          %s4039 = scalar_select %p4038, %s92, 1
          %s4040 = smul.addr %s4039, 8
          %s4041 = scalar_lea.vmem %s69, %s4040
        $region204: #{_lambda_.1} parent=191 // pred_fallthru
          _
        // Predicated region
        $region205: #{_lambda_.1} parent=191 // pred_check
          %p4042 = pneg %p885
        $region206: #{_lambda_.1} parent=191 // pred_check_branch
          %4044 = sbr.rel (%p4042) target = $region208
        $region207: #{_lambda_.1} parent=191 // pred_region
          %s4045 = sand.u32 %s870, 1
          %s4046 = scalar_lea.sflag [#allocation4], %s4045
          %s4047 = sand.u32 %s870, 1
          %s4048 = smul.addr %s4047, 4
          %s4049 = scalar_lea.vmem [#allocation11], %s4048
          %4050 = dma.done %s4046, 64
        $region208: #{_lambda_.1} parent=191 // pred_fallthru
          _
        // Predicated region
        $region209: #{_lambda_.1} parent=191 // pred_check
          %p4051 = pneg %p911
        $region210: #{_lambda_.1} parent=191 // pred_check_branch
          %4053 = sbr.rel (%p4051) target = $region212
        $region211: #{_lambda_.1} parent=191 // pred_region
          %p4054 = scmp.lt.s32.totalorder %s92, 1
          %s4055 = scalar_select %p4054, %s92, 1
          %s4056 = smul.addr %s4055, 4
          %s4057 = smul.addr %s4056, 8
          %s4058 = scalar_lea.vmem %s73, %s4057
        $region212: #{_lambda_.1} parent=191 // pred_fallthru
          _
      $region192: #{_lambda_.1} parent=5 // pred_fallthru
        _
    $region6: #{_lambda_.1} parent=1 // loop_footer
      %s90 = sadd.s32 1, %s86
    $region7: #{_lambda_.1} parent=1 // loop_footer_branch
      %85 = sbr.rel target = $region3
    $region8: #{_lambda_.1} parent=1 // loop_exit
      _
    %4059 = vsyncpa [#allocation3], 1
    %s4060 = scalar_lea.sflag [#allocation3], 1
    %4061 = vsyncpa %s4060, 1
    %4062 = vsyncpa [#allocation6], 1
    %4063 = vsyncpa [#allocation9], 1
    %4064 = vsyncpa [#allocation4], 1
    %s4065 = scalar_lea.sflag [#allocation4], 1
    %4066 = vsyncpa %s4065, 1

</llo_original>
